<compile_context>
chip_gen: v5e
topology: v5e:2x2
jax: 0.10.0
libtpu: 0.0.40
codegen_flags: <defaults>
</compile_context>

<pallas_src>
import math
import functools

import jax
import jax.numpy as jnp
from jax import lax
from jax.experimental import pallas as pl
from jax.experimental.pallas import tpu as pltpu

NUM_GROUPS = 32   # nn.GroupNorm(32, channels) -> channels must be a multiple of 32
EPS = 1e-5


# ---------------------------------------------------------------------------
# Kernel 1: GroupNorm(32, C) + fused qkv 1x1 conv (single (N,C)@(C,3C) bf16 matmul)
# grid = (B,)  -- GroupNorm needs full-spatial statistics per sample.
# ---------------------------------------------------------------------------
def _gn_qkv_kernel(x_ref, gamma_ref, beta_ref, w_ref, b_ref,
                   q_ref, k_ref, v_ref, *, groups):
    x = x_ref[0]                                      # (N, C) f32
    n, c = x.shape
    cg = c // groups
    inv_cnt = 1.0 / float(n * cg)

    # ---- GroupNorm stats: VPU reductions only (no gmap matmuls) ----
    s1 = jnp.sum(x, axis=0, keepdims=True)            # (1, C)
    s2 = jnp.sum(x * x, axis=0, keepdims=True)        # (1, C)
    ch_idx = lax.broadcasted_iota(jnp.int32, (1, c), 1)

    mean_c = jnp.zeros((1, c), jnp.float32)
    rstd_c = jnp.zeros((1, c), jnp.float32)
    for g in range(groups):                           # static unroll over 32 groups
        sl = slice(g * cg, (g + 1) * cg)
        m_g = jnp.sum(s1[:, sl], axis=1, keepdims=True) * inv_cnt    # (1, 1)
        e2_g = jnp.sum(s2[:, sl], axis=1, keepdims=True) * inv_cnt   # (1, 1)
        r_g = lax.rsqrt(e2_g - m_g * m_g + EPS)
        sel = (ch_idx >= g * cg) & (ch_idx < (g + 1) * cg)
        mean_c = jnp.where(sel, m_g, mean_c)
        rstd_c = jnp.where(sel, r_g, rstd_c)

    xn = (x - mean_c) * (rstd_c * gamma_ref[...]) + beta_ref[...]

    # ---- fused qkv projection: bf16 operands, f32 accumulation ----
    qkv = jnp.dot(xn.astype(jnp.bfloat16), w_ref[...],
                  preferred_element_type=jnp.float32) + b_ref[...]   # (N, 3C)
    q_ref[0] = qkv[:, 0:c].astype(jnp.bfloat16)       # scale already folded into w/b
    k_ref[0] = qkv[:, c:2 * c].astype(jnp.bfloat16)
    v_ref[0] = qkv[:, 2 * c:3 * c].astype(jnp.bfloat16)


# ---------------------------------------------------------------------------
# Kernel 2: spatial attention (softmax over the key-W axis only, like torch
# softmax(dim=-1)) + 1x1 proj + residual.
# grid = (B, query tiles, key tiles); key axis is the sequential reduction.
# ---------------------------------------------------------------------------
def _attn_kernel(q_ref, k_ref, v_ref, x_ref, wp_ref, bp_ref, o_ref,
                 acc_ref, p_ref, *, w, rk):
    j = pl.program_id(2)

    @pl.when(j == 0)
    def _():
        acc_ref[...] = jnp.zeros_like(acc_ref)

    q = q_ref[0]                                      # (tq, C) bf16
    k = k_ref[0]                                      # (tk, C) bf16
    v = v_ref[0]                                      # (tk, C) bf16

    # one wide MXU matmul for the whole key tile: (tq, C) . (tk, C)^T -> (tq, tk)
    s = lax.dot_general(q, k, (((1,), (1,)), ((), ())),
                        preferred_element_type=jnp.float32)

    # independent softmax per key row (segment of width W), per-segment max
    # for stability; normalize with the approximate EUP reciprocal.
    for seg in range(rk):                             # static unroll, rk = tk // W
        ss = s[:, seg * w:(seg + 1) * w]              # (tq, W)
        m = jnp.max(ss, axis=-1, keepdims=True)
        e = jnp.exp(ss - m)
        d = jnp.sum(e, axis=-1, keepdims=True)
        p_ref[:, seg * w:(seg + 1) * w] = e * pl.reciprocal(d, approx=True)

    # single wide AV matmul over the full key tile (contraction = tk)
    acc_ref[...] += jnp.dot(p_ref[...].astype(jnp.bfloat16), v,
                            preferred_element_type=jnp.float32)

    @pl.when(j == pl.num_programs(2) - 1)
    def _():
        y = jnp.dot(acc_ref[...].astype(jnp.bfloat16), wp_ref[...],
                    preferred_element_type=jnp.float32) + bp_ref[...]
        o_ref[0] = x_ref[0] + y


def _pick_tile(h, w, n, target_elems, max_rows):
    """Pick r | h (r*w <= target, TPU sublane-aligned); return (r, r*w)."""
    bound = max(1, min(h, max_rows, max(1, target_elems // w)))
    for r in range(bound, 0, -1):
        if h % r == 0 and ((r * w) % 8 == 0 or r * w == n):
            return r, r * w
    return h, n   # full extent is always a legal block shape


def attention_block(x_nchw, params):
    """Pallas TPU implementation of AttentionBlock.forward. x_nchw: (B, C, H, W) f32."""
    B, C, H, W = x_nchw.shape
    N = H * W
    G = NUM_GROUPS
    assert C % G == 0

    # NCHW -> (B, N=H*W, C)  (HW flattened row-major, matching torch)
    x = jnp.transpose(x_nchw, (0, 2, 3, 1)).reshape(B, N, C).astype(jnp.float32)

    gamma = params['gamma'].reshape(1, C).astype(jnp.float32)
    beta = params['beta'].reshape(1, C).astype(jnp.float32)

    # fused qkv weight (C_in, 3C_out); fold the attention scale into the q slice
    scale = (C // 8) ** (-0.5)
    w_qkv = params['w_qkv'][:, :, 0, 0].T                        # (C, 3C)
    b_qkv = params['b_qkv'].reshape(1, 3 * C)
    col_scale = jnp.concatenate(
        [jnp.full((C,), scale, jnp.float32), jnp.ones((2 * C,), jnp.float32)]
    ).reshape(1, 3 * C)
    w_qkv = (w_qkv * col_scale).astype(jnp.bfloat16)
    b_qkv = (b_qkv * col_scale).astype(jnp.float32)

    wp = params['w_proj'][:, :, 0, 0].T.astype(jnp.bfloat16)     # (C, C)
    bp = params['b_proj'].reshape(1, C).astype(jnp.float32)

    # ---------------- pass 1: GroupNorm + fused qkv ----------------
    q, k, v = pl.pallas_call(
        functools.partial(_gn_qkv_kernel, groups=G),
        out_shape=tuple(jax.ShapeDtypeStruct((B, N, C), jnp.bfloat16) for _ in range(3)),
        grid=(B,),
        in_specs=[
            pl.BlockSpec((1, N, C), lambda b: (b, 0, 0)),        # x
            pl.BlockSpec((1, C), lambda b: (0, 0)),              # gamma
            pl.BlockSpec((1, C), lambda b: (0, 0)),              # beta
            pl.BlockSpec((C, 3 * C), lambda b: (0, 0)),          # fused qkv weight (bf16)
            pl.BlockSpec((1, 3 * C), lambda b: (0, 0)),          # fused qkv bias (f32)
        ],
        out_specs=tuple(pl.BlockSpec((1, N, C), lambda b: (b, 0, 0)) for _ in range(3)),
        compiler_params=pltpu.CompilerParams(
            dimension_semantics=("parallel",),
            vmem_limit_bytes=48 * 1024 * 1024),
    )(x, gamma, beta, w_qkv, b_qkv)

    # ---------------- pass 2: key-tiled attention + proj + residual ----------------
    _, tq = _pick_tile(H, W, N, 256, H)     # query tile (rows independent)
    rk, tk = _pick_tile(H, W, N, 512, 16)   # key tile = rk full key rows of width W
    nq, nk = N // tq, N // tk

    out = pl.pallas_call(
        functools.partial(_attn_kernel, w=W, rk=rk),
        out_shape=jax.ShapeDtypeStruct((B, N, C), jnp.float32),
        grid=(B, nq, nk),
        in_specs=[
            pl.BlockSpec((1, tq, C), lambda b, i, j: (b, i, 0)),   # q (bf16, scaled)
            pl.BlockSpec((1, tk, C), lambda b, i, j: (b, j, 0)),   # k (bf16)
            pl.BlockSpec((1, tk, C), lambda b, i, j: (b, j, 0)),   # v (bf16)
            pl.BlockSpec((1, tq, C), lambda b, i, j: (b, i, 0)),   # x (residual, f32)
            pl.BlockSpec((C, C), lambda b, i, j: (0, 0)),          # proj weight (bf16)
            pl.BlockSpec((1, C), lambda b, i, j: (0, 0)),          # proj bias (f32)
        ],
        out_specs=pl.BlockSpec((1, tq, C), lambda b, i, j: (b, i, 0)),
        scratch_shapes=[pltpu.VMEM((tq, C), jnp.float32),          # output accumulator
                        pltpu.VMEM((tq, tk), jnp.float32)],        # normalized probs
        compiler_params=pltpu.CompilerParams(
            dimension_semantics=("parallel", "parallel", "arbitrary"),
            vmem_limit_bytes=48 * 1024 * 1024),
    )(q, k, v, x, wp, bp)

    # (B, N, C) -> NCHW
    return jnp.transpose(out.reshape(B, H, W, C), (0, 3, 1, 2))


def reference(x, params):
    """Pure-JAX f32 replica of the PyTorch forward for verification."""
    B, C, H, W = x.shape
    G = NUM_GROUPS
    xr = x.reshape(B, G, C // G, H, W)
    mean = xr.mean(axis=(2, 3, 4), keepdims=True)
    var = xr.var(axis=(2, 3, 4), keepdims=True)
    xn = ((xr - mean) / jnp.sqrt(var + EPS)).reshape(B, C, H, W)
    xn = xn * params['gamma'][None, :, None, None] + params['beta'][None, :, None, None]
    w_qkv = params['w_qkv'][:, :, 0, 0]
    qkv = jnp.einsum('oc,bchw->bohw', w_qkv, xn) + params['b_qkv'][None, :, None, None]
    q, k, v = qkv[:, :C], qkv[:, C:2 * C], qkv[:, 2 * C:]
    scale = (C // 8) ** (-0.5)
    attn = jnp.einsum('bchw,bcHW->bhwHW', q * scale, k)
    attn = jax.nn.softmax(attn, axis=-1)
    out = jnp.einsum('bhwHW,bcHW->bchw', attn, v)
    y = (jnp.einsum('oc,bchw->bohw', params['w_proj'][:, :, 0, 0], out)
         + params['b_proj'][None, :, None, None])
    return x + y


if __name__ == "__main__":
    key = jax.random.PRNGKey(0)
    # GroupNorm(32, channels) requires channels % 32 == 0 -> use C=64 (small but valid)
    B, C, H, W = 2, 64, 8, 8
    ks = jax.random.split(key, 7)
    x = jax.random.normal(ks[0], (B, C, H, W), jnp.float32)
    params = {
        'gamma': 1.0 + 0.1 * jax.random.normal(ks[1], (C,), jnp.float32),
        'beta': 0.1 * jax.random.normal(ks[2], (C,), jnp.float32),
        'w_qkv': jax.random.normal(ks[3], (3 * C, C, 1, 1), jnp.float32) / math.sqrt(C),
        'b_qkv': 0.02 * jax.random.normal(ks[4], (3 * C,), jnp.float32),
        'w_proj': jax.random.normal(ks[5], (C, C, 1, 1), jnp.float32) / math.sqrt(C),
        'b_proj': 0.02 * jax.random.normal(ks[6], (C,), jnp.float32),
    }

    y = attention_block(x, params)
    jax.block_until_ready(y)

    y_ref = reference(x, params)
    diff = y - y_ref
    rel = float(jnp.sqrt(jnp.sum(diff * diff)) / jnp.sqrt(jnp.sum(y_ref * y_ref)))
    max_abs = float(jnp.max(jnp.abs(diff)))
    # bf16 matmul operands (f32 accumulation) + approx reciprocal -> expect
    # ~1e-3..1e-2 relative agreement with the pure-f32 reference.
    assert rel < 3e-2 and max_abs < 0.35, f"rel={rel:.3e} max_abs={max_abs:.3e}"
    print("KERNEL_OK")
</pallas_src>

<mosaic_0001>
module attributes {stable_mosaic.version = 11 : i64} {
  func.func @_gn_qkv_kernel(%arg0: i32, %arg1: memref<1x64x64xf32, #tpu.memory_space<vmem>>, %arg2: memref<1x64xf32, #tpu.memory_space<vmem>>, %arg3: memref<1x64xf32, #tpu.memory_space<vmem>>, %arg4: memref<64x192xbf16, #tpu.memory_space<vmem>>, %arg5: memref<1x192xf32, #tpu.memory_space<vmem>>, %arg6: memref<1x64x64xbf16, #tpu.memory_space<vmem>>, %arg7: memref<1x64x64xbf16, #tpu.memory_space<vmem>>, %arg8: memref<1x64x64xbf16, #tpu.memory_space<vmem>>) attributes {dimension_semantics = [#tpu.dimension_semantics<parallel>], iteration_bounds = array<i64: 2>, scalar_prefetch = 0 : i64, scratch_operands = 0 : i64, tpu.core_type = #tpu.core_type<tc>, window_params = [{transform_indices = @transform_0, window_bounds = array<i64: 1, 64, 64>}, {pipeline_mode = #tpu.pipeline_mode<synchronous>, transform_indices = @transform_1, window_bounds = array<i64: 1, 64>}, {pipeline_mode = #tpu.pipeline_mode<synchronous>, transform_indices = @transform_2, window_bounds = array<i64: 1, 64>}, {pipeline_mode = #tpu.pipeline_mode<synchronous>, transform_indices = @transform_3, window_bounds = array<i64: 64, 192>}, {pipeline_mode = #tpu.pipeline_mode<synchronous>, transform_indices = @transform_4, window_bounds = array<i64: 1, 192>}, {transform_indices = @transform_5, window_bounds = array<i64: 1, 64, 64>}, {transform_indices = @transform_6, window_bounds = array<i64: 1, 64, 64>}, {transform_indices = @transform_7, window_bounds = array<i64: 1, 64, 64>}]} {
    %c0 = arith.constant 0 : index
    %c0_0 = arith.constant 0 : index
    %c0_1 = arith.constant 0 : index
    %0 = vector.load %arg1[%c0, %c0_0, %c0_1] : memref<1x64x64xf32, #tpu.memory_space<vmem>>, vector<1x64x64xf32>
    %1 = vector.shape_cast %0 : vector<1x64x64xf32> to vector<64x64xf32>
    %cst = arith.constant dense<0.000000e+00> : vector<64xf32>
    %2 = vector.multi_reduction <add>, %1, %cst [0] : vector<64x64xf32> to vector<64xf32>
    %3 = vector.shape_cast %2 : vector<64xf32> to vector<1x64xf32>
    %4 = arith.mulf %1, %1 : vector<64x64xf32>
    %cst_2 = arith.constant dense<0.000000e+00> : vector<64xf32>
    %5 = vector.multi_reduction <add>, %4, %cst_2 [0] : vector<64x64xf32> to vector<64xf32>
    %6 = vector.shape_cast %5 : vector<64xf32> to vector<1x64xf32>
    %7 = tpu.iota {dimensions = array<i32: 1>} : vector<1x64xi32>
    %cst_3 = arith.constant 0.000000e+00 : f32
    %8 = vector.broadcast %cst_3 : f32 to vector<1x64xf32>
    %cst_4 = arith.constant 0.000000e+00 : f32
    %9 = vector.broadcast %cst_4 : f32 to vector<1x64xf32>
    %10 = vector.extract_strided_slice %3 {offsets = [0, 0], sizes = [1, 2], strides = [1, 1]} : vector<1x64xf32> to vector<1x2xf32>
    %cst_5 = arith.constant dense<0.000000e+00> : vector<1xf32>
    %11 = vector.multi_reduction <add>, %10, %cst_5 [1] : vector<1x2xf32> to vector<1xf32>
    %12 = vector.shape_cast %11 : vector<1xf32> to vector<1x1xf32>
    %cst_6 = arith.constant 7.812500e-03 : f32
    %13 = vector.broadcast %cst_6 : f32 to vector<1x1xf32>
    %14 = arith.mulf %12, %13 : vector<1x1xf32>
    %15 = vector.extract_strided_slice %6 {offsets = [0, 0], sizes = [1, 2], strides = [1, 1]} : vector<1x64xf32> to vector<1x2xf32>
    %cst_7 = arith.constant dense<0.000000e+00> : vector<1xf32>
    %16 = vector.multi_reduction <add>, %15, %cst_7 [1] : vector<1x2xf32> to vector<1xf32>
    %17 = vector.shape_cast %16 : vector<1xf32> to vector<1x1xf32>
    %cst_8 = arith.constant 7.812500e-03 : f32
    %18 = vector.broadcast %cst_8 : f32 to vector<1x1xf32>
    %19 = arith.mulf %17, %18 : vector<1x1xf32>
    %20 = arith.mulf %14, %14 : vector<1x1xf32>
    %21 = arith.subf %19, %20 : vector<1x1xf32>
    %cst_9 = arith.constant 9.99999974E-6 : f32
    %22 = vector.broadcast %cst_9 : f32 to vector<1x1xf32>
    %23 = arith.addf %21, %22 : vector<1x1xf32>
    %24 = math.rsqrt %23 : vector<1x1xf32>
    %c0_i32 = arith.constant 0 : i32
    %25 = vector.broadcast %c0_i32 : i32 to vector<1x64xi32>
    %26 = arith.cmpi sge, %7, %25 : vector<1x64xi32>
    %c2_i32 = arith.constant 2 : i32
    %27 = vector.broadcast %c2_i32 : i32 to vector<1x64xi32>
    %28 = arith.cmpi slt, %7, %27 : vector<1x64xi32>
    %29 = arith.andi %26, %28 : vector<1x64xi1>
    %30 = vector.shape_cast %14 : vector<1x1xf32> to vector<1x1xf32>
    %31 = vector.broadcast %30 : vector<1x1xf32> to vector<1x64xf32>
    %32 = arith.select %29, %31, %8 : vector<1x64xi1>, vector<1x64xf32>
    %33 = vector.shape_cast %24 : vector<1x1xf32> to vector<1x1xf32>
    %34 = vector.broadcast %33 : vector<1x1xf32> to vector<1x64xf32>
    %35 = arith.select %29, %34, %9 : vector<1x64xi1>, vector<1x64xf32>
    %36 = vector.extract_strided_slice %3 {offsets = [0, 2], sizes = [1, 2], strides = [1, 1]} : vector<1x64xf32> to vector<1x2xf32>
    %cst_10 = arith.constant dense<0.000000e+00> : vector<1xf32>
    %37 = vector.multi_reduction <add>, %36, %cst_10 [1] : vector<1x2xf32> to vector<1xf32>
    %38 = vector.shape_cast %37 : vector<1xf32> to vector<1x1xf32>
    %cst_11 = arith.constant 7.812500e-03 : f32
    %39 = vector.broadcast %cst_11 : f32 to vector<1x1xf32>
    %40 = arith.mulf %38, %39 : vector<1x1xf32>
    %41 = vector.extract_strided_slice %6 {offsets = [0, 2], sizes = [1, 2], strides = [1, 1]} : vector<1x64xf32> to vector<1x2xf32>
    %cst_12 = arith.constant dense<0.000000e+00> : vector<1xf32>
    %42 = vector.multi_reduction <add>, %41, %cst_12 [1] : vector<1x2xf32> to vector<1xf32>
    %43 = vector.shape_cast %42 : vector<1xf32> to vector<1x1xf32>
    %cst_13 = arith.constant 7.812500e-03 : f32
    %44 = vector.broadcast %cst_13 : f32 to vector<1x1xf32>
    %45 = arith.mulf %43, %44 : vector<1x1xf32>
    %46 = arith.mulf %40, %40 : vector<1x1xf32>
    %47 = arith.subf %45, %46 : vector<1x1xf32>
    %cst_14 = arith.constant 9.99999974E-6 : f32
    %48 = vector.broadcast %cst_14 : f32 to vector<1x1xf32>
    %49 = arith.addf %47, %48 : vector<1x1xf32>
    %50 = math.rsqrt %49 : vector<1x1xf32>
    %c2_i32_15 = arith.constant 2 : i32
    %51 = vector.broadcast %c2_i32_15 : i32 to vector<1x64xi32>
    %52 = arith.cmpi sge, %7, %51 : vector<1x64xi32>
    %c4_i32 = arith.constant 4 : i32
    %53 = vector.broadcast %c4_i32 : i32 to vector<1x64xi32>
    %54 = arith.cmpi slt, %7, %53 : vector<1x64xi32>
    %55 = arith.andi %52, %54 : vector<1x64xi1>
    %56 = vector.shape_cast %40 : vector<1x1xf32> to vector<1x1xf32>
    %57 = vector.broadcast %56 : vector<1x1xf32> to vector<1x64xf32>
    %58 = arith.select %55, %57, %32 : vector<1x64xi1>, vector<1x64xf32>
    %59 = vector.shape_cast %50 : vector<1x1xf32> to vector<1x1xf32>
    %60 = vector.broadcast %59 : vector<1x1xf32> to vector<1x64xf32>
    %61 = arith.select %55, %60, %35 : vector<1x64xi1>, vector<1x64xf32>
    %62 = vector.extract_strided_slice %3 {offsets = [0, 4], sizes = [1, 2], strides = [1, 1]} : vector<1x64xf32> to vector<1x2xf32>
    %cst_16 = arith.constant dense<0.000000e+00> : vector<1xf32>
    %63 = vector.multi_reduction <add>, %62, %cst_16 [1] : vector<1x2xf32> to vector<1xf32>
    %64 = vector.shape_cast %63 : vector<1xf32> to vector<1x1xf32>
    %cst_17 = arith.constant 7.812500e-03 : f32
    %65 = vector.broadcast %cst_17 : f32 to vector<1x1xf32>
    %66 = arith.mulf %64, %65 : vector<1x1xf32>
    %67 = vector.extract_strided_slice %6 {offsets = [0, 4], sizes = [1, 2], strides = [1, 1]} : vector<1x64xf32> to vector<1x2xf32>
    %cst_18 = arith.constant dense<0.000000e+00> : vector<1xf32>
    %68 = vector.multi_reduction <add>, %67, %cst_18 [1] : vector<1x2xf32> to vector<1xf32>
    %69 = vector.shape_cast %68 : vector<1xf32> to vector<1x1xf32>
    %cst_19 = arith.constant 7.812500e-03 : f32
    %70 = vector.broadcast %cst_19 : f32 to vector<1x1xf32>
    %71 = arith.mulf %69, %70 : vector<1x1xf32>
    %72 = arith.mulf %66, %66 : vector<1x1xf32>
    %73 = arith.subf %71, %72 : vector<1x1xf32>
    %cst_20 = arith.constant 9.99999974E-6 : f32
    %74 = vector.broadcast %cst_20 : f32 to vector<1x1xf32>
    %75 = arith.addf %73, %74 : vector<1x1xf32>
    %76 = math.rsqrt %75 : vector<1x1xf32>
    %c4_i32_21 = arith.constant 4 : i32
    %77 = vector.broadcast %c4_i32_21 : i32 to vector<1x64xi32>
    %78 = arith.cmpi sge, %7, %77 : vector<1x64xi32>
    %c6_i32 = arith.constant 6 : i32
    %79 = vector.broadcast %c6_i32 : i32 to vector<1x64xi32>
    %80 = arith.cmpi slt, %7, %79 : vector<1x64xi32>
    %81 = arith.andi %78, %80 : vector<1x64xi1>
    %82 = vector.shape_cast %66 : vector<1x1xf32> to vector<1x1xf32>
    %83 = vector.broadcast %82 : vector<1x1xf32> to vector<1x64xf32>
    %84 = arith.select %81, %83, %58 : vector<1x64xi1>, vector<1x64xf32>
    %85 = vector.shape_cast %76 : vector<1x1xf32> to vector<1x1xf32>
    %86 = vector.broadcast %85 : vector<1x1xf32> to vector<1x64xf32>
    %87 = arith.select %81, %86, %61 : vector<1x64xi1>, vector<1x64xf32>
    %88 = vector.extract_strided_slice %3 {offsets = [0, 6], sizes = [1, 2], strides = [1, 1]} : vector<1x64xf32> to vector<1x2xf32>
    %cst_22 = arith.constant dense<0.000000e+00> : vector<1xf32>
    %89 = vector.multi_reduction <add>, %88, %cst_22 [1] : vector<1x2xf32> to vector<1xf32>
    %90 = vector.shape_cast %89 : vector<1xf32> to vector<1x1xf32>
    %cst_23 = arith.constant 7.812500e-03 : f32
    %91 = vector.broadcast %cst_23 : f32 to vector<1x1xf32>
    %92 = arith.mulf %90, %91 : vector<1x1xf32>
    %93 = vector.extract_strided_slice %6 {offsets = [0, 6], sizes = [1, 2], strides = [1, 1]} : vector<1x64xf32> to vector<1x2xf32>
    %cst_24 = arith.constant dense<0.000000e+00> : vector<1xf32>
    %94 = vector.multi_reduction <add>, %93, %cst_24 [1] : vector<1x2xf32> to vector<1xf32>
    %95 = vector.shape_cast %94 : vector<1xf32> to vector<1x1xf32>
    %cst_25 = arith.constant 7.812500e-03 : f32
    %96 = vector.broadcast %cst_25 : f32 to vector<1x1xf32>
    %97 = arith.mulf %95, %96 : vector<1x1xf32>
    %98 = arith.mulf %92, %92 : vector<1x1xf32>
    %99 = arith.subf %97, %98 : vector<1x1xf32>
    %cst_26 = arith.constant 9.99999974E-6 : f32
    %100 = vector.broadcast %cst_26 : f32 to vector<1x1xf32>
    %101 = arith.addf %99, %100 : vector<1x1xf32>
    %102 = math.rsqrt %101 : vector<1x1xf32>
    %c6_i32_27 = arith.constant 6 : i32
    %103 = vector.broadcast %c6_i32_27 : i32 to vector<1x64xi32>
    %104 = arith.cmpi sge, %7, %103 : vector<1x64xi32>
    %c8_i32 = arith.constant 8 : i32
    %105 = vector.broadcast %c8_i32 : i32 to vector<1x64xi32>
    %106 = arith.cmpi slt, %7, %105 : vector<1x64xi32>
    %107 = arith.andi %104, %106 : vector<1x64xi1>
    %108 = vector.shape_cast %92 : vector<1x1xf32> to vector<1x1xf32>
    %109 = vector.broadcast %108 : vector<1x1xf32> to vector<1x64xf32>
    %110 = arith.select %107, %109, %84 : vector<1x64xi1>, vector<1x64xf32>
    %111 = vector.shape_cast %102 : vector<1x1xf32> to vector<1x1xf32>
    %112 = vector.broadcast %111 : vector<1x1xf32> to vector<1x64xf32>
    %113 = arith.select %107, %112, %87 : vector<1x64xi1>, vector<1x64xf32>
    %114 = vector.extract_strided_slice %3 {offsets = [0, 8], sizes = [1, 2], strides = [1, 1]} : vector<1x64xf32> to vector<1x2xf32>
    %cst_28 = arith.constant dense<0.000000e+00> : vector<1xf32>
    %115 = vector.multi_reduction <add>, %114, %cst_28 [1] : vector<1x2xf32> to vector<1xf32>
    %116 = vector.shape_cast %115 : vector<1xf32> to vector<1x1xf32>
    %cst_29 = arith.constant 7.812500e-03 : f32
    %117 = vector.broadcast %cst_29 : f32 to vector<1x1xf32>
    %118 = arith.mulf %116, %117 : vector<1x1xf32>
    %119 = vector.extract_strided_slice %6 {offsets = [0, 8], sizes = [1, 2], strides = [1, 1]} : vector<1x64xf32> to vector<1x2xf32>
    %cst_30 = arith.constant dense<0.000000e+00> : vector<1xf32>
    %120 = vector.multi_reduction <add>, %119, %cst_30 [1] : vector<1x2xf32> to vector<1xf32>
    %121 = vector.shape_cast %120 : vector<1xf32> to vector<1x1xf32>
    %cst_31 = arith.constant 7.812500e-03 : f32
    %122 = vector.broadcast %cst_31 : f32 to vector<1x1xf32>
    %123 = arith.mulf %121, %122 : vector<1x1xf32>
    %124 = arith.mulf %118, %118 : vector<1x1xf32>
    %125 = arith.subf %123, %124 : vector<1x1xf32>
    %cst_32 = arith.constant 9.99999974E-6 : f32
    %126 = vector.broadcast %cst_32 : f32 to vector<1x1xf32>
    %127 = arith.addf %125, %126 : vector<1x1xf32>
    %128 = math.rsqrt %127 : vector<1x1xf32>
    %c8_i32_33 = arith.constant 8 : i32
    %129 = vector.broadcast %c8_i32_33 : i32 to vector<1x64xi32>
    %130 = arith.cmpi sge, %7, %129 : vector<1x64xi32>
    %c10_i32 = arith.constant 10 : i32
    %131 = vector.broadcast %c10_i32 : i32 to vector<1x64xi32>
    %132 = arith.cmpi slt, %7, %131 : vector<1x64xi32>
    %133 = arith.andi %130, %132 : vector<1x64xi1>
    %134 = vector.shape_cast %118 : vector<1x1xf32> to vector<1x1xf32>
    %135 = vector.broadcast %134 : vector<1x1xf32> to vector<1x64xf32>
    %136 = arith.select %133, %135, %110 : vector<1x64xi1>, vector<1x64xf32>
    %137 = vector.shape_cast %128 : vector<1x1xf32> to vector<1x1xf32>
    %138 = vector.broadcast %137 : vector<1x1xf32> to vector<1x64xf32>
    %139 = arith.select %133, %138, %113 : vector<1x64xi1>, vector<1x64xf32>
    %140 = vector.extract_strided_slice %3 {offsets = [0, 10], sizes = [1, 2], strides = [1, 1]} : vector<1x64xf32> to vector<1x2xf32>
    %cst_34 = arith.constant dense<0.000000e+00> : vector<1xf32>
    %141 = vector.multi_reduction <add>, %140, %cst_34 [1] : vector<1x2xf32> to vector<1xf32>
    %142 = vector.shape_cast %141 : vector<1xf32> to vector<1x1xf32>
    %cst_35 = arith.constant 7.812500e-03 : f32
    %143 = vector.broadcast %cst_35 : f32 to vector<1x1xf32>
    %144 = arith.mulf %142, %143 : vector<1x1xf32>
    %145 = vector.extract_strided_slice %6 {offsets = [0, 10], sizes = [1, 2], strides = [1, 1]} : vector<1x64xf32> to vector<1x2xf32>
    %cst_36 = arith.constant dense<0.000000e+00> : vector<1xf32>
    %146 = vector.multi_reduction <add>, %145, %cst_36 [1] : vector<1x2xf32> to vector<1xf32>
    %147 = vector.shape_cast %146 : vector<1xf32> to vector<1x1xf32>
    %cst_37 = arith.constant 7.812500e-03 : f32
    %148 = vector.broadcast %cst_37 : f32 to vector<1x1xf32>
    %149 = arith.mulf %147, %148 : vector<1x1xf32>
    %150 = arith.mulf %144, %144 : vector<1x1xf32>
    %151 = arith.subf %149, %150 : vector<1x1xf32>
    %cst_38 = arith.constant 9.99999974E-6 : f32
    %152 = vector.broadcast %cst_38 : f32 to vector<1x1xf32>
    %153 = arith.addf %151, %152 : vector<1x1xf32>
    %154 = math.rsqrt %153 : vector<1x1xf32>
    %c10_i32_39 = arith.constant 10 : i32
    %155 = vector.broadcast %c10_i32_39 : i32 to vector<1x64xi32>
    %156 = arith.cmpi sge, %7, %155 : vector<1x64xi32>
    %c12_i32 = arith.constant 12 : i32
    %157 = vector.broadcast %c12_i32 : i32 to vector<1x64xi32>
    %158 = arith.cmpi slt, %7, %157 : vector<1x64xi32>
    %159 = arith.andi %156, %158 : vector<1x64xi1>
    %160 = vector.shape_cast %144 : vector<1x1xf32> to vector<1x1xf32>
    %161 = vector.broadcast %160 : vector<1x1xf32> to vector<1x64xf32>
    %162 = arith.select %159, %161, %136 : vector<1x64xi1>, vector<1x64xf32>
    %163 = vector.shape_cast %154 : vector<1x1xf32> to vector<1x1xf32>
    %164 = vector.broadcast %163 : vector<1x1xf32> to vector<1x64xf32>
    %165 = arith.select %159, %164, %139 : vector<1x64xi1>, vector<1x64xf32>
    %166 = vector.extract_strided_slice %3 {offsets = [0, 12], sizes = [1, 2], strides = [1, 1]} : vector<1x64xf32> to vector<1x2xf32>
    %cst_40 = arith.constant dense<0.000000e+00> : vector<1xf32>
    %167 = vector.multi_reduction <add>, %166, %cst_40 [1] : vector<1x2xf32> to vector<1xf32>
    %168 = vector.shape_cast %167 : vector<1xf32> to vector<1x1xf32>
    %cst_41 = arith.constant 7.812500e-03 : f32
    %169 = vector.broadcast %cst_41 : f32 to vector<1x1xf32>
    %170 = arith.mulf %168, %169 : vector<1x1xf32>
    %171 = vector.extract_strided_slice %6 {offsets = [0, 12], sizes = [1, 2], strides = [1, 1]} : vector<1x64xf32> to vector<1x2xf32>
    %cst_42 = arith.constant dense<0.000000e+00> : vector<1xf32>
    %172 = vector.multi_reduction <add>, %171, %cst_42 [1] : vector<1x2xf32> to vector<1xf32>
    %173 = vector.shape_cast %172 : vector<1xf32> to vector<1x1xf32>
    %cst_43 = arith.constant 7.812500e-03 : f32
    %174 = vector.broadcast %cst_43 : f32 to vector<1x1xf32>
    %175 = arith.mulf %173, %174 : vector<1x1xf32>
    %176 = arith.mulf %170, %170 : vector<1x1xf32>
    %177 = arith.subf %175, %176 : vector<1x1xf32>
    %cst_44 = arith.constant 9.99999974E-6 : f32
    %178 = vector.broadcast %cst_44 : f32 to vector<1x1xf32>
    %179 = arith.addf %177, %178 : vector<1x1xf32>
    %180 = math.rsqrt %179 : vector<1x1xf32>
    %c12_i32_45 = arith.constant 12 : i32
    %181 = vector.broadcast %c12_i32_45 : i32 to vector<1x64xi32>
    %182 = arith.cmpi sge, %7, %181 : vector<1x64xi32>
    %c14_i32 = arith.constant 14 : i32
    %183 = vector.broadcast %c14_i32 : i32 to vector<1x64xi32>
    %184 = arith.cmpi slt, %7, %183 : vector<1x64xi32>
    %185 = arith.andi %182, %184 : vector<1x64xi1>
    %186 = vector.shape_cast %170 : vector<1x1xf32> to vector<1x1xf32>
    %187 = vector.broadcast %186 : vector<1x1xf32> to vector<1x64xf32>
    %188 = arith.select %185, %187, %162 : vector<1x64xi1>, vector<1x64xf32>
    %189 = vector.shape_cast %180 : vector<1x1xf32> to vector<1x1xf32>
    %190 = vector.broadcast %189 : vector<1x1xf32> to vector<1x64xf32>
    %191 = arith.select %185, %190, %165 : vector<1x64xi1>, vector<1x64xf32>
    %192 = vector.extract_strided_slice %3 {offsets = [0, 14], sizes = [1, 2], strides = [1, 1]} : vector<1x64xf32> to vector<1x2xf32>
    %cst_46 = arith.constant dense<0.000000e+00> : vector<1xf32>
    %193 = vector.multi_reduction <add>, %192, %cst_46 [1] : vector<1x2xf32> to vector<1xf32>
    %194 = vector.shape_cast %193 : vector<1xf32> to vector<1x1xf32>
    %cst_47 = arith.constant 7.812500e-03 : f32
    %195 = vector.broadcast %cst_47 : f32 to vector<1x1xf32>
    %196 = arith.mulf %194, %195 : vector<1x1xf32>
    %197 = vector.extract_strided_slice %6 {offsets = [0, 14], sizes = [1, 2], strides = [1, 1]} : vector<1x64xf32> to vector<1x2xf32>
    %cst_48 = arith.constant dense<0.000000e+00> : vector<1xf32>
    %198 = vector.multi_reduction <add>, %197, %cst_48 [1] : vector<1x2xf32> to vector<1xf32>
    %199 = vector.shape_cast %198 : vector<1xf32> to vector<1x1xf32>
    %cst_49 = arith.constant 7.812500e-03 : f32
    %200 = vector.broadcast %cst_49 : f32 to vector<1x1xf32>
    %201 = arith.mulf %199, %200 : vector<1x1xf32>
    %202 = arith.mulf %196, %196 : vector<1x1xf32>
    %203 = arith.subf %201, %202 : vector<1x1xf32>
    %cst_50 = arith.constant 9.99999974E-6 : f32
    %204 = vector.broadcast %cst_50 : f32 to vector<1x1xf32>
    %205 = arith.addf %203, %204 : vector<1x1xf32>
    %206 = math.rsqrt %205 : vector<1x1xf32>
    %c14_i32_51 = arith.constant 14 : i32
    %207 = vector.broadcast %c14_i32_51 : i32 to vector<1x64xi32>
    %208 = arith.cmpi sge, %7, %207 : vector<1x64xi32>
    %c16_i32 = arith.constant 16 : i32
    %209 = vector.broadcast %c16_i32 : i32 to vector<1x64xi32>
    %210 = arith.cmpi slt, %7, %209 : vector<1x64xi32>
    %211 = arith.andi %208, %210 : vector<1x64xi1>
    %212 = vector.shape_cast %196 : vector<1x1xf32> to vector<1x1xf32>
    %213 = vector.broadcast %212 : vector<1x1xf32> to vector<1x64xf32>
    %214 = arith.select %211, %213, %188 : vector<1x64xi1>, vector<1x64xf32>
    %215 = vector.shape_cast %206 : vector<1x1xf32> to vector<1x1xf32>
    %216 = vector.broadcast %215 : vector<1x1xf32> to vector<1x64xf32>
    %217 = arith.select %211, %216, %191 : vector<1x64xi1>, vector<1x64xf32>
    %218 = vector.extract_strided_slice %3 {offsets = [0, 16], sizes = [1, 2], strides = [1, 1]} : vector<1x64xf32> to vector<1x2xf32>
    %cst_52 = arith.constant dense<0.000000e+00> : vector<1xf32>
    %219 = vector.multi_reduction <add>, %218, %cst_52 [1] : vector<1x2xf32> to vector<1xf32>
    %220 = vector.shape_cast %219 : vector<1xf32> to vector<1x1xf32>
    %cst_53 = arith.constant 7.812500e-03 : f32
    %221 = vector.broadcast %cst_53 : f32 to vector<1x1xf32>
    %222 = arith.mulf %220, %221 : vector<1x1xf32>
    %223 = vector.extract_strided_slice %6 {offsets = [0, 16], sizes = [1, 2], strides = [1, 1]} : vector<1x64xf32> to vector<1x2xf32>
    %cst_54 = arith.constant dense<0.000000e+00> : vector<1xf32>
    %224 = vector.multi_reduction <add>, %223, %cst_54 [1] : vector<1x2xf32> to vector<1xf32>
    %225 = vector.shape_cast %224 : vector<1xf32> to vector<1x1xf32>
    %cst_55 = arith.constant 7.812500e-03 : f32
    %226 = vector.broadcast %cst_55 : f32 to vector<1x1xf32>
    %227 = arith.mulf %225, %226 : vector<1x1xf32>
    %228 = arith.mulf %222, %222 : vector<1x1xf32>
    %229 = arith.subf %227, %228 : vector<1x1xf32>
    %cst_56 = arith.constant 9.99999974E-6 : f32
    %230 = vector.broadcast %cst_56 : f32 to vector<1x1xf32>
    %231 = arith.addf %229, %230 : vector<1x1xf32>
    %232 = math.rsqrt %231 : vector<1x1xf32>
    %c16_i32_57 = arith.constant 16 : i32
    %233 = vector.broadcast %c16_i32_57 : i32 to vector<1x64xi32>
    %234 = arith.cmpi sge, %7, %233 : vector<1x64xi32>
    %c18_i32 = arith.constant 18 : i32
    %235 = vector.broadcast %c18_i32 : i32 to vector<1x64xi32>
    %236 = arith.cmpi slt, %7, %235 : vector<1x64xi32>
    %237 = arith.andi %234, %236 : vector<1x64xi1>
    %238 = vector.shape_cast %222 : vector<1x1xf32> to vector<1x1xf32>
    %239 = vector.broadcast %238 : vector<1x1xf32> to vector<1x64xf32>
    %240 = arith.select %237, %239, %214 : vector<1x64xi1>, vector<1x64xf32>
    %241 = vector.shape_cast %232 : vector<1x1xf32> to vector<1x1xf32>
    %242 = vector.broadcast %241 : vector<1x1xf32> to vector<1x64xf32>
    %243 = arith.select %237, %242, %217 : vector<1x64xi1>, vector<1x64xf32>
    %244 = vector.extract_strided_slice %3 {offsets = [0, 18], sizes = [1, 2], strides = [1, 1]} : vector<1x64xf32> to vector<1x2xf32>
    %cst_58 = arith.constant dense<0.000000e+00> : vector<1xf32>
    %245 = vector.multi_reduction <add>, %244, %cst_58 [1] : vector<1x2xf32> to vector<1xf32>
    %246 = vector.shape_cast %245 : vector<1xf32> to vector<1x1xf32>
    %cst_59 = arith.constant 7.812500e-03 : f32
    %247 = vector.broadcast %cst_59 : f32 to vector<1x1xf32>
    %248 = arith.mulf %246, %247 : vector<1x1xf32>
    %249 = vector.extract_strided_slice %6 {offsets = [0, 18], sizes = [1, 2], strides = [1, 1]} : vector<1x64xf32> to vector<1x2xf32>
    %cst_60 = arith.constant dense<0.000000e+00> : vector<1xf32>
    %250 = vector.multi_reduction <add>, %249, %cst_60 [1] : vector<1x2xf32> to vector<1xf32>
    %251 = vector.shape_cast %250 : vector<1xf32> to vector<1x1xf32>
    %cst_61 = arith.constant 7.812500e-03 : f32
    %252 = vector.broadcast %cst_61 : f32 to vector<1x1xf32>
    %253 = arith.mulf %251, %252 : vector<1x1xf32>
    %254 = arith.mulf %248, %248 : vector<1x1xf32>
    %255 = arith.subf %253, %254 : vector<1x1xf32>
    %cst_62 = arith.constant 9.99999974E-6 : f32
    %256 = vector.broadcast %cst_62 : f32 to vector<1x1xf32>
    %257 = arith.addf %255, %256 : vector<1x1xf32>
    %258 = math.rsqrt %257 : vector<1x1xf32>
    %c18_i32_63 = arith.constant 18 : i32
    %259 = vector.broadcast %c18_i32_63 : i32 to vector<1x64xi32>
    %260 = arith.cmpi sge, %7, %259 : vector<1x64xi32>
    %c20_i32 = arith.constant 20 : i32
    %261 = vector.broadcast %c20_i32 : i32 to vector<1x64xi32>
    %262 = arith.cmpi slt, %7, %261 : vector<1x64xi32>
    %263 = arith.andi %260, %262 : vector<1x64xi1>
    %264 = vector.shape_cast %248 : vector<1x1xf32> to vector<1x1xf32>
    %265 = vector.broadcast %264 : vector<1x1xf32> to vector<1x64xf32>
    %266 = arith.select %263, %265, %240 : vector<1x64xi1>, vector<1x64xf32>
    %267 = vector.shape_cast %258 : vector<1x1xf32> to vector<1x1xf32>
    %268 = vector.broadcast %267 : vector<1x1xf32> to vector<1x64xf32>
    %269 = arith.select %263, %268, %243 : vector<1x64xi1>, vector<1x64xf32>
    %270 = vector.extract_strided_slice %3 {offsets = [0, 20], sizes = [1, 2], strides = [1, 1]} : vector<1x64xf32> to vector<1x2xf32>
    %cst_64 = arith.constant dense<0.000000e+00> : vector<1xf32>
    %271 = vector.multi_reduction <add>, %270, %cst_64 [1] : vector<1x2xf32> to vector<1xf32>
    %272 = vector.shape_cast %271 : vector<1xf32> to vector<1x1xf32>
    %cst_65 = arith.constant 7.812500e-03 : f32
    %273 = vector.broadcast %cst_65 : f32 to vector<1x1xf32>
    %274 = arith.mulf %272, %273 : vector<1x1xf32>
    %275 = vector.extract_strided_slice %6 {offsets = [0, 20], sizes = [1, 2], strides = [1, 1]} : vector<1x64xf32> to vector<1x2xf32>
    %cst_66 = arith.constant dense<0.000000e+00> : vector<1xf32>
    %276 = vector.multi_reduction <add>, %275, %cst_66 [1] : vector<1x2xf32> to vector<1xf32>
    %277 = vector.shape_cast %276 : vector<1xf32> to vector<1x1xf32>
    %cst_67 = arith.constant 7.812500e-03 : f32
    %278 = vector.broadcast %cst_67 : f32 to vector<1x1xf32>
    %279 = arith.mulf %277, %278 : vector<1x1xf32>
    %280 = arith.mulf %274, %274 : vector<1x1xf32>
    %281 = arith.subf %279, %280 : vector<1x1xf32>
    %cst_68 = arith.constant 9.99999974E-6 : f32
    %282 = vector.broadcast %cst_68 : f32 to vector<1x1xf32>
    %283 = arith.addf %281, %282 : vector<1x1xf32>
    %284 = math.rsqrt %283 : vector<1x1xf32>
    %c20_i32_69 = arith.constant 20 : i32
    %285 = vector.broadcast %c20_i32_69 : i32 to vector<1x64xi32>
    %286 = arith.cmpi sge, %7, %285 : vector<1x64xi32>
    %c22_i32 = arith.constant 22 : i32
    %287 = vector.broadcast %c22_i32 : i32 to vector<1x64xi32>
    %288 = arith.cmpi slt, %7, %287 : vector<1x64xi32>
    %289 = arith.andi %286, %288 : vector<1x64xi1>
    %290 = vector.shape_cast %274 : vector<1x1xf32> to vector<1x1xf32>
    %291 = vector.broadcast %290 : vector<1x1xf32> to vector<1x64xf32>
    %292 = arith.select %289, %291, %266 : vector<1x64xi1>, vector<1x64xf32>
    %293 = vector.shape_cast %284 : vector<1x1xf32> to vector<1x1xf32>
    %294 = vector.broadcast %293 : vector<1x1xf32> to vector<1x64xf32>
    %295 = arith.select %289, %294, %269 : vector<1x64xi1>, vector<1x64xf32>
    %296 = vector.extract_strided_slice %3 {offsets = [0, 22], sizes = [1, 2], strides = [1, 1]} : vector<1x64xf32> to vector<1x2xf32>
    %cst_70 = arith.constant dense<0.000000e+00> : vector<1xf32>
    %297 = vector.multi_reduction <add>, %296, %cst_70 [1] : vector<1x2xf32> to vector<1xf32>
    %298 = vector.shape_cast %297 : vector<1xf32> to vector<1x1xf32>
    %cst_71 = arith.constant 7.812500e-03 : f32
    %299 = vector.broadcast %cst_71 : f32 to vector<1x1xf32>
    %300 = arith.mulf %298, %299 : vector<1x1xf32>
    %301 = vector.extract_strided_slice %6 {offsets = [0, 22], sizes = [1, 2], strides = [1, 1]} : vector<1x64xf32> to vector<1x2xf32>
    %cst_72 = arith.constant dense<0.000000e+00> : vector<1xf32>
    %302 = vector.multi_reduction <add>, %301, %cst_72 [1] : vector<1x2xf32> to vector<1xf32>
    %303 = vector.shape_cast %302 : vector<1xf32> to vector<1x1xf32>
    %cst_73 = arith.constant 7.812500e-03 : f32
    %304 = vector.broadcast %cst_73 : f32 to vector<1x1xf32>
    %305 = arith.mulf %303, %304 : vector<1x1xf32>
    %306 = arith.mulf %300, %300 : vector<1x1xf32>
    %307 = arith.subf %305, %306 : vector<1x1xf32>
    %cst_74 = arith.constant 9.99999974E-6 : f32
    %308 = vector.broadcast %cst_74 : f32 to vector<1x1xf32>
    %309 = arith.addf %307, %308 : vector<1x1xf32>
    %310 = math.rsqrt %309 : vector<1x1xf32>
    %c22_i32_75 = arith.constant 22 : i32
    %311 = vector.broadcast %c22_i32_75 : i32 to vector<1x64xi32>
    %312 = arith.cmpi sge, %7, %311 : vector<1x64xi32>
    %c24_i32 = arith.constant 24 : i32
    %313 = vector.broadcast %c24_i32 : i32 to vector<1x64xi32>
    %314 = arith.cmpi slt, %7, %313 : vector<1x64xi32>
    %315 = arith.andi %312, %314 : vector<1x64xi1>
    %316 = vector.shape_cast %300 : vector<1x1xf32> to vector<1x1xf32>
    %317 = vector.broadcast %316 : vector<1x1xf32> to vector<1x64xf32>
    %318 = arith.select %315, %317, %292 : vector<1x64xi1>, vector<1x64xf32>
    %319 = vector.shape_cast %310 : vector<1x1xf32> to vector<1x1xf32>
    %320 = vector.broadcast %319 : vector<1x1xf32> to vector<1x64xf32>
    %321 = arith.select %315, %320, %295 : vector<1x64xi1>, vector<1x64xf32>
    %322 = vector.extract_strided_slice %3 {offsets = [0, 24], sizes = [1, 2], strides = [1, 1]} : vector<1x64xf32> to vector<1x2xf32>
    %cst_76 = arith.constant dense<0.000000e+00> : vector<1xf32>
    %323 = vector.multi_reduction <add>, %322, %cst_76 [1] : vector<1x2xf32> to vector<1xf32>
    %324 = vector.shape_cast %323 : vector<1xf32> to vector<1x1xf32>
    %cst_77 = arith.constant 7.812500e-03 : f32
    %325 = vector.broadcast %cst_77 : f32 to vector<1x1xf32>
    %326 = arith.mulf %324, %325 : vector<1x1xf32>
    %327 = vector.extract_strided_slice %6 {offsets = [0, 24], sizes = [1, 2], strides = [1, 1]} : vector<1x64xf32> to vector<1x2xf32>
    %cst_78 = arith.constant dense<0.000000e+00> : vector<1xf32>
    %328 = vector.multi_reduction <add>, %327, %cst_78 [1] : vector<1x2xf32> to vector<1xf32>
    %329 = vector.shape_cast %328 : vector<1xf32> to vector<1x1xf32>
    %cst_79 = arith.constant 7.812500e-03 : f32
    %330 = vector.broadcast %cst_79 : f32 to vector<1x1xf32>
    %331 = arith.mulf %329, %330 : vector<1x1xf32>
    %332 = arith.mulf %326, %326 : vector<1x1xf32>
    %333 = arith.subf %331, %332 : vector<1x1xf32>
    %cst_80 = arith.constant 9.99999974E-6 : f32
    %334 = vector.broadcast %cst_80 : f32 to vector<1x1xf32>
    %335 = arith.addf %333, %334 : vector<1x1xf32>
    %336 = math.rsqrt %335 : vector<1x1xf32>
    %c24_i32_81 = arith.constant 24 : i32
    %337 = vector.broadcast %c24_i32_81 : i32 to vector<1x64xi32>
    %338 = arith.cmpi sge, %7, %337 : vector<1x64xi32>
    %c26_i32 = arith.constant 26 : i32
    %339 = vector.broadcast %c26_i32 : i32 to vector<1x64xi32>
    %340 = arith.cmpi slt, %7, %339 : vector<1x64xi32>
    %341 = arith.andi %338, %340 : vector<1x64xi1>
    %342 = vector.shape_cast %326 : vector<1x1xf32> to vector<1x1xf32>
    %343 = vector.broadcast %342 : vector<1x1xf32> to vector<1x64xf32>
    %344 = arith.select %341, %343, %318 : vector<1x64xi1>, vector<1x64xf32>
    %345 = vector.shape_cast %336 : vector<1x1xf32> to vector<1x1xf32>
    %346 = vector.broadcast %345 : vector<1x1xf32> to vector<1x64xf32>
    %347 = arith.select %341, %346, %321 : vector<1x64xi1>, vector<1x64xf32>
    %348 = vector.extract_strided_slice %3 {offsets = [0, 26], sizes = [1, 2], strides = [1, 1]} : vector<1x64xf32> to vector<1x2xf32>
    %cst_82 = arith.constant dense<0.000000e+00> : vector<1xf32>
    %349 = vector.multi_reduction <add>, %348, %cst_82 [1] : vector<1x2xf32> to vector<1xf32>
    %350 = vector.shape_cast %349 : vector<1xf32> to vector<1x1xf32>
    %cst_83 = arith.constant 7.812500e-03 : f32
    %351 = vector.broadcast %cst_83 : f32 to vector<1x1xf32>
    %352 = arith.mulf %350, %351 : vector<1x1xf32>
    %353 = vector.extract_strided_slice %6 {offsets = [0, 26], sizes = [1, 2], strides = [1, 1]} : vector<1x64xf32> to vector<1x2xf32>
    %cst_84 = arith.constant dense<0.000000e+00> : vector<1xf32>
    %354 = vector.multi_reduction <add>, %353, %cst_84 [1] : vector<1x2xf32> to vector<1xf32>
    %355 = vector.shape_cast %354 : vector<1xf32> to vector<1x1xf32>
    %cst_85 = arith.constant 7.812500e-03 : f32
    %356 = vector.broadcast %cst_85 : f32 to vector<1x1xf32>
    %357 = arith.mulf %355, %356 : vector<1x1xf32>
    %358 = arith.mulf %352, %352 : vector<1x1xf32>
    %359 = arith.subf %357, %358 : vector<1x1xf32>
    %cst_86 = arith.constant 9.99999974E-6 : f32
    %360 = vector.broadcast %cst_86 : f32 to vector<1x1xf32>
    %361 = arith.addf %359, %360 : vector<1x1xf32>
    %362 = math.rsqrt %361 : vector<1x1xf32>
    %c26_i32_87 = arith.constant 26 : i32
    %363 = vector.broadcast %c26_i32_87 : i32 to vector<1x64xi32>
    %364 = arith.cmpi sge, %7, %363 : vector<1x64xi32>
    %c28_i32 = arith.constant 28 : i32
    %365 = vector.broadcast %c28_i32 : i32 to vector<1x64xi32>
    %366 = arith.cmpi slt, %7, %365 : vector<1x64xi32>
    %367 = arith.andi %364, %366 : vector<1x64xi1>
    %368 = vector.shape_cast %352 : vector<1x1xf32> to vector<1x1xf32>
    %369 = vector.broadcast %368 : vector<1x1xf32> to vector<1x64xf32>
    %370 = arith.select %367, %369, %344 : vector<1x64xi1>, vector<1x64xf32>
    %371 = vector.shape_cast %362 : vector<1x1xf32> to vector<1x1xf32>
    %372 = vector.broadcast %371 : vector<1x1xf32> to vector<1x64xf32>
    %373 = arith.select %367, %372, %347 : vector<1x64xi1>, vector<1x64xf32>
    %374 = vector.extract_strided_slice %3 {offsets = [0, 28], sizes = [1, 2], strides = [1, 1]} : vector<1x64xf32> to vector<1x2xf32>
    %cst_88 = arith.constant dense<0.000000e+00> : vector<1xf32>
    %375 = vector.multi_reduction <add>, %374, %cst_88 [1] : vector<1x2xf32> to vector<1xf32>
    %376 = vector.shape_cast %375 : vector<1xf32> to vector<1x1xf32>
    %cst_89 = arith.constant 7.812500e-03 : f32
    %377 = vector.broadcast %cst_89 : f32 to vector<1x1xf32>
    %378 = arith.mulf %376, %377 : vector<1x1xf32>
    %379 = vector.extract_strided_slice %6 {offsets = [0, 28], sizes = [1, 2], strides = [1, 1]} : vector<1x64xf32> to vector<1x2xf32>
    %cst_90 = arith.constant dense<0.000000e+00> : vector<1xf32>
    %380 = vector.multi_reduction <add>, %379, %cst_90 [1] : vector<1x2xf32> to vector<1xf32>
    %381 = vector.shape_cast %380 : vector<1xf32> to vector<1x1xf32>
    %cst_91 = arith.constant 7.812500e-03 : f32
    %382 = vector.broadcast %cst_91 : f32 to vector<1x1xf32>
    %383 = arith.mulf %381, %382 : vector<1x1xf32>
    %384 = arith.mulf %378, %378 : vector<1x1xf32>
    %385 = arith.subf %383, %384 : vector<1x1xf32>
    %cst_92 = arith.constant 9.99999974E-6 : f32
    %386 = vector.broadcast %cst_92 : f32 to vector<1x1xf32>
    %387 = arith.addf %385, %386 : vector<1x1xf32>
    %388 = math.rsqrt %387 : vector<1x1xf32>
    %c28_i32_93 = arith.constant 28 : i32
    %389 = vector.broadcast %c28_i32_93 : i32 to vector<1x64xi32>
    %390 = arith.cmpi sge, %7, %389 : vector<1x64xi32>
    %c30_i32 = arith.constant 30 : i32
    %391 = vector.broadcast %c30_i32 : i32 to vector<1x64xi32>
    %392 = arith.cmpi slt, %7, %391 : vector<1x64xi32>
    %393 = arith.andi %390, %392 : vector<1x64xi1>
    %394 = vector.shape_cast %378 : vector<1x1xf32> to vector<1x1xf32>
    %395 = vector.broadcast %394 : vector<1x1xf32> to vector<1x64xf32>
    %396 = arith.select %393, %395, %370 : vector<1x64xi1>, vector<1x64xf32>
    %397 = vector.shape_cast %388 : vector<1x1xf32> to vector<1x1xf32>
    %398 = vector.broadcast %397 : vector<1x1xf32> to vector<1x64xf32>
    %399 = arith.select %393, %398, %373 : vector<1x64xi1>, vector<1x64xf32>
    %400 = vector.extract_strided_slice %3 {offsets = [0, 30], sizes = [1, 2], strides = [1, 1]} : vector<1x64xf32> to vector<1x2xf32>
    %cst_94 = arith.constant dense<0.000000e+00> : vector<1xf32>
    %401 = vector.multi_reduction <add>, %400, %cst_94 [1] : vector<1x2xf32> to vector<1xf32>
    %402 = vector.shape_cast %401 : vector<1xf32> to vector<1x1xf32>
    %cst_95 = arith.constant 7.812500e-03 : f32
    %403 = vector.broadcast %cst_95 : f32 to vector<1x1xf32>
    %404 = arith.mulf %402, %403 : vector<1x1xf32>
    %405 = vector.extract_strided_slice %6 {offsets = [0, 30], sizes = [1, 2], strides = [1, 1]} : vector<1x64xf32> to vector<1x2xf32>
    %cst_96 = arith.constant dense<0.000000e+00> : vector<1xf32>
    %406 = vector.multi_reduction <add>, %405, %cst_96 [1] : vector<1x2xf32> to vector<1xf32>
    %407 = vector.shape_cast %406 : vector<1xf32> to vector<1x1xf32>
    %cst_97 = arith.constant 7.812500e-03 : f32
    %408 = vector.broadcast %cst_97 : f32 to vector<1x1xf32>
    %409 = arith.mulf %407, %408 : vector<1x1xf32>
    %410 = arith.mulf %404, %404 : vector<1x1xf32>
    %411 = arith.subf %409, %410 : vector<1x1xf32>
    %cst_98 = arith.constant 9.99999974E-6 : f32
    %412 = vector.broadcast %cst_98 : f32 to vector<1x1xf32>
    %413 = arith.addf %411, %412 : vector<1x1xf32>
    %414 = math.rsqrt %413 : vector<1x1xf32>
    %c30_i32_99 = arith.constant 30 : i32
    %415 = vector.broadcast %c30_i32_99 : i32 to vector<1x64xi32>
    %416 = arith.cmpi sge, %7, %415 : vector<1x64xi32>
    %c32_i32 = arith.constant 32 : i32
    %417 = vector.broadcast %c32_i32 : i32 to vector<1x64xi32>
    %418 = arith.cmpi slt, %7, %417 : vector<1x64xi32>
    %419 = arith.andi %416, %418 : vector<1x64xi1>
    %420 = vector.shape_cast %404 : vector<1x1xf32> to vector<1x1xf32>
    %421 = vector.broadcast %420 : vector<1x1xf32> to vector<1x64xf32>
    %422 = arith.select %419, %421, %396 : vector<1x64xi1>, vector<1x64xf32>
    %423 = vector.shape_cast %414 : vector<1x1xf32> to vector<1x1xf32>
    %424 = vector.broadcast %423 : vector<1x1xf32> to vector<1x64xf32>
    %425 = arith.select %419, %424, %399 : vector<1x64xi1>, vector<1x64xf32>
    %426 = vector.extract_strided_slice %3 {offsets = [0, 32], sizes = [1, 2], strides = [1, 1]} : vector<1x64xf32> to vector<1x2xf32>
    %cst_100 = arith.constant dense<0.000000e+00> : vector<1xf32>
    %427 = vector.multi_reduction <add>, %426, %cst_100 [1] : vector<1x2xf32> to vector<1xf32>
    %428 = vector.shape_cast %427 : vector<1xf32> to vector<1x1xf32>
    %cst_101 = arith.constant 7.812500e-03 : f32
    %429 = vector.broadcast %cst_101 : f32 to vector<1x1xf32>
    %430 = arith.mulf %428, %429 : vector<1x1xf32>
    %431 = vector.extract_strided_slice %6 {offsets = [0, 32], sizes = [1, 2], strides = [1, 1]} : vector<1x64xf32> to vector<1x2xf32>
    %cst_102 = arith.constant dense<0.000000e+00> : vector<1xf32>
    %432 = vector.multi_reduction <add>, %431, %cst_102 [1] : vector<1x2xf32> to vector<1xf32>
    %433 = vector.shape_cast %432 : vector<1xf32> to vector<1x1xf32>
    %cst_103 = arith.constant 7.812500e-03 : f32
    %434 = vector.broadcast %cst_103 : f32 to vector<1x1xf32>
    %435 = arith.mulf %433, %434 : vector<1x1xf32>
    %436 = arith.mulf %430, %430 : vector<1x1xf32>
    %437 = arith.subf %435, %436 : vector<1x1xf32>
    %cst_104 = arith.constant 9.99999974E-6 : f32
    %438 = vector.broadcast %cst_104 : f32 to vector<1x1xf32>
    %439 = arith.addf %437, %438 : vector<1x1xf32>
    %440 = math.rsqrt %439 : vector<1x1xf32>
    %c32_i32_105 = arith.constant 32 : i32
    %441 = vector.broadcast %c32_i32_105 : i32 to vector<1x64xi32>
    %442 = arith.cmpi sge, %7, %441 : vector<1x64xi32>
    %c34_i32 = arith.constant 34 : i32
    %443 = vector.broadcast %c34_i32 : i32 to vector<1x64xi32>
    %444 = arith.cmpi slt, %7, %443 : vector<1x64xi32>
    %445 = arith.andi %442, %444 : vector<1x64xi1>
    %446 = vector.shape_cast %430 : vector<1x1xf32> to vector<1x1xf32>
    %447 = vector.broadcast %446 : vector<1x1xf32> to vector<1x64xf32>
    %448 = arith.select %445, %447, %422 : vector<1x64xi1>, vector<1x64xf32>
    %449 = vector.shape_cast %440 : vector<1x1xf32> to vector<1x1xf32>
    %450 = vector.broadcast %449 : vector<1x1xf32> to vector<1x64xf32>
    %451 = arith.select %445, %450, %425 : vector<1x64xi1>, vector<1x64xf32>
    %452 = vector.extract_strided_slice %3 {offsets = [0, 34], sizes = [1, 2], strides = [1, 1]} : vector<1x64xf32> to vector<1x2xf32>
    %cst_106 = arith.constant dense<0.000000e+00> : vector<1xf32>
    %453 = vector.multi_reduction <add>, %452, %cst_106 [1] : vector<1x2xf32> to vector<1xf32>
    %454 = vector.shape_cast %453 : vector<1xf32> to vector<1x1xf32>
    %cst_107 = arith.constant 7.812500e-03 : f32
    %455 = vector.broadcast %cst_107 : f32 to vector<1x1xf32>
    %456 = arith.mulf %454, %455 : vector<1x1xf32>
    %457 = vector.extract_strided_slice %6 {offsets = [0, 34], sizes = [1, 2], strides = [1, 1]} : vector<1x64xf32> to vector<1x2xf32>
    %cst_108 = arith.constant dense<0.000000e+00> : vector<1xf32>
    %458 = vector.multi_reduction <add>, %457, %cst_108 [1] : vector<1x2xf32> to vector<1xf32>
    %459 = vector.shape_cast %458 : vector<1xf32> to vector<1x1xf32>
    %cst_109 = arith.constant 7.812500e-03 : f32
    %460 = vector.broadcast %cst_109 : f32 to vector<1x1xf32>
    %461 = arith.mulf %459, %460 : vector<1x1xf32>
    %462 = arith.mulf %456, %456 : vector<1x1xf32>
    %463 = arith.subf %461, %462 : vector<1x1xf32>
    %cst_110 = arith.constant 9.99999974E-6 : f32
    %464 = vector.broadcast %cst_110 : f32 to vector<1x1xf32>
    %465 = arith.addf %463, %464 : vector<1x1xf32>
    %466 = math.rsqrt %465 : vector<1x1xf32>
    %c34_i32_111 = arith.constant 34 : i32
    %467 = vector.broadcast %c34_i32_111 : i32 to vector<1x64xi32>
    %468 = arith.cmpi sge, %7, %467 : vector<1x64xi32>
    %c36_i32 = arith.constant 36 : i32
    %469 = vector.broadcast %c36_i32 : i32 to vector<1x64xi32>
    %470 = arith.cmpi slt, %7, %469 : vector<1x64xi32>
    %471 = arith.andi %468, %470 : vector<1x64xi1>
    %472 = vector.shape_cast %456 : vector<1x1xf32> to vector<1x1xf32>
    %473 = vector.broadcast %472 : vector<1x1xf32> to vector<1x64xf32>
    %474 = arith.select %471, %473, %448 : vector<1x64xi1>, vector<1x64xf32>
    %475 = vector.shape_cast %466 : vector<1x1xf32> to vector<1x1xf32>
    %476 = vector.broadcast %475 : vector<1x1xf32> to vector<1x64xf32>
    %477 = arith.select %471, %476, %451 : vector<1x64xi1>, vector<1x64xf32>
    %478 = vector.extract_strided_slice %3 {offsets = [0, 36], sizes = [1, 2], strides = [1, 1]} : vector<1x64xf32> to vector<1x2xf32>
    %cst_112 = arith.constant dense<0.000000e+00> : vector<1xf32>
    %479 = vector.multi_reduction <add>, %478, %cst_112 [1] : vector<1x2xf32> to vector<1xf32>
    %480 = vector.shape_cast %479 : vector<1xf32> to vector<1x1xf32>
    %cst_113 = arith.constant 7.812500e-03 : f32
    %481 = vector.broadcast %cst_113 : f32 to vector<1x1xf32>
    %482 = arith.mulf %480, %481 : vector<1x1xf32>
    %483 = vector.extract_strided_slice %6 {offsets = [0, 36], sizes = [1, 2], strides = [1, 1]} : vector<1x64xf32> to vector<1x2xf32>
    %cst_114 = arith.constant dense<0.000000e+00> : vector<1xf32>
    %484 = vector.multi_reduction <add>, %483, %cst_114 [1] : vector<1x2xf32> to vector<1xf32>
    %485 = vector.shape_cast %484 : vector<1xf32> to vector<1x1xf32>
    %cst_115 = arith.constant 7.812500e-03 : f32
    %486 = vector.broadcast %cst_115 : f32 to vector<1x1xf32>
    %487 = arith.mulf %485, %486 : vector<1x1xf32>
    %488 = arith.mulf %482, %482 : vector<1x1xf32>
    %489 = arith.subf %487, %488 : vector<1x1xf32>
    %cst_116 = arith.constant 9.99999974E-6 : f32
    %490 = vector.broadcast %cst_116 : f32 to vector<1x1xf32>
    %491 = arith.addf %489, %490 : vector<1x1xf32>
    %492 = math.rsqrt %491 : vector<1x1xf32>
    %c36_i32_117 = arith.constant 36 : i32
    %493 = vector.broadcast %c36_i32_117 : i32 to vector<1x64xi32>
    %494 = arith.cmpi sge, %7, %493 : vector<1x64xi32>
    %c38_i32 = arith.constant 38 : i32
    %495 = vector.broadcast %c38_i32 : i32 to vector<1x64xi32>
    %496 = arith.cmpi slt, %7, %495 : vector<1x64xi32>
    %497 = arith.andi %494, %496 : vector<1x64xi1>
    %498 = vector.shape_cast %482 : vector<1x1xf32> to vector<1x1xf32>
    %499 = vector.broadcast %498 : vector<1x1xf32> to vector<1x64xf32>
    %500 = arith.select %497, %499, %474 : vector<1x64xi1>, vector<1x64xf32>
    %501 = vector.shape_cast %492 : vector<1x1xf32> to vector<1x1xf32>
    %502 = vector.broadcast %501 : vector<1x1xf32> to vector<1x64xf32>
    %503 = arith.select %497, %502, %477 : vector<1x64xi1>, vector<1x64xf32>
    %504 = vector.extract_strided_slice %3 {offsets = [0, 38], sizes = [1, 2], strides = [1, 1]} : vector<1x64xf32> to vector<1x2xf32>
    %cst_118 = arith.constant dense<0.000000e+00> : vector<1xf32>
    %505 = vector.multi_reduction <add>, %504, %cst_118 [1] : vector<1x2xf32> to vector<1xf32>
    %506 = vector.shape_cast %505 : vector<1xf32> to vector<1x1xf32>
    %cst_119 = arith.constant 7.812500e-03 : f32
    %507 = vector.broadcast %cst_119 : f32 to vector<1x1xf32>
    %508 = arith.mulf %506, %507 : vector<1x1xf32>
    %509 = vector.extract_strided_slice %6 {offsets = [0, 38], sizes = [1, 2], strides = [1, 1]} : vector<1x64xf32> to vector<1x2xf32>
    %cst_120 = arith.constant dense<0.000000e+00> : vector<1xf32>
    %510 = vector.multi_reduction <add>, %509, %cst_120 [1] : vector<1x2xf32> to vector<1xf32>
    %511 = vector.shape_cast %510 : vector<1xf32> to vector<1x1xf32>
    %cst_121 = arith.constant 7.812500e-03 : f32
    %512 = vector.broadcast %cst_121 : f32 to vector<1x1xf32>
    %513 = arith.mulf %511, %512 : vector<1x1xf32>
    %514 = arith.mulf %508, %508 : vector<1x1xf32>
    %515 = arith.subf %513, %514 : vector<1x1xf32>
    %cst_122 = arith.constant 9.99999974E-6 : f32
    %516 = vector.broadcast %cst_122 : f32 to vector<1x1xf32>
    %517 = arith.addf %515, %516 : vector<1x1xf32>
    %518 = math.rsqrt %517 : vector<1x1xf32>
    %c38_i32_123 = arith.constant 38 : i32
    %519 = vector.broadcast %c38_i32_123 : i32 to vector<1x64xi32>
    %520 = arith.cmpi sge, %7, %519 : vector<1x64xi32>
    %c40_i32 = arith.constant 40 : i32
    %521 = vector.broadcast %c40_i32 : i32 to vector<1x64xi32>
    %522 = arith.cmpi slt, %7, %521 : vector<1x64xi32>
    %523 = arith.andi %520, %522 : vector<1x64xi1>
    %524 = vector.shape_cast %508 : vector<1x1xf32> to vector<1x1xf32>
    %525 = vector.broadcast %524 : vector<1x1xf32> to vector<1x64xf32>
    %526 = arith.select %523, %525, %500 : vector<1x64xi1>, vector<1x64xf32>
    %527 = vector.shape_cast %518 : vector<1x1xf32> to vector<1x1xf32>
    %528 = vector.broadcast %527 : vector<1x1xf32> to vector<1x64xf32>
    %529 = arith.select %523, %528, %503 : vector<1x64xi1>, vector<1x64xf32>
    %530 = vector.extract_strided_slice %3 {offsets = [0, 40], sizes = [1, 2], strides = [1, 1]} : vector<1x64xf32> to vector<1x2xf32>
    %cst_124 = arith.constant dense<0.000000e+00> : vector<1xf32>
    %531 = vector.multi_reduction <add>, %530, %cst_124 [1] : vector<1x2xf32> to vector<1xf32>
    %532 = vector.shape_cast %531 : vector<1xf32> to vector<1x1xf32>
    %cst_125 = arith.constant 7.812500e-03 : f32
    %533 = vector.broadcast %cst_125 : f32 to vector<1x1xf32>
    %534 = arith.mulf %532, %533 : vector<1x1xf32>
    %535 = vector.extract_strided_slice %6 {offsets = [0, 40], sizes = [1, 2], strides = [1, 1]} : vector<1x64xf32> to vector<1x2xf32>
    %cst_126 = arith.constant dense<0.000000e+00> : vector<1xf32>
    %536 = vector.multi_reduction <add>, %535, %cst_126 [1] : vector<1x2xf32> to vector<1xf32>
    %537 = vector.shape_cast %536 : vector<1xf32> to vector<1x1xf32>
    %cst_127 = arith.constant 7.812500e-03 : f32
    %538 = vector.broadcast %cst_127 : f32 to vector<1x1xf32>
    %539 = arith.mulf %537, %538 : vector<1x1xf32>
    %540 = arith.mulf %534, %534 : vector<1x1xf32>
    %541 = arith.subf %539, %540 : vector<1x1xf32>
    %cst_128 = arith.constant 9.99999974E-6 : f32
    %542 = vector.broadcast %cst_128 : f32 to vector<1x1xf32>
    %543 = arith.addf %541, %542 : vector<1x1xf32>
    %544 = math.rsqrt %543 : vector<1x1xf32>
    %c40_i32_129 = arith.constant 40 : i32
    %545 = vector.broadcast %c40_i32_129 : i32 to vector<1x64xi32>
    %546 = arith.cmpi sge, %7, %545 : vector<1x64xi32>
    %c42_i32 = arith.constant 42 : i32
    %547 = vector.broadcast %c42_i32 : i32 to vector<1x64xi32>
    %548 = arith.cmpi slt, %7, %547 : vector<1x64xi32>
    %549 = arith.andi %546, %548 : vector<1x64xi1>
    %550 = vector.shape_cast %534 : vector<1x1xf32> to vector<1x1xf32>
    %551 = vector.broadcast %550 : vector<1x1xf32> to vector<1x64xf32>
    %552 = arith.select %549, %551, %526 : vector<1x64xi1>, vector<1x64xf32>
    %553 = vector.shape_cast %544 : vector<1x1xf32> to vector<1x1xf32>
    %554 = vector.broadcast %553 : vector<1x1xf32> to vector<1x64xf32>
    %555 = arith.select %549, %554, %529 : vector<1x64xi1>, vector<1x64xf32>
    %556 = vector.extract_strided_slice %3 {offsets = [0, 42], sizes = [1, 2], strides = [1, 1]} : vector<1x64xf32> to vector<1x2xf32>
    %cst_130 = arith.constant dense<0.000000e+00> : vector<1xf32>
    %557 = vector.multi_reduction <add>, %556, %cst_130 [1] : vector<1x2xf32> to vector<1xf32>
    %558 = vector.shape_cast %557 : vector<1xf32> to vector<1x1xf32>
    %cst_131 = arith.constant 7.812500e-03 : f32
    %559 = vector.broadcast %cst_131 : f32 to vector<1x1xf32>
    %560 = arith.mulf %558, %559 : vector<1x1xf32>
    %561 = vector.extract_strided_slice %6 {offsets = [0, 42], sizes = [1, 2], strides = [1, 1]} : vector<1x64xf32> to vector<1x2xf32>
    %cst_132 = arith.constant dense<0.000000e+00> : vector<1xf32>
    %562 = vector.multi_reduction <add>, %561, %cst_132 [1] : vector<1x2xf32> to vector<1xf32>
    %563 = vector.shape_cast %562 : vector<1xf32> to vector<1x1xf32>
    %cst_133 = arith.constant 7.812500e-03 : f32
    %564 = vector.broadcast %cst_133 : f32 to vector<1x1xf32>
    %565 = arith.mulf %563, %564 : vector<1x1xf32>
    %566 = arith.mulf %560, %560 : vector<1x1xf32>
    %567 = arith.subf %565, %566 : vector<1x1xf32>
    %cst_134 = arith.constant 9.99999974E-6 : f32
    %568 = vector.broadcast %cst_134 : f32 to vector<1x1xf32>
    %569 = arith.addf %567, %568 : vector<1x1xf32>
    %570 = math.rsqrt %569 : vector<1x1xf32>
    %c42_i32_135 = arith.constant 42 : i32
    %571 = vector.broadcast %c42_i32_135 : i32 to vector<1x64xi32>
    %572 = arith.cmpi sge, %7, %571 : vector<1x64xi32>
    %c44_i32 = arith.constant 44 : i32
    %573 = vector.broadcast %c44_i32 : i32 to vector<1x64xi32>
    %574 = arith.cmpi slt, %7, %573 : vector<1x64xi32>
    %575 = arith.andi %572, %574 : vector<1x64xi1>
    %576 = vector.shape_cast %560 : vector<1x1xf32> to vector<1x1xf32>
    %577 = vector.broadcast %576 : vector<1x1xf32> to vector<1x64xf32>
    %578 = arith.select %575, %577, %552 : vector<1x64xi1>, vector<1x64xf32>
    %579 = vector.shape_cast %570 : vector<1x1xf32> to vector<1x1xf32>
    %580 = vector.broadcast %579 : vector<1x1xf32> to vector<1x64xf32>
    %581 = arith.select %575, %580, %555 : vector<1x64xi1>, vector<1x64xf32>
    %582 = vector.extract_strided_slice %3 {offsets = [0, 44], sizes = [1, 2], strides = [1, 1]} : vector<1x64xf32> to vector<1x2xf32>
    %cst_136 = arith.constant dense<0.000000e+00> : vector<1xf32>
    %583 = vector.multi_reduction <add>, %582, %cst_136 [1] : vector<1x2xf32> to vector<1xf32>
    %584 = vector.shape_cast %583 : vector<1xf32> to vector<1x1xf32>
    %cst_137 = arith.constant 7.812500e-03 : f32
    %585 = vector.broadcast %cst_137 : f32 to vector<1x1xf32>
    %586 = arith.mulf %584, %585 : vector<1x1xf32>
    %587 = vector.extract_strided_slice %6 {offsets = [0, 44], sizes = [1, 2], strides = [1, 1]} : vector<1x64xf32> to vector<1x2xf32>
    %cst_138 = arith.constant dense<0.000000e+00> : vector<1xf32>
    %588 = vector.multi_reduction <add>, %587, %cst_138 [1] : vector<1x2xf32> to vector<1xf32>
    %589 = vector.shape_cast %588 : vector<1xf32> to vector<1x1xf32>
    %cst_139 = arith.constant 7.812500e-03 : f32
    %590 = vector.broadcast %cst_139 : f32 to vector<1x1xf32>
    %591 = arith.mulf %589, %590 : vector<1x1xf32>
    %592 = arith.mulf %586, %586 : vector<1x1xf32>
    %593 = arith.subf %591, %592 : vector<1x1xf32>
    %cst_140 = arith.constant 9.99999974E-6 : f32
    %594 = vector.broadcast %cst_140 : f32 to vector<1x1xf32>
    %595 = arith.addf %593, %594 : vector<1x1xf32>
    %596 = math.rsqrt %595 : vector<1x1xf32>
    %c44_i32_141 = arith.constant 44 : i32
    %597 = vector.broadcast %c44_i32_141 : i32 to vector<1x64xi32>
    %598 = arith.cmpi sge, %7, %597 : vector<1x64xi32>
    %c46_i32 = arith.constant 46 : i32
    %599 = vector.broadcast %c46_i32 : i32 to vector<1x64xi32>
    %600 = arith.cmpi slt, %7, %599 : vector<1x64xi32>
    %601 = arith.andi %598, %600 : vector<1x64xi1>
    %602 = vector.shape_cast %586 : vector<1x1xf32> to vector<1x1xf32>
    %603 = vector.broadcast %602 : vector<1x1xf32> to vector<1x64xf32>
    %604 = arith.select %601, %603, %578 : vector<1x64xi1>, vector<1x64xf32>
    %605 = vector.shape_cast %596 : vector<1x1xf32> to vector<1x1xf32>
    %606 = vector.broadcast %605 : vector<1x1xf32> to vector<1x64xf32>
    %607 = arith.select %601, %606, %581 : vector<1x64xi1>, vector<1x64xf32>
    %608 = vector.extract_strided_slice %3 {offsets = [0, 46], sizes = [1, 2], strides = [1, 1]} : vector<1x64xf32> to vector<1x2xf32>
    %cst_142 = arith.constant dense<0.000000e+00> : vector<1xf32>
    %609 = vector.multi_reduction <add>, %608, %cst_142 [1] : vector<1x2xf32> to vector<1xf32>
    %610 = vector.shape_cast %609 : vector<1xf32> to vector<1x1xf32>
    %cst_143 = arith.constant 7.812500e-03 : f32
    %611 = vector.broadcast %cst_143 : f32 to vector<1x1xf32>
    %612 = arith.mulf %610, %611 : vector<1x1xf32>
    %613 = vector.extract_strided_slice %6 {offsets = [0, 46], sizes = [1, 2], strides = [1, 1]} : vector<1x64xf32> to vector<1x2xf32>
    %cst_144 = arith.constant dense<0.000000e+00> : vector<1xf32>
    %614 = vector.multi_reduction <add>, %613, %cst_144 [1] : vector<1x2xf32> to vector<1xf32>
    %615 = vector.shape_cast %614 : vector<1xf32> to vector<1x1xf32>
    %cst_145 = arith.constant 7.812500e-03 : f32
    %616 = vector.broadcast %cst_145 : f32 to vector<1x1xf32>
    %617 = arith.mulf %615, %616 : vector<1x1xf32>
    %618 = arith.mulf %612, %612 : vector<1x1xf32>
    %619 = arith.subf %617, %618 : vector<1x1xf32>
    %cst_146 = arith.constant 9.99999974E-6 : f32
    %620 = vector.broadcast %cst_146 : f32 to vector<1x1xf32>
    %621 = arith.addf %619, %620 : vector<1x1xf32>
    %622 = math.rsqrt %621 : vector<1x1xf32>
    %c46_i32_147 = arith.constant 46 : i32
    %623 = vector.broadcast %c46_i32_147 : i32 to vector<1x64xi32>
    %624 = arith.cmpi sge, %7, %623 : vector<1x64xi32>
    %c48_i32 = arith.constant 48 : i32
    %625 = vector.broadcast %c48_i32 : i32 to vector<1x64xi32>
    %626 = arith.cmpi slt, %7, %625 : vector<1x64xi32>
    %627 = arith.andi %624, %626 : vector<1x64xi1>
    %628 = vector.shape_cast %612 : vector<1x1xf32> to vector<1x1xf32>
    %629 = vector.broadcast %628 : vector<1x1xf32> to vector<1x64xf32>
    %630 = arith.select %627, %629, %604 : vector<1x64xi1>, vector<1x64xf32>
    %631 = vector.shape_cast %622 : vector<1x1xf32> to vector<1x1xf32>
    %632 = vector.broadcast %631 : vector<1x1xf32> to vector<1x64xf32>
    %633 = arith.select %627, %632, %607 : vector<1x64xi1>, vector<1x64xf32>
    %634 = vector.extract_strided_slice %3 {offsets = [0, 48], sizes = [1, 2], strides = [1, 1]} : vector<1x64xf32> to vector<1x2xf32>
    %cst_148 = arith.constant dense<0.000000e+00> : vector<1xf32>
    %635 = vector.multi_reduction <add>, %634, %cst_148 [1] : vector<1x2xf32> to vector<1xf32>
    %636 = vector.shape_cast %635 : vector<1xf32> to vector<1x1xf32>
    %cst_149 = arith.constant 7.812500e-03 : f32
    %637 = vector.broadcast %cst_149 : f32 to vector<1x1xf32>
    %638 = arith.mulf %636, %637 : vector<1x1xf32>
    %639 = vector.extract_strided_slice %6 {offsets = [0, 48], sizes = [1, 2], strides = [1, 1]} : vector<1x64xf32> to vector<1x2xf32>
    %cst_150 = arith.constant dense<0.000000e+00> : vector<1xf32>
    %640 = vector.multi_reduction <add>, %639, %cst_150 [1] : vector<1x2xf32> to vector<1xf32>
    %641 = vector.shape_cast %640 : vector<1xf32> to vector<1x1xf32>
    %cst_151 = arith.constant 7.812500e-03 : f32
    %642 = vector.broadcast %cst_151 : f32 to vector<1x1xf32>
    %643 = arith.mulf %641, %642 : vector<1x1xf32>
    %644 = arith.mulf %638, %638 : vector<1x1xf32>
    %645 = arith.subf %643, %644 : vector<1x1xf32>
    %cst_152 = arith.constant 9.99999974E-6 : f32
    %646 = vector.broadcast %cst_152 : f32 to vector<1x1xf32>
    %647 = arith.addf %645, %646 : vector<1x1xf32>
    %648 = math.rsqrt %647 : vector<1x1xf32>
    %c48_i32_153 = arith.constant 48 : i32
    %649 = vector.broadcast %c48_i32_153 : i32 to vector<1x64xi32>
    %650 = arith.cmpi sge, %7, %649 : vector<1x64xi32>
    %c50_i32 = arith.constant 50 : i32
    %651 = vector.broadcast %c50_i32 : i32 to vector<1x64xi32>
    %652 = arith.cmpi slt, %7, %651 : vector<1x64xi32>
    %653 = arith.andi %650, %652 : vector<1x64xi1>
    %654 = vector.shape_cast %638 : vector<1x1xf32> to vector<1x1xf32>
    %655 = vector.broadcast %654 : vector<1x1xf32> to vector<1x64xf32>
    %656 = arith.select %653, %655, %630 : vector<1x64xi1>, vector<1x64xf32>
    %657 = vector.shape_cast %648 : vector<1x1xf32> to vector<1x1xf32>
    %658 = vector.broadcast %657 : vector<1x1xf32> to vector<1x64xf32>
    %659 = arith.select %653, %658, %633 : vector<1x64xi1>, vector<1x64xf32>
    %660 = vector.extract_strided_slice %3 {offsets = [0, 50], sizes = [1, 2], strides = [1, 1]} : vector<1x64xf32> to vector<1x2xf32>
    %cst_154 = arith.constant dense<0.000000e+00> : vector<1xf32>
    %661 = vector.multi_reduction <add>, %660, %cst_154 [1] : vector<1x2xf32> to vector<1xf32>
    %662 = vector.shape_cast %661 : vector<1xf32> to vector<1x1xf32>
    %cst_155 = arith.constant 7.812500e-03 : f32
    %663 = vector.broadcast %cst_155 : f32 to vector<1x1xf32>
    %664 = arith.mulf %662, %663 : vector<1x1xf32>
    %665 = vector.extract_strided_slice %6 {offsets = [0, 50], sizes = [1, 2], strides = [1, 1]} : vector<1x64xf32> to vector<1x2xf32>
    %cst_156 = arith.constant dense<0.000000e+00> : vector<1xf32>
    %666 = vector.multi_reduction <add>, %665, %cst_156 [1] : vector<1x2xf32> to vector<1xf32>
    %667 = vector.shape_cast %666 : vector<1xf32> to vector<1x1xf32>
    %cst_157 = arith.constant 7.812500e-03 : f32
    %668 = vector.broadcast %cst_157 : f32 to vector<1x1xf32>
    %669 = arith.mulf %667, %668 : vector<1x1xf32>
    %670 = arith.mulf %664, %664 : vector<1x1xf32>
    %671 = arith.subf %669, %670 : vector<1x1xf32>
    %cst_158 = arith.constant 9.99999974E-6 : f32
    %672 = vector.broadcast %cst_158 : f32 to vector<1x1xf32>
    %673 = arith.addf %671, %672 : vector<1x1xf32>
    %674 = math.rsqrt %673 : vector<1x1xf32>
    %c50_i32_159 = arith.constant 50 : i32
    %675 = vector.broadcast %c50_i32_159 : i32 to vector<1x64xi32>
    %676 = arith.cmpi sge, %7, %675 : vector<1x64xi32>
    %c52_i32 = arith.constant 52 : i32
    %677 = vector.broadcast %c52_i32 : i32 to vector<1x64xi32>
    %678 = arith.cmpi slt, %7, %677 : vector<1x64xi32>
    %679 = arith.andi %676, %678 : vector<1x64xi1>
    %680 = vector.shape_cast %664 : vector<1x1xf32> to vector<1x1xf32>
    %681 = vector.broadcast %680 : vector<1x1xf32> to vector<1x64xf32>
    %682 = arith.select %679, %681, %656 : vector<1x64xi1>, vector<1x64xf32>
    %683 = vector.shape_cast %674 : vector<1x1xf32> to vector<1x1xf32>
    %684 = vector.broadcast %683 : vector<1x1xf32> to vector<1x64xf32>
    %685 = arith.select %679, %684, %659 : vector<1x64xi1>, vector<1x64xf32>
    %686 = vector.extract_strided_slice %3 {offsets = [0, 52], sizes = [1, 2], strides = [1, 1]} : vector<1x64xf32> to vector<1x2xf32>
    %cst_160 = arith.constant dense<0.000000e+00> : vector<1xf32>
    %687 = vector.multi_reduction <add>, %686, %cst_160 [1] : vector<1x2xf32> to vector<1xf32>
    %688 = vector.shape_cast %687 : vector<1xf32> to vector<1x1xf32>
    %cst_161 = arith.constant 7.812500e-03 : f32
    %689 = vector.broadcast %cst_161 : f32 to vector<1x1xf32>
    %690 = arith.mulf %688, %689 : vector<1x1xf32>
    %691 = vector.extract_strided_slice %6 {offsets = [0, 52], sizes = [1, 2], strides = [1, 1]} : vector<1x64xf32> to vector<1x2xf32>
    %cst_162 = arith.constant dense<0.000000e+00> : vector<1xf32>
    %692 = vector.multi_reduction <add>, %691, %cst_162 [1] : vector<1x2xf32> to vector<1xf32>
    %693 = vector.shape_cast %692 : vector<1xf32> to vector<1x1xf32>
    %cst_163 = arith.constant 7.812500e-03 : f32
    %694 = vector.broadcast %cst_163 : f32 to vector<1x1xf32>
    %695 = arith.mulf %693, %694 : vector<1x1xf32>
    %696 = arith.mulf %690, %690 : vector<1x1xf32>
    %697 = arith.subf %695, %696 : vector<1x1xf32>
    %cst_164 = arith.constant 9.99999974E-6 : f32
    %698 = vector.broadcast %cst_164 : f32 to vector<1x1xf32>
    %699 = arith.addf %697, %698 : vector<1x1xf32>
    %700 = math.rsqrt %699 : vector<1x1xf32>
    %c52_i32_165 = arith.constant 52 : i32
    %701 = vector.broadcast %c52_i32_165 : i32 to vector<1x64xi32>
    %702 = arith.cmpi sge, %7, %701 : vector<1x64xi32>
    %c54_i32 = arith.constant 54 : i32
    %703 = vector.broadcast %c54_i32 : i32 to vector<1x64xi32>
    %704 = arith.cmpi slt, %7, %703 : vector<1x64xi32>
    %705 = arith.andi %702, %704 : vector<1x64xi1>
    %706 = vector.shape_cast %690 : vector<1x1xf32> to vector<1x1xf32>
    %707 = vector.broadcast %706 : vector<1x1xf32> to vector<1x64xf32>
    %708 = arith.select %705, %707, %682 : vector<1x64xi1>, vector<1x64xf32>
    %709 = vector.shape_cast %700 : vector<1x1xf32> to vector<1x1xf32>
    %710 = vector.broadcast %709 : vector<1x1xf32> to vector<1x64xf32>
    %711 = arith.select %705, %710, %685 : vector<1x64xi1>, vector<1x64xf32>
    %712 = vector.extract_strided_slice %3 {offsets = [0, 54], sizes = [1, 2], strides = [1, 1]} : vector<1x64xf32> to vector<1x2xf32>
    %cst_166 = arith.constant dense<0.000000e+00> : vector<1xf32>
    %713 = vector.multi_reduction <add>, %712, %cst_166 [1] : vector<1x2xf32> to vector<1xf32>
    %714 = vector.shape_cast %713 : vector<1xf32> to vector<1x1xf32>
    %cst_167 = arith.constant 7.812500e-03 : f32
    %715 = vector.broadcast %cst_167 : f32 to vector<1x1xf32>
    %716 = arith.mulf %714, %715 : vector<1x1xf32>
    %717 = vector.extract_strided_slice %6 {offsets = [0, 54], sizes = [1, 2], strides = [1, 1]} : vector<1x64xf32> to vector<1x2xf32>
    %cst_168 = arith.constant dense<0.000000e+00> : vector<1xf32>
    %718 = vector.multi_reduction <add>, %717, %cst_168 [1] : vector<1x2xf32> to vector<1xf32>
    %719 = vector.shape_cast %718 : vector<1xf32> to vector<1x1xf32>
    %cst_169 = arith.constant 7.812500e-03 : f32
    %720 = vector.broadcast %cst_169 : f32 to vector<1x1xf32>
    %721 = arith.mulf %719, %720 : vector<1x1xf32>
    %722 = arith.mulf %716, %716 : vector<1x1xf32>
    %723 = arith.subf %721, %722 : vector<1x1xf32>
    %cst_170 = arith.constant 9.99999974E-6 : f32
    %724 = vector.broadcast %cst_170 : f32 to vector<1x1xf32>
    %725 = arith.addf %723, %724 : vector<1x1xf32>
    %726 = math.rsqrt %725 : vector<1x1xf32>
    %c54_i32_171 = arith.constant 54 : i32
    %727 = vector.broadcast %c54_i32_171 : i32 to vector<1x64xi32>
    %728 = arith.cmpi sge, %7, %727 : vector<1x64xi32>
    %c56_i32 = arith.constant 56 : i32
    %729 = vector.broadcast %c56_i32 : i32 to vector<1x64xi32>
    %730 = arith.cmpi slt, %7, %729 : vector<1x64xi32>
    %731 = arith.andi %728, %730 : vector<1x64xi1>
    %732 = vector.shape_cast %716 : vector<1x1xf32> to vector<1x1xf32>
    %733 = vector.broadcast %732 : vector<1x1xf32> to vector<1x64xf32>
    %734 = arith.select %731, %733, %708 : vector<1x64xi1>, vector<1x64xf32>
    %735 = vector.shape_cast %726 : vector<1x1xf32> to vector<1x1xf32>
    %736 = vector.broadcast %735 : vector<1x1xf32> to vector<1x64xf32>
    %737 = arith.select %731, %736, %711 : vector<1x64xi1>, vector<1x64xf32>
    %738 = vector.extract_strided_slice %3 {offsets = [0, 56], sizes = [1, 2], strides = [1, 1]} : vector<1x64xf32> to vector<1x2xf32>
    %cst_172 = arith.constant dense<0.000000e+00> : vector<1xf32>
    %739 = vector.multi_reduction <add>, %738, %cst_172 [1] : vector<1x2xf32> to vector<1xf32>
    %740 = vector.shape_cast %739 : vector<1xf32> to vector<1x1xf32>
    %cst_173 = arith.constant 7.812500e-03 : f32
    %741 = vector.broadcast %cst_173 : f32 to vector<1x1xf32>
    %742 = arith.mulf %740, %741 : vector<1x1xf32>
    %743 = vector.extract_strided_slice %6 {offsets = [0, 56], sizes = [1, 2], strides = [1, 1]} : vector<1x64xf32> to vector<1x2xf32>
    %cst_174 = arith.constant dense<0.000000e+00> : vector<1xf32>
    %744 = vector.multi_reduction <add>, %743, %cst_174 [1] : vector<1x2xf32> to vector<1xf32>
    %745 = vector.shape_cast %744 : vector<1xf32> to vector<1x1xf32>
    %cst_175 = arith.constant 7.812500e-03 : f32
    %746 = vector.broadcast %cst_175 : f32 to vector<1x1xf32>
    %747 = arith.mulf %745, %746 : vector<1x1xf32>
    %748 = arith.mulf %742, %742 : vector<1x1xf32>
    %749 = arith.subf %747, %748 : vector<1x1xf32>
    %cst_176 = arith.constant 9.99999974E-6 : f32
    %750 = vector.broadcast %cst_176 : f32 to vector<1x1xf32>
    %751 = arith.addf %749, %750 : vector<1x1xf32>
    %752 = math.rsqrt %751 : vector<1x1xf32>
    %c56_i32_177 = arith.constant 56 : i32
    %753 = vector.broadcast %c56_i32_177 : i32 to vector<1x64xi32>
    %754 = arith.cmpi sge, %7, %753 : vector<1x64xi32>
    %c58_i32 = arith.constant 58 : i32
    %755 = vector.broadcast %c58_i32 : i32 to vector<1x64xi32>
    %756 = arith.cmpi slt, %7, %755 : vector<1x64xi32>
    %757 = arith.andi %754, %756 : vector<1x64xi1>
    %758 = vector.shape_cast %742 : vector<1x1xf32> to vector<1x1xf32>
    %759 = vector.broadcast %758 : vector<1x1xf32> to vector<1x64xf32>
    %760 = arith.select %757, %759, %734 : vector<1x64xi1>, vector<1x64xf32>
    %761 = vector.shape_cast %752 : vector<1x1xf32> to vector<1x1xf32>
    %762 = vector.broadcast %761 : vector<1x1xf32> to vector<1x64xf32>
    %763 = arith.select %757, %762, %737 : vector<1x64xi1>, vector<1x64xf32>
    %764 = vector.extract_strided_slice %3 {offsets = [0, 58], sizes = [1, 2], strides = [1, 1]} : vector<1x64xf32> to vector<1x2xf32>
    %cst_178 = arith.constant dense<0.000000e+00> : vector<1xf32>
    %765 = vector.multi_reduction <add>, %764, %cst_178 [1] : vector<1x2xf32> to vector<1xf32>
    %766 = vector.shape_cast %765 : vector<1xf32> to vector<1x1xf32>
    %cst_179 = arith.constant 7.812500e-03 : f32
    %767 = vector.broadcast %cst_179 : f32 to vector<1x1xf32>
    %768 = arith.mulf %766, %767 : vector<1x1xf32>
    %769 = vector.extract_strided_slice %6 {offsets = [0, 58], sizes = [1, 2], strides = [1, 1]} : vector<1x64xf32> to vector<1x2xf32>
    %cst_180 = arith.constant dense<0.000000e+00> : vector<1xf32>
    %770 = vector.multi_reduction <add>, %769, %cst_180 [1] : vector<1x2xf32> to vector<1xf32>
    %771 = vector.shape_cast %770 : vector<1xf32> to vector<1x1xf32>
    %cst_181 = arith.constant 7.812500e-03 : f32
    %772 = vector.broadcast %cst_181 : f32 to vector<1x1xf32>
    %773 = arith.mulf %771, %772 : vector<1x1xf32>
    %774 = arith.mulf %768, %768 : vector<1x1xf32>
    %775 = arith.subf %773, %774 : vector<1x1xf32>
    %cst_182 = arith.constant 9.99999974E-6 : f32
    %776 = vector.broadcast %cst_182 : f32 to vector<1x1xf32>
    %777 = arith.addf %775, %776 : vector<1x1xf32>
    %778 = math.rsqrt %777 : vector<1x1xf32>
    %c58_i32_183 = arith.constant 58 : i32
    %779 = vector.broadcast %c58_i32_183 : i32 to vector<1x64xi32>
    %780 = arith.cmpi sge, %7, %779 : vector<1x64xi32>
    %c60_i32 = arith.constant 60 : i32
    %781 = vector.broadcast %c60_i32 : i32 to vector<1x64xi32>
    %782 = arith.cmpi slt, %7, %781 : vector<1x64xi32>
    %783 = arith.andi %780, %782 : vector<1x64xi1>
    %784 = vector.shape_cast %768 : vector<1x1xf32> to vector<1x1xf32>
    %785 = vector.broadcast %784 : vector<1x1xf32> to vector<1x64xf32>
    %786 = arith.select %783, %785, %760 : vector<1x64xi1>, vector<1x64xf32>
    %787 = vector.shape_cast %778 : vector<1x1xf32> to vector<1x1xf32>
    %788 = vector.broadcast %787 : vector<1x1xf32> to vector<1x64xf32>
    %789 = arith.select %783, %788, %763 : vector<1x64xi1>, vector<1x64xf32>
    %790 = vector.extract_strided_slice %3 {offsets = [0, 60], sizes = [1, 2], strides = [1, 1]} : vector<1x64xf32> to vector<1x2xf32>
    %cst_184 = arith.constant dense<0.000000e+00> : vector<1xf32>
    %791 = vector.multi_reduction <add>, %790, %cst_184 [1] : vector<1x2xf32> to vector<1xf32>
    %792 = vector.shape_cast %791 : vector<1xf32> to vector<1x1xf32>
    %cst_185 = arith.constant 7.812500e-03 : f32
    %793 = vector.broadcast %cst_185 : f32 to vector<1x1xf32>
    %794 = arith.mulf %792, %793 : vector<1x1xf32>
    %795 = vector.extract_strided_slice %6 {offsets = [0, 60], sizes = [1, 2], strides = [1, 1]} : vector<1x64xf32> to vector<1x2xf32>
    %cst_186 = arith.constant dense<0.000000e+00> : vector<1xf32>
    %796 = vector.multi_reduction <add>, %795, %cst_186 [1] : vector<1x2xf32> to vector<1xf32>
    %797 = vector.shape_cast %796 : vector<1xf32> to vector<1x1xf32>
    %cst_187 = arith.constant 7.812500e-03 : f32
    %798 = vector.broadcast %cst_187 : f32 to vector<1x1xf32>
    %799 = arith.mulf %797, %798 : vector<1x1xf32>
    %800 = arith.mulf %794, %794 : vector<1x1xf32>
    %801 = arith.subf %799, %800 : vector<1x1xf32>
    %cst_188 = arith.constant 9.99999974E-6 : f32
    %802 = vector.broadcast %cst_188 : f32 to vector<1x1xf32>
    %803 = arith.addf %801, %802 : vector<1x1xf32>
    %804 = math.rsqrt %803 : vector<1x1xf32>
    %c60_i32_189 = arith.constant 60 : i32
    %805 = vector.broadcast %c60_i32_189 : i32 to vector<1x64xi32>
    %806 = arith.cmpi sge, %7, %805 : vector<1x64xi32>
    %c62_i32 = arith.constant 62 : i32
    %807 = vector.broadcast %c62_i32 : i32 to vector<1x64xi32>
    %808 = arith.cmpi slt, %7, %807 : vector<1x64xi32>
    %809 = arith.andi %806, %808 : vector<1x64xi1>
    %810 = vector.shape_cast %794 : vector<1x1xf32> to vector<1x1xf32>
    %811 = vector.broadcast %810 : vector<1x1xf32> to vector<1x64xf32>
    %812 = arith.select %809, %811, %786 : vector<1x64xi1>, vector<1x64xf32>
    %813 = vector.shape_cast %804 : vector<1x1xf32> to vector<1x1xf32>
    %814 = vector.broadcast %813 : vector<1x1xf32> to vector<1x64xf32>
    %815 = arith.select %809, %814, %789 : vector<1x64xi1>, vector<1x64xf32>
    %816 = vector.extract_strided_slice %3 {offsets = [0, 62], sizes = [1, 2], strides = [1, 1]} : vector<1x64xf32> to vector<1x2xf32>
    %cst_190 = arith.constant dense<0.000000e+00> : vector<1xf32>
    %817 = vector.multi_reduction <add>, %816, %cst_190 [1] : vector<1x2xf32> to vector<1xf32>
    %818 = vector.shape_cast %817 : vector<1xf32> to vector<1x1xf32>
    %cst_191 = arith.constant 7.812500e-03 : f32
    %819 = vector.broadcast %cst_191 : f32 to vector<1x1xf32>
    %820 = arith.mulf %818, %819 : vector<1x1xf32>
    %821 = vector.extract_strided_slice %6 {offsets = [0, 62], sizes = [1, 2], strides = [1, 1]} : vector<1x64xf32> to vector<1x2xf32>
    %cst_192 = arith.constant dense<0.000000e+00> : vector<1xf32>
    %822 = vector.multi_reduction <add>, %821, %cst_192 [1] : vector<1x2xf32> to vector<1xf32>
    %823 = vector.shape_cast %822 : vector<1xf32> to vector<1x1xf32>
    %cst_193 = arith.constant 7.812500e-03 : f32
    %824 = vector.broadcast %cst_193 : f32 to vector<1x1xf32>
    %825 = arith.mulf %823, %824 : vector<1x1xf32>
    %826 = arith.mulf %820, %820 : vector<1x1xf32>
    %827 = arith.subf %825, %826 : vector<1x1xf32>
    %cst_194 = arith.constant 9.99999974E-6 : f32
    %828 = vector.broadcast %cst_194 : f32 to vector<1x1xf32>
    %829 = arith.addf %827, %828 : vector<1x1xf32>
    %830 = math.rsqrt %829 : vector<1x1xf32>
    %c62_i32_195 = arith.constant 62 : i32
    %831 = vector.broadcast %c62_i32_195 : i32 to vector<1x64xi32>
    %832 = arith.cmpi sge, %7, %831 : vector<1x64xi32>
    %c64_i32 = arith.constant 64 : i32
    %833 = vector.broadcast %c64_i32 : i32 to vector<1x64xi32>
    %834 = arith.cmpi slt, %7, %833 : vector<1x64xi32>
    %835 = arith.andi %832, %834 : vector<1x64xi1>
    %836 = vector.shape_cast %820 : vector<1x1xf32> to vector<1x1xf32>
    %837 = vector.broadcast %836 : vector<1x1xf32> to vector<1x64xf32>
    %838 = arith.select %835, %837, %812 : vector<1x64xi1>, vector<1x64xf32>
    %839 = vector.shape_cast %830 : vector<1x1xf32> to vector<1x1xf32>
    %840 = vector.broadcast %839 : vector<1x1xf32> to vector<1x64xf32>
    %841 = arith.select %835, %840, %815 : vector<1x64xi1>, vector<1x64xf32>
    %842 = vector.broadcast %838 : vector<1x64xf32> to vector<64x64xf32>
    %843 = arith.subf %1, %842 : vector<64x64xf32>
    %c0_196 = arith.constant 0 : index
    %c0_197 = arith.constant 0 : index
    %844 = vector.load %arg2[%c0_196, %c0_197] : memref<1x64xf32, #tpu.memory_space<vmem>>, vector<1x64xf32>
    %845 = arith.mulf %841, %844 : vector<1x64xf32>
    %846 = vector.broadcast %845 : vector<1x64xf32> to vector<64x64xf32>
    %847 = arith.mulf %843, %846 : vector<64x64xf32>
    %c0_198 = arith.constant 0 : index
    %c0_199 = arith.constant 0 : index
    %848 = vector.load %arg3[%c0_198, %c0_199] : memref<1x64xf32, #tpu.memory_space<vmem>>, vector<1x64xf32>
    %849 = vector.broadcast %848 : vector<1x64xf32> to vector<64x64xf32>
    %850 = arith.addf %847, %849 : vector<64x64xf32>
    %851 = arith.truncf %850 : vector<64x64xf32> to vector<64x64xbf16>
    %c0_200 = arith.constant 0 : index
    %c0_201 = arith.constant 0 : index
    %852 = vector.load %arg4[%c0_200, %c0_201] : memref<64x192xbf16, #tpu.memory_space<vmem>>, vector<64x192xbf16>
    %cst_202 = arith.constant dense<0.000000e+00> : vector<64x192xf32>
    %853 = tpu.matmul %851, %852, %cst_202 {dimension_numbers = #tpu.dot_dimension_numbers<[1], [0], [0], [1], [0, 0, 1, 1], [], []>} : vector<64x64xbf16>, vector<64x192xbf16>, vector<64x192xf32> -> vector<64x192xf32>
    %c0_203 = arith.constant 0 : index
    %c0_204 = arith.constant 0 : index
    %854 = vector.load %arg5[%c0_203, %c0_204] : memref<1x192xf32, #tpu.memory_space<vmem>>, vector<1x192xf32>
    %855 = vector.broadcast %854 : vector<1x192xf32> to vector<64x192xf32>
    %856 = arith.addf %853, %855 : vector<64x192xf32>
    %857 = vector.extract_strided_slice %856 {offsets = [0, 0], sizes = [64, 64], strides = [1, 1]} : vector<64x192xf32> to vector<64x64xf32>
    %858 = arith.truncf %857 : vector<64x64xf32> to vector<64x64xbf16>
    %c0_205 = arith.constant 0 : index
    %c0_206 = arith.constant 0 : index
    %c0_207 = arith.constant 0 : index
    %859 = vector.load %arg6[%c0_205, %c0_206, %c0_207] : memref<1x64x64xbf16, #tpu.memory_space<vmem>>, vector<1x64x64xbf16>
    %860 = vector.shape_cast %859 : vector<1x64x64xbf16> to vector<64x64xbf16>
    %861 = vector.shape_cast %858 : vector<64x64xbf16> to vector<1x64x64xbf16>
    tpu.vector_store %arg6[%c0_205, %c0_206, %c0_207], %861 {strides = array<i32>} : memref<1x64x64xbf16, #tpu.memory_space<vmem>>, vector<1x64x64xbf16>,
    %862 = vector.extract_strided_slice %856 {offsets = [0, 64], sizes = [64, 64], strides = [1, 1]} : vector<64x192xf32> to vector<64x64xf32>
    %863 = arith.truncf %862 : vector<64x64xf32> to vector<64x64xbf16>
    %c0_208 = arith.constant 0 : index
    %c0_209 = arith.constant 0 : index
    %c0_210 = arith.constant 0 : index
    %864 = vector.load %arg7[%c0_208, %c0_209, %c0_210] : memref<1x64x64xbf16, #tpu.memory_space<vmem>>, vector<1x64x64xbf16>
    %865 = vector.shape_cast %864 : vector<1x64x64xbf16> to vector<64x64xbf16>
    %866 = vector.shape_cast %863 : vector<64x64xbf16> to vector<1x64x64xbf16>
    tpu.vector_store %arg7[%c0_208, %c0_209, %c0_210], %866 {strides = array<i32>} : memref<1x64x64xbf16, #tpu.memory_space<vmem>>, vector<1x64x64xbf16>,
    %867 = vector.extract_strided_slice %856 {offsets = [0, 128], sizes = [64, 64], strides = [1, 1]} : vector<64x192xf32> to vector<64x64xf32>
    %868 = arith.truncf %867 : vector<64x64xf32> to vector<64x64xbf16>
    %c0_211 = arith.constant 0 : index
    %c0_212 = arith.constant 0 : index
    %c0_213 = arith.constant 0 : index
    %869 = vector.load %arg8[%c0_211, %c0_212, %c0_213] : memref<1x64x64xbf16, #tpu.memory_space<vmem>>, vector<1x64x64xbf16>
    %870 = vector.shape_cast %869 : vector<1x64x64xbf16> to vector<64x64xbf16>
    %871 = vector.shape_cast %868 : vector<64x64xbf16> to vector<1x64x64xbf16>
    tpu.vector_store %arg8[%c0_211, %c0_212, %c0_213], %871 {strides = array<i32>} : memref<1x64x64xbf16, #tpu.memory_space<vmem>>, vector<1x64x64xbf16>,
    return
  }
  func.func @transform_0(%arg0: i32) -> (i32, i32, i32) {
    %c0_i32 = arith.constant 0 : i32
    %c0_i32_0 = arith.constant 0 : i32
    %c0_i32_1 = arith.constant 0 : i32
    return %arg0, %c0_i32, %c0_i32_0 : i32, i32, i32
  }
  func.func @transform_1(%arg0: i32) -> (i32, i32) {
    %c0_i32 = arith.constant 0 : i32
    %c0_i32_0 = arith.constant 0 : i32
    %c0_i32_1 = arith.constant 0 : i32
    return %c0_i32, %c0_i32_0 : i32, i32
  }
  func.func @transform_2(%arg0: i32) -> (i32, i32) {
    %c0_i32 = arith.constant 0 : i32
    %c0_i32_0 = arith.constant 0 : i32
    %c0_i32_1 = arith.constant 0 : i32
    return %c0_i32, %c0_i32_0 : i32, i32
  }
  func.func @transform_3(%arg0: i32) -> (i32, i32) {
    %c0_i32 = arith.constant 0 : i32
    %c0_i32_0 = arith.constant 0 : i32
    %c0_i32_1 = arith.constant 0 : i32
    return %c0_i32, %c0_i32_0 : i32, i32
  }
  func.func @transform_4(%arg0: i32) -> (i32, i32) {
    %c0_i32 = arith.constant 0 : i32
    %c0_i32_0 = arith.constant 0 : i32
    %c0_i32_1 = arith.constant 0 : i32
    return %c0_i32, %c0_i32_0 : i32, i32
  }
  func.func @transform_5(%arg0: i32) -> (i32, i32, i32) {
    %c0_i32 = arith.constant 0 : i32
    %c0_i32_0 = arith.constant 0 : i32
    %c0_i32_1 = arith.constant 0 : i32
    return %arg0, %c0_i32, %c0_i32_0 : i32, i32, i32
  }
  func.func @transform_6(%arg0: i32) -> (i32, i32, i32) {
    %c0_i32 = arith.constant 0 : i32
    %c0_i32_0 = arith.constant 0 : i32
    %c0_i32_1 = arith.constant 0 : i32
    return %arg0, %c0_i32, %c0_i32_0 : i32, i32, i32
  }
  func.func @transform_7(%arg0: i32) -> (i32, i32, i32) {
    %c0_i32 = arith.constant 0 : i32
    %c0_i32_0 = arith.constant 0 : i32
    %c0_i32_1 = arith.constant 0 : i32
    return %arg0, %c0_i32, %c0_i32_0 : i32, i32, i32
  }
}

</mosaic_0001>

<llo_original>
// kernel: tpu_custom_call.1
$region0: #{tpu_custom_call.1}
  #allocation0 [shape = 'u32[]', space=smem, size = 0x4, offset = 0x4, fixed_abs, tag = 'smem constant byte address 0x4 - core index']
  #allocation1 [shape = 'u32[72,128]{1,0:T(1,128)}', space=vmem, size = 0x9000, scoped, tag = 'internal scratch']
  %s0 = inlined_call_operand.hbm [shape: f32[2,64,64], index: 0, kind: input, shape index: {}]
  %s1 = inlined_call_operand.hbm [shape: f32[1,64], index: 1, kind: input, shape index: {}]
  %s2 = inlined_call_operand.vmem [shape: f32[1,64], index: 2, kind: input, shape index: {}]
  %s3 = inlined_call_operand.hbm [shape: bf16[64,192], index: 3, kind: input, shape index: {}]
  %s4 = inlined_call_operand.vmem [shape: f32[1,192], index: 4, kind: input, shape index: {}]
  %s5 = inlined_call_operand.hbm [shape: bf16[2,64,64], index: 5, kind: output, shape index: {0}]
  %s6 = inlined_call_operand.hbm [shape: bf16[2,64,64], index: 6, kind: output, shape index: {1}]
  %s7 = inlined_call_operand.hbm [shape: bf16[2,64,64], index: 7, kind: output, shape index: {2}]
  %8 = xla_tuple %s5, %s6, %s7
  %s9 = sld [smem:[#allocation0]]
  $region81: #{tpu_custom_call.1} parent=0
    _
  %s11 = ssub.s32 1, %s9
  %s12 = scalar_select 0, %s11, %s9
  $region1: #{tpu_custom_call.1} parent=0
    #allocation2 [shape = 'u8[65536]{0}', space=vmem, size = 0x10000, scoped, tag = 'input window, operand 0']
    #allocation3 [shape = 's32[2]{0}', space=sflag, size = 0x8, scoped, tag = 'scoped memory for tpu_custom_call.1']
    #allocation4 [shape = 's32[2]{0}', space=sflag, size = 0x8, scoped, tag = 'scoped memory for tpu_custom_call.1']
    #allocation5 [shape = 'u8[512]{0}', space=vmem, size = 0x400, scoped, tag = 'input window, operand 1, single buffered']
    #allocation6 [shape = 's32[1]{0}', space=sflag, size = 0x4, scoped, tag = 'scoped memory for tpu_custom_call.1']
    #allocation7 [shape = 'u8[32768]{0}', space=vmem, size = 0x8000, scoped, tag = 'input window, operand 3, single buffered']
    #allocation8 [shape = 'u8[32768]{0}', space=vmem, size = 0x8000, scoped, tag = 'output window, operand 0']
    #allocation9 [shape = 'u8[32768]{0}', space=vmem, size = 0x8000, scoped, tag = 'output window, operand 1']
    #allocation10 [shape = 's32[2]{0}', space=sflag, size = 0x8, scoped, tag = 'scoped memory for tpu_custom_call.1']
    #allocation11 [shape = 'u8[32768]{0}', space=vmem, size = 0x8000, scoped, tag = 'output window, operand 2']
    %13 = vsyncpa [#allocation3], 0
    %s14 = scalar_lea.sflag [#allocation3], 1
    %15 = vsyncpa %s14, 0
    %16 = vsyncpa [#allocation6], 0
    %17 = vsyncpa [#allocation4], 0
    %s18 = scalar_lea.sflag [#allocation4], 1
    %19 = vsyncpa %s18, 0
    %20 = vsyncpa [#allocation10], 0
    %s21 = scalar_lea.sflag [#allocation10], 1
    %22 = vsyncpa %s21, 0
    loop: start=0, step=1, limit=4
    $region2: #{tpu_custom_call.1} parent=1 // loop_pre_header
      _
    $region3: #{tpu_custom_call.1} parent=1 // loop_header
      %s24 = sphi 0, %s28
      %p25 = scmp.ge.s32.totalorder %s24, 4
      %s34 = sphi 0, %s36
      %s37 = sphi 0, %s34
      %s38 = sphi 0, %s37
      %s54 = sphi 0, %s38
      %s58 = sphi 0, %s58
      %s60 = sphi 0, %s58
      %s61 = sphi 0, %s60
      %s75 = sphi 0, %s61
      %s79 = sphi 0, %s79
      %s81 = sphi 0, %s79
      %s82 = sphi 0, %s81
      %s96 = sphi 0, %s82
      %s100 = sphi 0, %s100
      %s102 = sphi 0, %s100
      %s103 = sphi 0, %s102
      %s117 = sphi 0, %s103
      %s121 = sphi 0, %s121
      %s123 = sphi 0, %s121
      %s124 = sphi 0, %s123
      %s138 = sphi 0, %s124
      %s144 = sphi 0, %s146
      %s147 = sphi 0, %s144
      %s148 = sphi 0, %s147
      %s164 = sphi 0, %s148
      %s170 = sphi 0, %s172
      %s173 = sphi 0, %s170
      %s174 = sphi 0, %s173
      %s190 = sphi 0, %s174
      %s196 = sphi 0, %s198
      %s199 = sphi 0, %s196
      %s200 = sphi 0, %s199
      %s216 = sphi 0, %s200
    $region4: #{tpu_custom_call.1} parent=1 // loop_header_branch
      %27 = sbr.rel (%p25) target = $region8
    $region5: #{tpu_custom_call.1} parent=1 // loop_body
      %s29 = ssub.s32 %s24, 1
      %s30 = ssub.s32 %s24, 2
      %s31 = sadd.s32 %s24, 1
      %s32 = ssub.s32 %s24, %s31
      %p33 = scmp.eq.s32.totalorder %s32, 0
      %s35 = sadd.s32 %s34, 1
      %s36 = scalar_select %p33, %s34, %s35
      %p39 = pneg %p33
      %p40 = scmp.eq.s32.totalorder %s24, 1
      %p41 = por %p39, %p40
      %p42 = scmp.ne.s32.totalorder %s34, %s37
      %p43 = scmp.eq.s32.totalorder %s24, 0
      %p44 = por %p42, %p43
      %p45 = scmp.ne.s32.totalorder %s34, %s37
      %p46 = scmp.eq.s32.totalorder %s29, 1
      %p47 = por %p45, %p46
      %p48 = scmp.ne.s32.totalorder %s37, %s38
      %p49 = scmp.eq.s32.totalorder %s29, 0
      %p50 = por %p48, %p49
      %p51 = scmp.ne.s32.totalorder %s37, %s38
      %p52 = scmp.eq.s32.totalorder %s30, 1
      %p53 = por %p51, %p52
      %p55 = scmp.ne.s32.totalorder %s38, %s54
      %p56 = scmp.eq.s32.totalorder %s30, 0
      %p57 = por %p55, %p56
      %s59 = sadd.s32 %s58, 1
      %p62 = scmp.eq.s32.totalorder %s24, 1
      %p63 = scmp.ne.s32.totalorder %s58, %s60
      %p64 = scmp.eq.s32.totalorder %s24, 0
      %p65 = por %p63, %p64
      %p66 = scmp.ne.s32.totalorder %s58, %s60
      %p67 = scmp.eq.s32.totalorder %s29, 1
      %p68 = por %p66, %p67
      %p69 = scmp.ne.s32.totalorder %s60, %s61
      %p70 = scmp.eq.s32.totalorder %s29, 0
      %p71 = por %p69, %p70
      %p72 = scmp.ne.s32.totalorder %s60, %s61
      %p73 = scmp.eq.s32.totalorder %s30, 1
      %p74 = por %p72, %p73
      %p76 = scmp.ne.s32.totalorder %s61, %s75
      %p77 = scmp.eq.s32.totalorder %s30, 0
      %p78 = por %p76, %p77
      %s80 = sadd.s32 %s79, 1
      %p83 = scmp.eq.s32.totalorder %s24, 1
      %p84 = scmp.ne.s32.totalorder %s79, %s81
      %p85 = scmp.eq.s32.totalorder %s24, 0
      %p86 = por %p84, %p85
      %p87 = scmp.ne.s32.totalorder %s79, %s81
      %p88 = scmp.eq.s32.totalorder %s29, 1
      %p89 = por %p87, %p88
      %p90 = scmp.ne.s32.totalorder %s81, %s82
      %p91 = scmp.eq.s32.totalorder %s29, 0
      %p92 = por %p90, %p91
      %p93 = scmp.ne.s32.totalorder %s81, %s82
      %p94 = scmp.eq.s32.totalorder %s30, 1
      %p95 = por %p93, %p94
      %p97 = scmp.ne.s32.totalorder %s82, %s96
      %p98 = scmp.eq.s32.totalorder %s30, 0
      %p99 = por %p97, %p98
      %s101 = sadd.s32 %s100, 1
      %p104 = scmp.eq.s32.totalorder %s24, 1
      %p105 = scmp.ne.s32.totalorder %s100, %s102
      %p106 = scmp.eq.s32.totalorder %s24, 0
      %p107 = por %p105, %p106
      %p108 = scmp.ne.s32.totalorder %s100, %s102
      %p109 = scmp.eq.s32.totalorder %s29, 1
      %p110 = por %p108, %p109
      %p111 = scmp.ne.s32.totalorder %s102, %s103
      %p112 = scmp.eq.s32.totalorder %s29, 0
      %p113 = por %p111, %p112
      %p114 = scmp.ne.s32.totalorder %s102, %s103
      %p115 = scmp.eq.s32.totalorder %s30, 1
      %p116 = por %p114, %p115
      %p118 = scmp.ne.s32.totalorder %s103, %s117
      %p119 = scmp.eq.s32.totalorder %s30, 0
      %p120 = por %p118, %p119
      %s122 = sadd.s32 %s121, 1
      %p125 = scmp.eq.s32.totalorder %s24, 1
      %p126 = scmp.ne.s32.totalorder %s121, %s123
      %p127 = scmp.eq.s32.totalorder %s24, 0
      %p128 = por %p126, %p127
      %p129 = scmp.ne.s32.totalorder %s121, %s123
      %p130 = scmp.eq.s32.totalorder %s29, 1
      %p131 = por %p129, %p130
      %p132 = scmp.ne.s32.totalorder %s123, %s124
      %p133 = scmp.eq.s32.totalorder %s29, 0
      %p134 = por %p132, %p133
      %p135 = scmp.ne.s32.totalorder %s123, %s124
      %p136 = scmp.eq.s32.totalorder %s30, 1
      %p137 = por %p135, %p136
      %p139 = scmp.ne.s32.totalorder %s124, %s138
      %p140 = scmp.eq.s32.totalorder %s30, 0
      %p141 = por %p139, %p140
      %s142 = ssub.s32 %s24, %s31
      %p143 = scmp.eq.s32.totalorder %s142, 0
      %s145 = sadd.s32 %s144, 1
      %s146 = scalar_select %p143, %s144, %s145
      %p149 = pneg %p143
      %p150 = scmp.eq.s32.totalorder %s24, 1
      %p151 = por %p149, %p150
      %p152 = scmp.ne.s32.totalorder %s144, %s147
      %p153 = scmp.eq.s32.totalorder %s24, 0
      %p154 = por %p152, %p153
      %p155 = scmp.ne.s32.totalorder %s144, %s147
      %p156 = scmp.eq.s32.totalorder %s29, 1
      %p157 = por %p155, %p156
      %p158 = scmp.ne.s32.totalorder %s147, %s148
      %p159 = scmp.eq.s32.totalorder %s29, 0
      %p160 = por %p158, %p159
      %p161 = scmp.ne.s32.totalorder %s147, %s148
      %p162 = scmp.eq.s32.totalorder %s30, 1
      %p163 = por %p161, %p162
      %p165 = scmp.ne.s32.totalorder %s148, %s164
      %p166 = scmp.eq.s32.totalorder %s30, 0
      %p167 = por %p165, %p166
      %s168 = ssub.s32 %s24, %s31
      %p169 = scmp.eq.s32.totalorder %s168, 0
      %s171 = sadd.s32 %s170, 1
      %s172 = scalar_select %p169, %s170, %s171
      %p175 = pneg %p169
      %p176 = scmp.eq.s32.totalorder %s24, 1
      %p177 = por %p175, %p176
      %p178 = scmp.ne.s32.totalorder %s170, %s173
      %p179 = scmp.eq.s32.totalorder %s24, 0
      %p180 = por %p178, %p179
      %p181 = scmp.ne.s32.totalorder %s170, %s173
      %p182 = scmp.eq.s32.totalorder %s29, 1
      %p183 = por %p181, %p182
      %p184 = scmp.ne.s32.totalorder %s173, %s174
      %p185 = scmp.eq.s32.totalorder %s29, 0
      %p186 = por %p184, %p185
      %p187 = scmp.ne.s32.totalorder %s173, %s174
      %p188 = scmp.eq.s32.totalorder %s30, 1
      %p189 = por %p187, %p188
      %p191 = scmp.ne.s32.totalorder %s174, %s190
      %p192 = scmp.eq.s32.totalorder %s30, 0
      %p193 = por %p191, %p192
      %s194 = ssub.s32 %s24, %s31
      %p195 = scmp.eq.s32.totalorder %s194, 0
      %s197 = sadd.s32 %s196, 1
      %s198 = scalar_select %p195, %s196, %s197
      %p201 = pneg %p195
      %p202 = scmp.eq.s32.totalorder %s24, 1
      %p203 = por %p201, %p202
      %p204 = scmp.ne.s32.totalorder %s196, %s199
      %p205 = scmp.eq.s32.totalorder %s24, 0
      %p206 = por %p204, %p205
      %p207 = scmp.ne.s32.totalorder %s196, %s199
      %p208 = scmp.eq.s32.totalorder %s29, 1
      %p209 = por %p207, %p208
      %p210 = scmp.ne.s32.totalorder %s199, %s200
      %p211 = scmp.eq.s32.totalorder %s29, 0
      %p212 = por %p210, %p211
      %p213 = scmp.ne.s32.totalorder %s199, %s200
      %p214 = scmp.eq.s32.totalorder %s30, 1
      %p215 = por %p213, %p214
      %p217 = scmp.ne.s32.totalorder %s200, %s216
      %p218 = scmp.eq.s32.totalorder %s30, 0
      %p219 = por %p217, %p218
      %p220 = scmp.le.s32.totalorder 1, %s24
      %p221 = scmp.lt.s32.totalorder %s24, 3
      %p222 = pnand %p220, %p221
      %p223 = pneg %p222
      // Predicated region
      $region9: #{tpu_custom_call.1} parent=5 // pred_check
        _
      $region10: #{tpu_custom_call.1} parent=5 // pred_check_branch
        %225 = sbr.rel (%p222) target = $region12
      $region11: #{tpu_custom_call.1} parent=5 // pred_region
        %s226 = ssub.s32 %s24, 1
        // Predicated region
        $region13: #{tpu_custom_call.1} parent=11 // pred_check
          %p227 = pneg %p71
        $region14: #{tpu_custom_call.1} parent=11 // pred_check_branch
          %229 = sbr.rel (%p227) target = $region16
        $region15: #{tpu_custom_call.1} parent=11 // pred_region
          %231 = vsyncadd [#allocation6], 0
          %s233 = sshll.u32 %s1, 4
          %s234 = int_to_ptr.hbm [resolvable:$true] %s233
          %s235 = sshll.u32 [#allocation5], 4
          %s236 = int_to_ptr.vmem [resolvable:$true] %s235
          %238 = dma.hbm_to_vmem [thread:$0]  %s234, 16, %s236, [#allocation6]
        $region16: #{tpu_custom_call.1} parent=11 // pred_fallthru
          _
        // Predicated region
        $region17: #{tpu_custom_call.1} parent=11 // pred_check
          %p239 = pneg %p92
        $region18: #{tpu_custom_call.1} parent=11 // pred_check_branch
          %241 = sbr.rel (%p239) target = $region20
        $region19: #{tpu_custom_call.1} parent=11 // pred_region
          _
        $region20: #{tpu_custom_call.1} parent=11 // pred_fallthru
          _
        // Predicated region
        $region21: #{tpu_custom_call.1} parent=11 // pred_check
          %p242 = pneg %p113
        $region22: #{tpu_custom_call.1} parent=11 // pred_check_branch
          %244 = sbr.rel (%p242) target = $region24
        $region23: #{tpu_custom_call.1} parent=11 // pred_region
          %246 = vsyncadd [#allocation6], 0
          %s247 = sshll.u32 %s3, 4
          %s248 = int_to_ptr.hbm [resolvable:$true] %s247
          %s249 = sshll.u32 [#allocation7], 4
          %s250 = int_to_ptr.vmem [resolvable:$true] %s249
          %255 = dma.hbm_to_vmem [thread:$0]  %s248, 1024, %s250, [#allocation6], 128, 128, 8
        $region24: #{tpu_custom_call.1} parent=11 // pred_fallthru
          _
        // Predicated region
        $region25: #{tpu_custom_call.1} parent=11 // pred_check
          %p256 = pneg %p134
        $region26: #{tpu_custom_call.1} parent=11 // pred_check_branch
          %258 = sbr.rel (%p256) target = $region28
        $region27: #{tpu_custom_call.1} parent=11 // pred_region
          _
        $region28: #{tpu_custom_call.1} parent=11 // pred_fallthru
          _
      $region12: #{tpu_custom_call.1} parent=5 // pred_fallthru
        _
      %p259 = scmp.lt.s32.totalorder %s24, 2
      // Predicated region
      $region29: #{tpu_custom_call.1} parent=5 // pred_check
        %p260 = pneg %p259
      $region30: #{tpu_custom_call.1} parent=5 // pred_check_branch
        %262 = sbr.rel (%p260) target = $region32
      $region31: #{tpu_custom_call.1} parent=5 // pred_region
        // Predicated region
        $region33: #{tpu_custom_call.1} parent=31 // pred_check
          %p263 = pneg %p44
        $region34: #{tpu_custom_call.1} parent=31 // pred_check_branch
          %265 = sbr.rel (%p263) target = $region36
        $region35: #{tpu_custom_call.1} parent=31 // pred_region
          %s266 = sand.u32 %s34, 1
          %s267 = scalar_lea.sflag [#allocation3], %s266
          %s268 = sand.u32 %s34, 1
          %s269 = smul.addr %s268, 64
          %s270 = scalar_lea.vmem [#allocation2], %s269
          %272 = vsyncadd %s267, 0
          %s273 = smul.addr %s24, 8
          %s274 = smul.addr %s273, 8
          %s275 = scalar_lea.hbm %s0, %s274
          %s276 = sshll.u32 %s275, 4
          %s277 = int_to_ptr.hbm [resolvable:$true] %s276
          %s278 = sshll.u32 %s270, 4
          %s279 = int_to_ptr.vmem [resolvable:$true] %s278
          %284 = dma.hbm_to_vmem [thread:$0]  %s277, 1024, %s279, %s267, 128, 128, 8
        $region36: #{tpu_custom_call.1} parent=31 // pred_fallthru
          _
      $region32: #{tpu_custom_call.1} parent=5 // pred_fallthru
        _
      %p285 = scmp.le.s32.totalorder 1, %s24
      %p286 = scmp.lt.s32.totalorder %s24, 3
      %p287 = pnand %p285, %p286
      %p288 = pneg %p287
      // Predicated region
      $region37: #{tpu_custom_call.1} parent=5 // pred_check
        _
      $region38: #{tpu_custom_call.1} parent=5 // pred_check_branch
        %290 = sbr.rel (%p287) target = $region40
      $region39: #{tpu_custom_call.1} parent=5 // pred_region
        %s291 = ssub.s32 %s24, 1
        %s292 = sand.u32 %s37, 1
        %s293 = scalar_lea.sflag [#allocation3], %s292
        %s294 = sand.u32 %s37, 1
        %s295 = smul.addr %s294, 64
        %s296 = scalar_lea.vmem [#allocation2], %s295
        // Predicated region
        $region41: #{tpu_custom_call.1} parent=39 // pred_check
          %p297 = pneg %p50
        $region42: #{tpu_custom_call.1} parent=39 // pred_check_branch
          %299 = sbr.rel (%p297) target = $region44
        $region43: #{tpu_custom_call.1} parent=39 // pred_region
          %301 = dma.done %s293, 1024
        $region44: #{tpu_custom_call.1} parent=39 // pred_fallthru
          _
        // Predicated region
        $region45: #{tpu_custom_call.1} parent=39 // pred_check
          %p302 = pneg %p71
        $region46: #{tpu_custom_call.1} parent=39 // pred_check_branch
          %304 = sbr.rel (%p302) target = $region48
        $region47: #{tpu_custom_call.1} parent=39 // pred_region
          %306 = dma.done [#allocation6], 16
        $region48: #{tpu_custom_call.1} parent=39 // pred_fallthru
          _
        // Predicated region
        $region49: #{tpu_custom_call.1} parent=39 // pred_check
          %p307 = pneg %p113
        $region50: #{tpu_custom_call.1} parent=39 // pred_check_branch
          %309 = sbr.rel (%p307) target = $region52
        $region51: #{tpu_custom_call.1} parent=39 // pred_region
          %311 = dma.done [#allocation6], 1024
        $region52: #{tpu_custom_call.1} parent=39 // pred_fallthru
          _
        %s312 = sand.u32 %s37, 1
        %s313 = scalar_lea.sflag [#allocation3], %s312
        %s314 = sand.u32 %s37, 1
        %s315 = smul.addr %s314, 64
        %s316 = scalar_lea.vmem [#allocation2], %s315
        %p317 = pneg %p50
        %p318 = pneg %p47
        %p319 = pneg %p71
        %p320 = pneg %p68
        %p321 = pneg %p92
        %p322 = pneg %p89
        %p323 = pneg %p113
        %p324 = pneg %p110
        %p325 = pneg %p134
        %p326 = pneg %p131
        %p327 = pneg %p160
        %p328 = pneg %p157
        %s329 = sand.u32 %s147, 1
        %s330 = scalar_lea.sflag [#allocation4], %s329
        %s331 = sand.u32 %s147, 1
        %s332 = smul.addr %s331, 32
        %s333 = scalar_lea.vmem [#allocation8], %s332
        %p334 = pneg %p186
        %p335 = pneg %p183
        %s336 = sand.u32 %s29, 1
        %s337 = scalar_lea.sflag [#allocation10], %s336
        %s338 = sand.u32 %s173, 1
        %s339 = smul.addr %s338, 32
        %s340 = scalar_lea.vmem [#allocation9], %s339
        %p341 = pneg %p212
        %p342 = pneg %p209
        %s343 = sand.u32 %s29, 1
        %s344 = scalar_lea.sflag [#allocation10], %s343
        %s345 = sand.u32 %s199, 1
        %s346 = smul.addr %s345, 32
        %s347 = scalar_lea.vmem [#allocation11], %s346
        %v349 = vld [vmem:[%s296] sm:$0xff]
        %v350 = vld [vmem:[%s296 + $0x8] sm:$0xff]
        %v351 = vld [vmem:[%s296 + $0x10] sm:$0xff]
        %v352 = vld [vmem:[%s296 + $0x18] sm:$0xff]
        %v353 = vld [vmem:[%s296 + $0x20] sm:$0xff]
        %v354 = vld [vmem:[%s296 + $0x28] sm:$0xff]
        %v355 = vld [vmem:[%s296 + $0x30] sm:$0xff]
        %v356 = vld [vmem:[%s296 + $0x38] sm:$0xff]
        %vm357 = vcmask 523264
        %v358 = vsel %vm357, %v349, 0.0
        %v359 = vsel %vm357, %v350, 0.0
        %v360 = vadd.f32 %v358, %v359
        %v361 = vsel %vm357, %v351, 0.0
        %v362 = vadd.f32 %v360, %v361
        %v363 = vsel %vm357, %v352, 0.0
        %v364 = vadd.f32 %v362, %v363
        %v365 = vsel %vm357, %v353, 0.0
        %v366 = vadd.f32 %v364, %v365
        %v367 = vsel %vm357, %v354, 0.0
        %v368 = vadd.f32 %v366, %v367
        %v369 = vsel %vm357, %v355, 0.0
        %v370 = vadd.f32 %v368, %v369
        %v371 = vsel %vm357, %v356, 0.0
        %v372 = vadd.f32 %v370, %v371
        %v373 = vrot.slane %v372, 4
        %v374 = vadd.f32 %v372, %v373
        %v375 = vrot.slane %v374, 2
        %v376 = vadd.f32 %v374, %v375
        %v377 = vrot.slane %v376, 1
        %v378 = vadd.f32 %v376, %v377
        %v379 = vmul.f32 %v349, %v349
        %v380 = vmul.f32 %v350, %v350
        %v381 = vmul.f32 %v351, %v351
        %v382 = vmul.f32 %v352, %v352
        %v383 = vmul.f32 %v353, %v353
        %v384 = vmul.f32 %v354, %v354
        %v385 = vmul.f32 %v355, %v355
        %v386 = vmul.f32 %v356, %v356
        %v387 = vsel %vm357, %v379, 0.0
        %v388 = vsel %vm357, %v380, 0.0
        %v389 = vadd.f32 %v387, %v388
        %v390 = vsel %vm357, %v381, 0.0
        %v391 = vadd.f32 %v389, %v390
        %v392 = vsel %vm357, %v382, 0.0
        %v393 = vadd.f32 %v391, %v392
        %v394 = vsel %vm357, %v383, 0.0
        %v395 = vadd.f32 %v393, %v394
        %v396 = vsel %vm357, %v384, 0.0
        %v397 = vadd.f32 %v395, %v396
        %v398 = vsel %vm357, %v385, 0.0
        %v399 = vadd.f32 %v397, %v398
        %v400 = vsel %vm357, %v386, 0.0
        %v401 = vadd.f32 %v399, %v400
        %v402 = vrot.slane %v401, 4
        %v403 = vadd.f32 %v401, %v402
        %v404 = vrot.slane %v403, 2
        %v405 = vadd.f32 %v403, %v404
        %v406 = vrot.slane %v405, 1
        %v407 = vadd.f32 %v405, %v406
        %v408 = vlaneseq
        %v409 = vand.u32 %v408, 127
        %vm410 = vcmask 15360
        %v411 = vsel %vm410, %v378, 0.0
        %412 = vadd.xlane.f32.xlu0 %v411
        %v413 = vpop.xlane.xlu0 %412
        %v414 = vmul.f32 %v413, 0.0078125
        %v415 = vsel %vm410, %v407, 0.0
        %416 = vadd.xlane.f32.xlu0 %v415
        %v417 = vpop.xlane.xlu0 %416
        %v418 = vmul.f32 %v417, 0.0078125
        %v419 = vmul.f32 %v414, %v414
        %v420 = vsub.f32 %v418, %v419
        %v421 = vadd.f32 %v420, 1e-05
        %v422 = vrsqrt.pop %v421
        %v423 = vmul.f32 %v422, %v421
        %v424 = vmul.f32 %v423, %v422
        %v425 = vmul.f32 0.5, %v424
        %v426 = vsub.f32 1.5, %v425
        %v427 = vmul.f32 %v422, %v426
        %vm428 = vweird.f32 %v421
        %vm429 = vweird.f32 %v422
        %vm430 = vmor %vm428, %vm429
        %v431 = vsel %vm430, %v422, %v427
        %vm432 = vcmp.ge.s32.totalorder %v409, 0
        %vm433 = vcmp.lt.s32.totalorder %v409, 2
        %vm434 = vmand %vm432, %vm433
        %v435 = vsel %vm434, %v414, 0.0
        %v436 = vsel %vm434, %v431, 0.0
        %438 = vrot.lane.b32.xlu0 %v378, 126
        %v439 = vpop.permute.xlu0 %438
        %v441 = vsel %vm410, %v439, 0.0
        %442 = vadd.xlane.f32.xlu0 %v441
        %v443 = vpop.xlane.xlu0 %442
        %v444 = vmul.f32 %v443, 0.0078125
        %446 = vrot.lane.b32.xlu0 %v407, 126
        %v447 = vpop.permute.xlu0 %446
        %v449 = vsel %vm410, %v447, 0.0
        %450 = vadd.xlane.f32.xlu0 %v449
        %v451 = vpop.xlane.xlu0 %450
        %v452 = vmul.f32 %v451, 0.0078125
        %v453 = vmul.f32 %v444, %v444
        %v454 = vsub.f32 %v452, %v453
        %v455 = vadd.f32 %v454, 1e-05
        %v456 = vrsqrt.pop %v455
        %v457 = vmul.f32 %v456, %v455
        %v458 = vmul.f32 %v457, %v456
        %v459 = vmul.f32 0.5, %v458
        %v460 = vsub.f32 1.5, %v459
        %v461 = vmul.f32 %v456, %v460
        %vm462 = vweird.f32 %v455
        %vm463 = vweird.f32 %v456
        %vm464 = vmor %vm462, %vm463
        %v465 = vsel %vm464, %v456, %v461
        %vm466 = vcmp.ge.s32.totalorder %v409, 2
        %vm467 = vcmp.lt.s32.totalorder %v409, 4
        %vm468 = vmand %vm466, %vm467
        %v469 = vsel %vm468, %v444, %v435
        %v470 = vsel %vm468, %v465, %v436
        %471 = vrot.lane.b32.xlu0 %v378, 124
        %v472 = vpop.permute.xlu0 %471
        %v474 = vsel %vm410, %v472, 0.0
        %475 = vadd.xlane.f32.xlu0 %v474
        %v476 = vpop.xlane.xlu0 %475
        %v477 = vmul.f32 %v476, 0.0078125
        %478 = vrot.lane.b32.xlu0 %v407, 124
        %v479 = vpop.permute.xlu0 %478
        %v481 = vsel %vm410, %v479, 0.0
        %482 = vadd.xlane.f32.xlu0 %v481
        %v483 = vpop.xlane.xlu0 %482
        %v484 = vmul.f32 %v483, 0.0078125
        %v485 = vmul.f32 %v477, %v477
        %v486 = vsub.f32 %v484, %v485
        %v487 = vadd.f32 %v486, 1e-05
        %v488 = vrsqrt.pop %v487
        %v489 = vmul.f32 %v488, %v487
        %v490 = vmul.f32 %v489, %v488
        %v491 = vmul.f32 0.5, %v490
        %v492 = vsub.f32 1.5, %v491
        %v493 = vmul.f32 %v488, %v492
        %vm494 = vweird.f32 %v487
        %vm495 = vweird.f32 %v488
        %vm496 = vmor %vm494, %vm495
        %v497 = vsel %vm496, %v488, %v493
        %vm498 = vcmp.ge.s32.totalorder %v409, 4
        %vm499 = vcmp.lt.s32.totalorder %v409, 6
        %vm500 = vmand %vm498, %vm499
        %v501 = vsel %vm500, %v477, %v469
        %v502 = vsel %vm500, %v497, %v470
        %503 = vrot.lane.b32.xlu0 %v378, 122
        %v504 = vpop.permute.xlu0 %503
        %v506 = vsel %vm410, %v504, 0.0
        %507 = vadd.xlane.f32.xlu0 %v506
        %v508 = vpop.xlane.xlu0 %507
        %v509 = vmul.f32 %v508, 0.0078125
        %510 = vrot.lane.b32.xlu0 %v407, 122
        %v511 = vpop.permute.xlu0 %510
        %v513 = vsel %vm410, %v511, 0.0
        %514 = vadd.xlane.f32.xlu0 %v513
        %v515 = vpop.xlane.xlu0 %514
        %v516 = vmul.f32 %v515, 0.0078125
        %v517 = vmul.f32 %v509, %v509
        %v518 = vsub.f32 %v516, %v517
        %v519 = vadd.f32 %v518, 1e-05
        %v520 = vrsqrt.pop %v519
        %v521 = vmul.f32 %v520, %v519
        %v522 = vmul.f32 %v521, %v520
        %v523 = vmul.f32 0.5, %v522
        %v524 = vsub.f32 1.5, %v523
        %v525 = vmul.f32 %v520, %v524
        %vm526 = vweird.f32 %v519
        %vm527 = vweird.f32 %v520
        %vm528 = vmor %vm526, %vm527
        %v529 = vsel %vm528, %v520, %v525
        %vm530 = vcmp.ge.s32.totalorder %v409, 6
        %vm531 = vcmp.lt.s32.totalorder %v409, 8
        %vm532 = vmand %vm530, %vm531
        %v533 = vsel %vm532, %v509, %v501
        %v534 = vsel %vm532, %v529, %v502
        %535 = vrot.lane.b32.xlu0 %v378, 120
        %v536 = vpop.permute.xlu0 %535
        %v538 = vsel %vm410, %v536, 0.0
        %539 = vadd.xlane.f32.xlu0 %v538
        %v540 = vpop.xlane.xlu0 %539
        %v541 = vmul.f32 %v540, 0.0078125
        %542 = vrot.lane.b32.xlu0 %v407, 120
        %v543 = vpop.permute.xlu0 %542
        %v545 = vsel %vm410, %v543, 0.0
        %546 = vadd.xlane.f32.xlu0 %v545
        %v547 = vpop.xlane.xlu0 %546
        %v548 = vmul.f32 %v547, 0.0078125
        %v549 = vmul.f32 %v541, %v541
        %v550 = vsub.f32 %v548, %v549
        %v551 = vadd.f32 %v550, 1e-05
        %v552 = vrsqrt.pop %v551
        %v553 = vmul.f32 %v552, %v551
        %v554 = vmul.f32 %v553, %v552
        %v555 = vmul.f32 0.5, %v554
        %v556 = vsub.f32 1.5, %v555
        %v557 = vmul.f32 %v552, %v556
        %vm558 = vweird.f32 %v551
        %vm559 = vweird.f32 %v552
        %vm560 = vmor %vm558, %vm559
        %v561 = vsel %vm560, %v552, %v557
        %vm562 = vcmp.ge.s32.totalorder %v409, 8
        %vm563 = vcmp.lt.s32.totalorder %v409, 10
        %vm564 = vmand %vm562, %vm563
        %v565 = vsel %vm564, %v541, %v533
        %v566 = vsel %vm564, %v561, %v534
        %567 = vrot.lane.b32.xlu0 %v378, 118
        %v568 = vpop.permute.xlu0 %567
        %v570 = vsel %vm410, %v568, 0.0
        %571 = vadd.xlane.f32.xlu0 %v570
        %v572 = vpop.xlane.xlu0 %571
        %v573 = vmul.f32 %v572, 0.0078125
        %574 = vrot.lane.b32.xlu0 %v407, 118
        %v575 = vpop.permute.xlu0 %574
        %v577 = vsel %vm410, %v575, 0.0
        %578 = vadd.xlane.f32.xlu0 %v577
        %v579 = vpop.xlane.xlu0 %578
        %v580 = vmul.f32 %v579, 0.0078125
        %v581 = vmul.f32 %v573, %v573
        %v582 = vsub.f32 %v580, %v581
        %v583 = vadd.f32 %v582, 1e-05
        %v584 = vrsqrt.pop %v583
        %v585 = vmul.f32 %v584, %v583
        %v586 = vmul.f32 %v585, %v584
        %v587 = vmul.f32 0.5, %v586
        %v588 = vsub.f32 1.5, %v587
        %v589 = vmul.f32 %v584, %v588
        %vm590 = vweird.f32 %v583
        %vm591 = vweird.f32 %v584
        %vm592 = vmor %vm590, %vm591
        %v593 = vsel %vm592, %v584, %v589
        %vm594 = vcmp.ge.s32.totalorder %v409, 10
        %vm595 = vcmp.lt.s32.totalorder %v409, 12
        %vm596 = vmand %vm594, %vm595
        %v597 = vsel %vm596, %v573, %v565
        %v598 = vsel %vm596, %v593, %v566
        %599 = vrot.lane.b32.xlu0 %v378, 116
        %v600 = vpop.permute.xlu0 %599
        %v602 = vsel %vm410, %v600, 0.0
        %603 = vadd.xlane.f32.xlu0 %v602
        %v604 = vpop.xlane.xlu0 %603
        %v605 = vmul.f32 %v604, 0.0078125
        %606 = vrot.lane.b32.xlu0 %v407, 116
        %v607 = vpop.permute.xlu0 %606
        %v609 = vsel %vm410, %v607, 0.0
        %610 = vadd.xlane.f32.xlu0 %v609
        %v611 = vpop.xlane.xlu0 %610
        %v612 = vmul.f32 %v611, 0.0078125
        %v613 = vmul.f32 %v605, %v605
        %v614 = vsub.f32 %v612, %v613
        %v615 = vadd.f32 %v614, 1e-05
        %v616 = vrsqrt.pop %v615
        %v617 = vmul.f32 %v616, %v615
        %v618 = vmul.f32 %v617, %v616
        %v619 = vmul.f32 0.5, %v618
        %v620 = vsub.f32 1.5, %v619
        %v621 = vmul.f32 %v616, %v620
        %vm622 = vweird.f32 %v615
        %vm623 = vweird.f32 %v616
        %vm624 = vmor %vm622, %vm623
        %v625 = vsel %vm624, %v616, %v621
        %vm626 = vcmp.ge.s32.totalorder %v409, 12
        %vm627 = vcmp.lt.s32.totalorder %v409, 14
        %vm628 = vmand %vm626, %vm627
        %v629 = vsel %vm628, %v605, %v597
        %v630 = vsel %vm628, %v625, %v598
        %631 = vrot.lane.b32.xlu0 %v378, 114
        %v632 = vpop.permute.xlu0 %631
        %v634 = vsel %vm410, %v632, 0.0
        %635 = vadd.xlane.f32.xlu0 %v634
        %v636 = vpop.xlane.xlu0 %635
        %v637 = vmul.f32 %v636, 0.0078125
        %638 = vrot.lane.b32.xlu0 %v407, 114
        %v639 = vpop.permute.xlu0 %638
        %v641 = vsel %vm410, %v639, 0.0
        %642 = vadd.xlane.f32.xlu0 %v641
        %v643 = vpop.xlane.xlu0 %642
        %v644 = vmul.f32 %v643, 0.0078125
        %v645 = vmul.f32 %v637, %v637
        %v646 = vsub.f32 %v644, %v645
        %v647 = vadd.f32 %v646, 1e-05
        %v648 = vrsqrt.pop %v647
        %v649 = vmul.f32 %v648, %v647
        %v650 = vmul.f32 %v649, %v648
        %v651 = vmul.f32 0.5, %v650
        %v652 = vsub.f32 1.5, %v651
        %v653 = vmul.f32 %v648, %v652
        %vm654 = vweird.f32 %v647
        %vm655 = vweird.f32 %v648
        %vm656 = vmor %vm654, %vm655
        %v657 = vsel %vm656, %v648, %v653
        %vm658 = vcmp.ge.s32.totalorder %v409, 14
        %vm659 = vcmp.lt.s32.totalorder %v409, 16
        %vm660 = vmand %vm658, %vm659
        %v661 = vsel %vm660, %v637, %v629
        %v662 = vsel %vm660, %v657, %v630
        %663 = vrot.lane.b32.xlu0 %v378, 112
        %v664 = vpop.permute.xlu0 %663
        %v666 = vsel %vm410, %v664, 0.0
        %667 = vadd.xlane.f32.xlu0 %v666
        %v668 = vpop.xlane.xlu0 %667
        %v669 = vmul.f32 %v668, 0.0078125
        %670 = vrot.lane.b32.xlu0 %v407, 112
        %v671 = vpop.permute.xlu0 %670
        %v673 = vsel %vm410, %v671, 0.0
        %674 = vadd.xlane.f32.xlu0 %v673
        %v675 = vpop.xlane.xlu0 %674
        %v676 = vmul.f32 %v675, 0.0078125
        %v677 = vmul.f32 %v669, %v669
        %v678 = vsub.f32 %v676, %v677
        %v679 = vadd.f32 %v678, 1e-05
        %v680 = vrsqrt.pop %v679
        %v681 = vmul.f32 %v680, %v679
        %v682 = vmul.f32 %v681, %v680
        %v683 = vmul.f32 0.5, %v682
        %v684 = vsub.f32 1.5, %v683
        %v685 = vmul.f32 %v680, %v684
        %vm686 = vweird.f32 %v679
        %vm687 = vweird.f32 %v680
        %vm688 = vmor %vm686, %vm687
        %v689 = vsel %vm688, %v680, %v685
        %vm690 = vcmp.ge.s32.totalorder %v409, 16
        %vm691 = vcmp.lt.s32.totalorder %v409, 18
        %vm692 = vmand %vm690, %vm691
        %v693 = vsel %vm692, %v669, %v661
        %v694 = vsel %vm692, %v689, %v662
        %695 = vrot.lane.b32.xlu0 %v378, 110
        %v696 = vpop.permute.xlu0 %695
        %v698 = vsel %vm410, %v696, 0.0
        %699 = vadd.xlane.f32.xlu0 %v698
        %v700 = vpop.xlane.xlu0 %699
        %v701 = vmul.f32 %v700, 0.0078125
        %702 = vrot.lane.b32.xlu0 %v407, 110
        %v703 = vpop.permute.xlu0 %702
        %v705 = vsel %vm410, %v703, 0.0
        %706 = vadd.xlane.f32.xlu0 %v705
        %v707 = vpop.xlane.xlu0 %706
        %v708 = vmul.f32 %v707, 0.0078125
        %v709 = vmul.f32 %v701, %v701
        %v710 = vsub.f32 %v708, %v709
        %v711 = vadd.f32 %v710, 1e-05
        %v712 = vrsqrt.pop %v711
        %v713 = vmul.f32 %v712, %v711
        %v714 = vmul.f32 %v713, %v712
        %v715 = vmul.f32 0.5, %v714
        %v716 = vsub.f32 1.5, %v715
        %v717 = vmul.f32 %v712, %v716
        %vm718 = vweird.f32 %v711
        %vm719 = vweird.f32 %v712
        %vm720 = vmor %vm718, %vm719
        %v721 = vsel %vm720, %v712, %v717
        %vm722 = vcmp.ge.s32.totalorder %v409, 18
        %vm723 = vcmp.lt.s32.totalorder %v409, 20
        %vm724 = vmand %vm722, %vm723
        %v725 = vsel %vm724, %v701, %v693
        %v726 = vsel %vm724, %v721, %v694
        %727 = vrot.lane.b32.xlu0 %v378, 108
        %v728 = vpop.permute.xlu0 %727
        %v730 = vsel %vm410, %v728, 0.0
        %731 = vadd.xlane.f32.xlu0 %v730
        %v732 = vpop.xlane.xlu0 %731
        %v733 = vmul.f32 %v732, 0.0078125
        %734 = vrot.lane.b32.xlu0 %v407, 108
        %v735 = vpop.permute.xlu0 %734
        %v737 = vsel %vm410, %v735, 0.0
        %738 = vadd.xlane.f32.xlu0 %v737
        %v739 = vpop.xlane.xlu0 %738
        %v740 = vmul.f32 %v739, 0.0078125
        %v741 = vmul.f32 %v733, %v733
        %v742 = vsub.f32 %v740, %v741
        %v743 = vadd.f32 %v742, 1e-05
        %v744 = vrsqrt.pop %v743
        %v745 = vmul.f32 %v744, %v743
        %v746 = vmul.f32 %v745, %v744
        %v747 = vmul.f32 0.5, %v746
        %v748 = vsub.f32 1.5, %v747
        %v749 = vmul.f32 %v744, %v748
        %vm750 = vweird.f32 %v743
        %vm751 = vweird.f32 %v744
        %vm752 = vmor %vm750, %vm751
        %v753 = vsel %vm752, %v744, %v749
        %vm754 = vcmp.ge.s32.totalorder %v409, 20
        %vm755 = vcmp.lt.s32.totalorder %v409, 22
        %vm756 = vmand %vm754, %vm755
        %v757 = vsel %vm756, %v733, %v725
        %v758 = vsel %vm756, %v753, %v726
        %759 = vrot.lane.b32.xlu0 %v378, 106
        %v760 = vpop.permute.xlu0 %759
        %v762 = vsel %vm410, %v760, 0.0
        %763 = vadd.xlane.f32.xlu0 %v762
        %v764 = vpop.xlane.xlu0 %763
        %v765 = vmul.f32 %v764, 0.0078125
        %766 = vrot.lane.b32.xlu0 %v407, 106
        %v767 = vpop.permute.xlu0 %766
        %v769 = vsel %vm410, %v767, 0.0
        %770 = vadd.xlane.f32.xlu0 %v769
        %v771 = vpop.xlane.xlu0 %770
        %v772 = vmul.f32 %v771, 0.0078125
        %v773 = vmul.f32 %v765, %v765
        %v774 = vsub.f32 %v772, %v773
        %v775 = vadd.f32 %v774, 1e-05
        %v776 = vrsqrt.pop %v775
        %v777 = vmul.f32 %v776, %v775
        %v778 = vmul.f32 %v777, %v776
        %v779 = vmul.f32 0.5, %v778
        %v780 = vsub.f32 1.5, %v779
        %v781 = vmul.f32 %v776, %v780
        %vm782 = vweird.f32 %v775
        %vm783 = vweird.f32 %v776
        %vm784 = vmor %vm782, %vm783
        %v785 = vsel %vm784, %v776, %v781
        %vm786 = vcmp.ge.s32.totalorder %v409, 22
        %vm787 = vcmp.lt.s32.totalorder %v409, 24
        %vm788 = vmand %vm786, %vm787
        %v789 = vsel %vm788, %v765, %v757
        %v790 = vsel %vm788, %v785, %v758
        %791 = vrot.lane.b32.xlu0 %v378, 104
        %v792 = vpop.permute.xlu0 %791
        %v794 = vsel %vm410, %v792, 0.0
        %795 = vadd.xlane.f32.xlu0 %v794
        %v796 = vpop.xlane.xlu0 %795
        %v797 = vmul.f32 %v796, 0.0078125
        %798 = vrot.lane.b32.xlu0 %v407, 104
        %v799 = vpop.permute.xlu0 %798
        %v801 = vsel %vm410, %v799, 0.0
        %802 = vadd.xlane.f32.xlu0 %v801
        %v803 = vpop.xlane.xlu0 %802
        %v804 = vmul.f32 %v803, 0.0078125
        %v805 = vmul.f32 %v797, %v797
        %v806 = vsub.f32 %v804, %v805
        %v807 = vadd.f32 %v806, 1e-05
        %v808 = vrsqrt.pop %v807
        %v809 = vmul.f32 %v808, %v807
        %v810 = vmul.f32 %v809, %v808
        %v811 = vmul.f32 0.5, %v810
        %v812 = vsub.f32 1.5, %v811
        %v813 = vmul.f32 %v808, %v812
        %vm814 = vweird.f32 %v807
        %vm815 = vweird.f32 %v808
        %vm816 = vmor %vm814, %vm815
        %v817 = vsel %vm816, %v808, %v813
        %vm818 = vcmp.ge.s32.totalorder %v409, 24
        %vm819 = vcmp.lt.s32.totalorder %v409, 26
        %vm820 = vmand %vm818, %vm819
        %v821 = vsel %vm820, %v797, %v789
        %v822 = vsel %vm820, %v817, %v790
        %823 = vrot.lane.b32.xlu0 %v378, 102
        %v824 = vpop.permute.xlu0 %823
        %v826 = vsel %vm410, %v824, 0.0
        %827 = vadd.xlane.f32.xlu0 %v826
        %v828 = vpop.xlane.xlu0 %827
        %v829 = vmul.f32 %v828, 0.0078125
        %830 = vrot.lane.b32.xlu0 %v407, 102
        %v831 = vpop.permute.xlu0 %830
        %v833 = vsel %vm410, %v831, 0.0
        %834 = vadd.xlane.f32.xlu0 %v833
        %v835 = vpop.xlane.xlu0 %834
        %v836 = vmul.f32 %v835, 0.0078125
        %v837 = vmul.f32 %v829, %v829
        %v838 = vsub.f32 %v836, %v837
        %v839 = vadd.f32 %v838, 1e-05
        %v840 = vrsqrt.pop %v839
        %v841 = vmul.f32 %v840, %v839
        %v842 = vmul.f32 %v841, %v840
        %v843 = vmul.f32 0.5, %v842
        %v844 = vsub.f32 1.5, %v843
        %v845 = vmul.f32 %v840, %v844
        %vm846 = vweird.f32 %v839
        %vm847 = vweird.f32 %v840
        %vm848 = vmor %vm846, %vm847
        %v849 = vsel %vm848, %v840, %v845
        %vm850 = vcmp.ge.s32.totalorder %v409, 26
        %vm851 = vcmp.lt.s32.totalorder %v409, 28
        %vm852 = vmand %vm850, %vm851
        %v853 = vsel %vm852, %v829, %v821
        %v854 = vsel %vm852, %v849, %v822
        %855 = vrot.lane.b32.xlu0 %v378, 100
        %v856 = vpop.permute.xlu0 %855
        %v858 = vsel %vm410, %v856, 0.0
        %859 = vadd.xlane.f32.xlu0 %v858
        %v860 = vpop.xlane.xlu0 %859
        %v861 = vmul.f32 %v860, 0.0078125
        %862 = vrot.lane.b32.xlu0 %v407, 100
        %v863 = vpop.permute.xlu0 %862
        %v865 = vsel %vm410, %v863, 0.0
        %866 = vadd.xlane.f32.xlu0 %v865
        %v867 = vpop.xlane.xlu0 %866
        %v868 = vmul.f32 %v867, 0.0078125
        %v869 = vmul.f32 %v861, %v861
        %v870 = vsub.f32 %v868, %v869
        %v871 = vadd.f32 %v870, 1e-05
        %v872 = vrsqrt.pop %v871
        %v873 = vmul.f32 %v872, %v871
        %v874 = vmul.f32 %v873, %v872
        %v875 = vmul.f32 0.5, %v874
        %v876 = vsub.f32 1.5, %v875
        %v877 = vmul.f32 %v872, %v876
        %vm878 = vweird.f32 %v871
        %vm879 = vweird.f32 %v872
        %vm880 = vmor %vm878, %vm879
        %v881 = vsel %vm880, %v872, %v877
        %vm882 = vcmp.ge.s32.totalorder %v409, 28
        %vm883 = vcmp.lt.s32.totalorder %v409, 30
        %vm884 = vmand %vm882, %vm883
        %v885 = vsel %vm884, %v861, %v853
        %v886 = vsel %vm884, %v881, %v854
        %887 = vrot.lane.b32.xlu0 %v378, 98
        %v888 = vpop.permute.xlu0 %887
        %v890 = vsel %vm410, %v888, 0.0
        %891 = vadd.xlane.f32.xlu0 %v890
        %v892 = vpop.xlane.xlu0 %891
        %v893 = vmul.f32 %v892, 0.0078125
        %894 = vrot.lane.b32.xlu0 %v407, 98
        %v895 = vpop.permute.xlu0 %894
        %v897 = vsel %vm410, %v895, 0.0
        %898 = vadd.xlane.f32.xlu0 %v897
        %v899 = vpop.xlane.xlu0 %898
        %v900 = vmul.f32 %v899, 0.0078125
        %v901 = vmul.f32 %v893, %v893
        %v902 = vsub.f32 %v900, %v901
        %v903 = vadd.f32 %v902, 1e-05
        %v904 = vrsqrt.pop %v903
        %v905 = vmul.f32 %v904, %v903
        %v906 = vmul.f32 %v905, %v904
        %v907 = vmul.f32 0.5, %v906
        %v908 = vsub.f32 1.5, %v907
        %v909 = vmul.f32 %v904, %v908
        %vm910 = vweird.f32 %v903
        %vm911 = vweird.f32 %v904
        %vm912 = vmor %vm910, %vm911
        %v913 = vsel %vm912, %v904, %v909
        %vm914 = vcmp.ge.s32.totalorder %v409, 30
        %vm915 = vcmp.lt.s32.totalorder %v409, 32
        %vm916 = vmand %vm914, %vm915
        %v917 = vsel %vm916, %v893, %v885
        %v918 = vsel %vm916, %v913, %v886
        %919 = vrot.lane.b32.xlu0 %v378, 96
        %v920 = vpop.permute.xlu0 %919
        %v922 = vsel %vm410, %v920, 0.0
        %923 = vadd.xlane.f32.xlu0 %v922
        %v924 = vpop.xlane.xlu0 %923
        %v925 = vmul.f32 %v924, 0.0078125
        %926 = vrot.lane.b32.xlu0 %v407, 96
        %v927 = vpop.permute.xlu0 %926
        %v929 = vsel %vm410, %v927, 0.0
        %930 = vadd.xlane.f32.xlu0 %v929
        %v931 = vpop.xlane.xlu0 %930
        %v932 = vmul.f32 %v931, 0.0078125
        %v933 = vmul.f32 %v925, %v925
        %v934 = vsub.f32 %v932, %v933
        %v935 = vadd.f32 %v934, 1e-05
        %v936 = vrsqrt.pop %v935
        %v937 = vmul.f32 %v936, %v935
        %v938 = vmul.f32 %v937, %v936
        %v939 = vmul.f32 0.5, %v938
        %v940 = vsub.f32 1.5, %v939
        %v941 = vmul.f32 %v936, %v940
        %vm942 = vweird.f32 %v935
        %vm943 = vweird.f32 %v936
        %vm944 = vmor %vm942, %vm943
        %v945 = vsel %vm944, %v936, %v941
        %vm946 = vcmp.ge.s32.totalorder %v409, 32
        %vm947 = vcmp.lt.s32.totalorder %v409, 34
        %vm948 = vmand %vm946, %vm947
        %v949 = vsel %vm948, %v925, %v917
        %v950 = vsel %vm948, %v945, %v918
        %951 = vrot.lane.b32.xlu0 %v378, 94
        %v952 = vpop.permute.xlu0 %951
        %v954 = vsel %vm410, %v952, 0.0
        %955 = vadd.xlane.f32.xlu0 %v954
        %v956 = vpop.xlane.xlu0 %955
        %v957 = vmul.f32 %v956, 0.0078125
        %958 = vrot.lane.b32.xlu0 %v407, 94
        %v959 = vpop.permute.xlu0 %958
        %v961 = vsel %vm410, %v959, 0.0
        %962 = vadd.xlane.f32.xlu0 %v961
        %v963 = vpop.xlane.xlu0 %962
        %v964 = vmul.f32 %v963, 0.0078125
        %v965 = vmul.f32 %v957, %v957
        %v966 = vsub.f32 %v964, %v965
        %v967 = vadd.f32 %v966, 1e-05
        %v968 = vrsqrt.pop %v967
        %v969 = vmul.f32 %v968, %v967
        %v970 = vmul.f32 %v969, %v968
        %v971 = vmul.f32 0.5, %v970
        %v972 = vsub.f32 1.5, %v971
        %v973 = vmul.f32 %v968, %v972
        %vm974 = vweird.f32 %v967
        %vm975 = vweird.f32 %v968
        %vm976 = vmor %vm974, %vm975
        %v977 = vsel %vm976, %v968, %v973
        %vm978 = vcmp.ge.s32.totalorder %v409, 34
        %vm979 = vcmp.lt.s32.totalorder %v409, 36
        %vm980 = vmand %vm978, %vm979
        %v981 = vsel %vm980, %v957, %v949
        %v982 = vsel %vm980, %v977, %v950
        %983 = vrot.lane.b32.xlu0 %v378, 92
        %v984 = vpop.permute.xlu0 %983
        %v986 = vsel %vm410, %v984, 0.0
        %987 = vadd.xlane.f32.xlu0 %v986
        %v988 = vpop.xlane.xlu0 %987
        %v989 = vmul.f32 %v988, 0.0078125
        %990 = vrot.lane.b32.xlu0 %v407, 92
        %v991 = vpop.permute.xlu0 %990
        %v993 = vsel %vm410, %v991, 0.0
        %994 = vadd.xlane.f32.xlu0 %v993
        %v995 = vpop.xlane.xlu0 %994
        %v996 = vmul.f32 %v995, 0.0078125
        %v997 = vmul.f32 %v989, %v989
        %v998 = vsub.f32 %v996, %v997
        %v999 = vadd.f32 %v998, 1e-05
        %v1000 = vrsqrt.pop %v999
        %v1001 = vmul.f32 %v1000, %v999
        %v1002 = vmul.f32 %v1001, %v1000
        %v1003 = vmul.f32 0.5, %v1002
        %v1004 = vsub.f32 1.5, %v1003
        %v1005 = vmul.f32 %v1000, %v1004
        %vm1006 = vweird.f32 %v999
        %vm1007 = vweird.f32 %v1000
        %vm1008 = vmor %vm1006, %vm1007
        %v1009 = vsel %vm1008, %v1000, %v1005
        %vm1010 = vcmp.ge.s32.totalorder %v409, 36
        %vm1011 = vcmp.lt.s32.totalorder %v409, 38
        %vm1012 = vmand %vm1010, %vm1011
        %v1013 = vsel %vm1012, %v989, %v981
        %v1014 = vsel %vm1012, %v1009, %v982
        %1015 = vrot.lane.b32.xlu0 %v378, 90
        %v1016 = vpop.permute.xlu0 %1015
        %v1018 = vsel %vm410, %v1016, 0.0
        %1019 = vadd.xlane.f32.xlu0 %v1018
        %v1020 = vpop.xlane.xlu0 %1019
        %v1021 = vmul.f32 %v1020, 0.0078125
        %1022 = vrot.lane.b32.xlu0 %v407, 90
        %v1023 = vpop.permute.xlu0 %1022
        %v1025 = vsel %vm410, %v1023, 0.0
        %1026 = vadd.xlane.f32.xlu0 %v1025
        %v1027 = vpop.xlane.xlu0 %1026
        %v1028 = vmul.f32 %v1027, 0.0078125
        %v1029 = vmul.f32 %v1021, %v1021
        %v1030 = vsub.f32 %v1028, %v1029
        %v1031 = vadd.f32 %v1030, 1e-05
        %v1032 = vrsqrt.pop %v1031
        %v1033 = vmul.f32 %v1032, %v1031
        %v1034 = vmul.f32 %v1033, %v1032
        %v1035 = vmul.f32 0.5, %v1034
        %v1036 = vsub.f32 1.5, %v1035
        %v1037 = vmul.f32 %v1032, %v1036
        %vm1038 = vweird.f32 %v1031
        %vm1039 = vweird.f32 %v1032
        %vm1040 = vmor %vm1038, %vm1039
        %v1041 = vsel %vm1040, %v1032, %v1037
        %vm1042 = vcmp.ge.s32.totalorder %v409, 38
        %vm1043 = vcmp.lt.s32.totalorder %v409, 40
        %vm1044 = vmand %vm1042, %vm1043
        %v1045 = vsel %vm1044, %v1021, %v1013
        %v1046 = vsel %vm1044, %v1041, %v1014
        %1047 = vrot.lane.b32.xlu0 %v378, 88
        %v1048 = vpop.permute.xlu0 %1047
        %v1050 = vsel %vm410, %v1048, 0.0
        %1051 = vadd.xlane.f32.xlu0 %v1050
        %v1052 = vpop.xlane.xlu0 %1051
        %v1053 = vmul.f32 %v1052, 0.0078125
        %1054 = vrot.lane.b32.xlu0 %v407, 88
        %v1055 = vpop.permute.xlu0 %1054
        %v1057 = vsel %vm410, %v1055, 0.0
        %1058 = vadd.xlane.f32.xlu0 %v1057
        %v1059 = vpop.xlane.xlu0 %1058
        %v1060 = vmul.f32 %v1059, 0.0078125
        %v1061 = vmul.f32 %v1053, %v1053
        %v1062 = vsub.f32 %v1060, %v1061
        %v1063 = vadd.f32 %v1062, 1e-05
        %v1064 = vrsqrt.pop %v1063
        %v1065 = vmul.f32 %v1064, %v1063
        %v1066 = vmul.f32 %v1065, %v1064
        %v1067 = vmul.f32 0.5, %v1066
        %v1068 = vsub.f32 1.5, %v1067
        %v1069 = vmul.f32 %v1064, %v1068
        %vm1070 = vweird.f32 %v1063
        %vm1071 = vweird.f32 %v1064
        %vm1072 = vmor %vm1070, %vm1071
        %v1073 = vsel %vm1072, %v1064, %v1069
        %vm1074 = vcmp.ge.s32.totalorder %v409, 40
        %vm1075 = vcmp.lt.s32.totalorder %v409, 42
        %vm1076 = vmand %vm1074, %vm1075
        %v1077 = vsel %vm1076, %v1053, %v1045
        %v1078 = vsel %vm1076, %v1073, %v1046
        %1079 = vrot.lane.b32.xlu0 %v378, 86
        %v1080 = vpop.permute.xlu0 %1079
        %v1082 = vsel %vm410, %v1080, 0.0
        %1083 = vadd.xlane.f32.xlu0 %v1082
        %v1084 = vpop.xlane.xlu0 %1083
        %v1085 = vmul.f32 %v1084, 0.0078125
        %1086 = vrot.lane.b32.xlu0 %v407, 86
        %v1087 = vpop.permute.xlu0 %1086
        %v1089 = vsel %vm410, %v1087, 0.0
        %1090 = vadd.xlane.f32.xlu0 %v1089
        %v1091 = vpop.xlane.xlu0 %1090
        %v1092 = vmul.f32 %v1091, 0.0078125
        %v1093 = vmul.f32 %v1085, %v1085
        %v1094 = vsub.f32 %v1092, %v1093
        %v1095 = vadd.f32 %v1094, 1e-05
        %v1096 = vrsqrt.pop %v1095
        %v1097 = vmul.f32 %v1096, %v1095
        %v1098 = vmul.f32 %v1097, %v1096
        %v1099 = vmul.f32 0.5, %v1098
        %v1100 = vsub.f32 1.5, %v1099
        %v1101 = vmul.f32 %v1096, %v1100
        %vm1102 = vweird.f32 %v1095
        %vm1103 = vweird.f32 %v1096
        %vm1104 = vmor %vm1102, %vm1103
        %v1105 = vsel %vm1104, %v1096, %v1101
        %vm1106 = vcmp.ge.s32.totalorder %v409, 42
        %vm1107 = vcmp.lt.s32.totalorder %v409, 44
        %vm1108 = vmand %vm1106, %vm1107
        %v1109 = vsel %vm1108, %v1085, %v1077
        %v1110 = vsel %vm1108, %v1105, %v1078
        %1111 = vrot.lane.b32.xlu0 %v378, 84
        %v1112 = vpop.permute.xlu0 %1111
        %v1114 = vsel %vm410, %v1112, 0.0
        %1115 = vadd.xlane.f32.xlu0 %v1114
        %v1116 = vpop.xlane.xlu0 %1115
        %v1117 = vmul.f32 %v1116, 0.0078125
        %1118 = vrot.lane.b32.xlu0 %v407, 84
        %v1119 = vpop.permute.xlu0 %1118
        %v1121 = vsel %vm410, %v1119, 0.0
        %1122 = vadd.xlane.f32.xlu0 %v1121
        %v1123 = vpop.xlane.xlu0 %1122
        %v1124 = vmul.f32 %v1123, 0.0078125
        %v1125 = vmul.f32 %v1117, %v1117
        %v1126 = vsub.f32 %v1124, %v1125
        %v1127 = vadd.f32 %v1126, 1e-05
        %v1128 = vrsqrt.pop %v1127
        %v1129 = vmul.f32 %v1128, %v1127
        %v1130 = vmul.f32 %v1129, %v1128
        %v1131 = vmul.f32 0.5, %v1130
        %v1132 = vsub.f32 1.5, %v1131
        %v1133 = vmul.f32 %v1128, %v1132
        %vm1134 = vweird.f32 %v1127
        %vm1135 = vweird.f32 %v1128
        %vm1136 = vmor %vm1134, %vm1135
        %v1137 = vsel %vm1136, %v1128, %v1133
        %vm1138 = vcmp.ge.s32.totalorder %v409, 44
        %vm1139 = vcmp.lt.s32.totalorder %v409, 46
        %vm1140 = vmand %vm1138, %vm1139
        %v1141 = vsel %vm1140, %v1117, %v1109
        %v1142 = vsel %vm1140, %v1137, %v1110
        %1143 = vrot.lane.b32.xlu0 %v378, 82
        %v1144 = vpop.permute.xlu0 %1143
        %v1146 = vsel %vm410, %v1144, 0.0
        %1147 = vadd.xlane.f32.xlu0 %v1146
        %v1148 = vpop.xlane.xlu0 %1147
        %v1149 = vmul.f32 %v1148, 0.0078125
        %1150 = vrot.lane.b32.xlu0 %v407, 82
        %v1151 = vpop.permute.xlu0 %1150
        %v1153 = vsel %vm410, %v1151, 0.0
        %1154 = vadd.xlane.f32.xlu0 %v1153
        %v1155 = vpop.xlane.xlu0 %1154
        %v1156 = vmul.f32 %v1155, 0.0078125
        %v1157 = vmul.f32 %v1149, %v1149
        %v1158 = vsub.f32 %v1156, %v1157
        %v1159 = vadd.f32 %v1158, 1e-05
        %v1160 = vrsqrt.pop %v1159
        %v1161 = vmul.f32 %v1160, %v1159
        %v1162 = vmul.f32 %v1161, %v1160
        %v1163 = vmul.f32 0.5, %v1162
        %v1164 = vsub.f32 1.5, %v1163
        %v1165 = vmul.f32 %v1160, %v1164
        %vm1166 = vweird.f32 %v1159
        %vm1167 = vweird.f32 %v1160
        %vm1168 = vmor %vm1166, %vm1167
        %v1169 = vsel %vm1168, %v1160, %v1165
        %vm1170 = vcmp.ge.s32.totalorder %v409, 46
        %vm1171 = vcmp.lt.s32.totalorder %v409, 48
        %vm1172 = vmand %vm1170, %vm1171
        %v1173 = vsel %vm1172, %v1149, %v1141
        %v1174 = vsel %vm1172, %v1169, %v1142
        %1175 = vrot.lane.b32.xlu0 %v378, 80
        %v1176 = vpop.permute.xlu0 %1175
        %v1178 = vsel %vm410, %v1176, 0.0
        %1179 = vadd.xlane.f32.xlu0 %v1178
        %v1180 = vpop.xlane.xlu0 %1179
        %v1181 = vmul.f32 %v1180, 0.0078125
        %1182 = vrot.lane.b32.xlu0 %v407, 80
        %v1183 = vpop.permute.xlu0 %1182
        %v1185 = vsel %vm410, %v1183, 0.0
        %1186 = vadd.xlane.f32.xlu0 %v1185
        %v1187 = vpop.xlane.xlu0 %1186
        %v1188 = vmul.f32 %v1187, 0.0078125
        %v1189 = vmul.f32 %v1181, %v1181
        %v1190 = vsub.f32 %v1188, %v1189
        %v1191 = vadd.f32 %v1190, 1e-05
        %v1192 = vrsqrt.pop %v1191
        %v1193 = vmul.f32 %v1192, %v1191
        %v1194 = vmul.f32 %v1193, %v1192
        %v1195 = vmul.f32 0.5, %v1194
        %v1196 = vsub.f32 1.5, %v1195
        %v1197 = vmul.f32 %v1192, %v1196
        %vm1198 = vweird.f32 %v1191
        %vm1199 = vweird.f32 %v1192
        %vm1200 = vmor %vm1198, %vm1199
        %v1201 = vsel %vm1200, %v1192, %v1197
        %vm1202 = vcmp.ge.s32.totalorder %v409, 48
        %vm1203 = vcmp.lt.s32.totalorder %v409, 50
        %vm1204 = vmand %vm1202, %vm1203
        %v1205 = vsel %vm1204, %v1181, %v1173
        %v1206 = vsel %vm1204, %v1201, %v1174
        %1207 = vrot.lane.b32.xlu0 %v378, 78
        %v1208 = vpop.permute.xlu0 %1207
        %v1210 = vsel %vm410, %v1208, 0.0
        %1211 = vadd.xlane.f32.xlu0 %v1210
        %v1212 = vpop.xlane.xlu0 %1211
        %v1213 = vmul.f32 %v1212, 0.0078125
        %1214 = vrot.lane.b32.xlu0 %v407, 78
        %v1215 = vpop.permute.xlu0 %1214
        %v1217 = vsel %vm410, %v1215, 0.0
        %1218 = vadd.xlane.f32.xlu0 %v1217
        %v1219 = vpop.xlane.xlu0 %1218
        %v1220 = vmul.f32 %v1219, 0.0078125
        %v1221 = vmul.f32 %v1213, %v1213
        %v1222 = vsub.f32 %v1220, %v1221
        %v1223 = vadd.f32 %v1222, 1e-05
        %v1224 = vrsqrt.pop %v1223
        %v1225 = vmul.f32 %v1224, %v1223
        %v1226 = vmul.f32 %v1225, %v1224
        %v1227 = vmul.f32 0.5, %v1226
        %v1228 = vsub.f32 1.5, %v1227
        %v1229 = vmul.f32 %v1224, %v1228
        %vm1230 = vweird.f32 %v1223
        %vm1231 = vweird.f32 %v1224
        %vm1232 = vmor %vm1230, %vm1231
        %v1233 = vsel %vm1232, %v1224, %v1229
        %vm1234 = vcmp.ge.s32.totalorder %v409, 50
        %vm1235 = vcmp.lt.s32.totalorder %v409, 52
        %vm1236 = vmand %vm1234, %vm1235
        %v1237 = vsel %vm1236, %v1213, %v1205
        %v1238 = vsel %vm1236, %v1233, %v1206
        %1239 = vrot.lane.b32.xlu0 %v378, 76
        %v1240 = vpop.permute.xlu0 %1239
        %v1242 = vsel %vm410, %v1240, 0.0
        %1243 = vadd.xlane.f32.xlu0 %v1242
        %v1244 = vpop.xlane.xlu0 %1243
        %v1245 = vmul.f32 %v1244, 0.0078125
        %1246 = vrot.lane.b32.xlu0 %v407, 76
        %v1247 = vpop.permute.xlu0 %1246
        %v1249 = vsel %vm410, %v1247, 0.0
        %1250 = vadd.xlane.f32.xlu0 %v1249
        %v1251 = vpop.xlane.xlu0 %1250
        %v1252 = vmul.f32 %v1251, 0.0078125
        %v1253 = vmul.f32 %v1245, %v1245
        %v1254 = vsub.f32 %v1252, %v1253
        %v1255 = vadd.f32 %v1254, 1e-05
        %v1256 = vrsqrt.pop %v1255
        %v1257 = vmul.f32 %v1256, %v1255
        %v1258 = vmul.f32 %v1257, %v1256
        %v1259 = vmul.f32 0.5, %v1258
        %v1260 = vsub.f32 1.5, %v1259
        %v1261 = vmul.f32 %v1256, %v1260
        %vm1262 = vweird.f32 %v1255
        %vm1263 = vweird.f32 %v1256
        %vm1264 = vmor %vm1262, %vm1263
        %v1265 = vsel %vm1264, %v1256, %v1261
        %vm1266 = vcmp.ge.s32.totalorder %v409, 52
        %vm1267 = vcmp.lt.s32.totalorder %v409, 54
        %vm1268 = vmand %vm1266, %vm1267
        %v1269 = vsel %vm1268, %v1245, %v1237
        %v1270 = vsel %vm1268, %v1265, %v1238
        %1271 = vrot.lane.b32.xlu0 %v378, 74
        %v1272 = vpop.permute.xlu0 %1271
        %v1274 = vsel %vm410, %v1272, 0.0
        %1275 = vadd.xlane.f32.xlu0 %v1274
        %v1276 = vpop.xlane.xlu0 %1275
        %v1277 = vmul.f32 %v1276, 0.0078125
        %1278 = vrot.lane.b32.xlu0 %v407, 74
        %v1279 = vpop.permute.xlu0 %1278
        %v1281 = vsel %vm410, %v1279, 0.0
        %1282 = vadd.xlane.f32.xlu0 %v1281
        %v1283 = vpop.xlane.xlu0 %1282
        %v1284 = vmul.f32 %v1283, 0.0078125
        %v1285 = vmul.f32 %v1277, %v1277
        %v1286 = vsub.f32 %v1284, %v1285
        %v1287 = vadd.f32 %v1286, 1e-05
        %v1288 = vrsqrt.pop %v1287
        %v1289 = vmul.f32 %v1288, %v1287
        %v1290 = vmul.f32 %v1289, %v1288
        %v1291 = vmul.f32 0.5, %v1290
        %v1292 = vsub.f32 1.5, %v1291
        %v1293 = vmul.f32 %v1288, %v1292
        %vm1294 = vweird.f32 %v1287
        %vm1295 = vweird.f32 %v1288
        %vm1296 = vmor %vm1294, %vm1295
        %v1297 = vsel %vm1296, %v1288, %v1293
        %vm1298 = vcmp.ge.s32.totalorder %v409, 54
        %vm1299 = vcmp.lt.s32.totalorder %v409, 56
        %vm1300 = vmand %vm1298, %vm1299
        %v1301 = vsel %vm1300, %v1277, %v1269
        %v1302 = vsel %vm1300, %v1297, %v1270
        %1303 = vrot.lane.b32.xlu0 %v378, 72
        %v1304 = vpop.permute.xlu0 %1303
        %v1306 = vsel %vm410, %v1304, 0.0
        %1307 = vadd.xlane.f32.xlu0 %v1306
        %v1308 = vpop.xlane.xlu0 %1307
        %v1309 = vmul.f32 %v1308, 0.0078125
        %1310 = vrot.lane.b32.xlu0 %v407, 72
        %v1311 = vpop.permute.xlu0 %1310
        %v1313 = vsel %vm410, %v1311, 0.0
        %1314 = vadd.xlane.f32.xlu0 %v1313
        %v1315 = vpop.xlane.xlu0 %1314
        %v1316 = vmul.f32 %v1315, 0.0078125
        %v1317 = vmul.f32 %v1309, %v1309
        %v1318 = vsub.f32 %v1316, %v1317
        %v1319 = vadd.f32 %v1318, 1e-05
        %v1320 = vrsqrt.pop %v1319
        %v1321 = vmul.f32 %v1320, %v1319
        %v1322 = vmul.f32 %v1321, %v1320
        %v1323 = vmul.f32 0.5, %v1322
        %v1324 = vsub.f32 1.5, %v1323
        %v1325 = vmul.f32 %v1320, %v1324
        %vm1326 = vweird.f32 %v1319
        %vm1327 = vweird.f32 %v1320
        %vm1328 = vmor %vm1326, %vm1327
        %v1329 = vsel %vm1328, %v1320, %v1325
        %vm1330 = vcmp.ge.s32.totalorder %v409, 56
        %vm1331 = vcmp.lt.s32.totalorder %v409, 58
        %vm1332 = vmand %vm1330, %vm1331
        %v1333 = vsel %vm1332, %v1309, %v1301
        %v1334 = vsel %vm1332, %v1329, %v1302
        %1335 = vrot.lane.b32.xlu0 %v378, 70
        %v1336 = vpop.permute.xlu0 %1335
        %v1338 = vsel %vm410, %v1336, 0.0
        %1339 = vadd.xlane.f32.xlu0 %v1338
        %v1340 = vpop.xlane.xlu0 %1339
        %v1341 = vmul.f32 %v1340, 0.0078125
        %1342 = vrot.lane.b32.xlu0 %v407, 70
        %v1343 = vpop.permute.xlu0 %1342
        %v1345 = vsel %vm410, %v1343, 0.0
        %1346 = vadd.xlane.f32.xlu0 %v1345
        %v1347 = vpop.xlane.xlu0 %1346
        %v1348 = vmul.f32 %v1347, 0.0078125
        %v1349 = vmul.f32 %v1341, %v1341
        %v1350 = vsub.f32 %v1348, %v1349
        %v1351 = vadd.f32 %v1350, 1e-05
        %v1352 = vrsqrt.pop %v1351
        %v1353 = vmul.f32 %v1352, %v1351
        %v1354 = vmul.f32 %v1353, %v1352
        %v1355 = vmul.f32 0.5, %v1354
        %v1356 = vsub.f32 1.5, %v1355
        %v1357 = vmul.f32 %v1352, %v1356
        %vm1358 = vweird.f32 %v1351
        %vm1359 = vweird.f32 %v1352
        %vm1360 = vmor %vm1358, %vm1359
        %v1361 = vsel %vm1360, %v1352, %v1357
        %vm1362 = vcmp.ge.s32.totalorder %v409, 58
        %vm1363 = vcmp.lt.s32.totalorder %v409, 60
        %vm1364 = vmand %vm1362, %vm1363
        %v1365 = vsel %vm1364, %v1341, %v1333
        %v1366 = vsel %vm1364, %v1361, %v1334
        %1367 = vrot.lane.b32.xlu0 %v378, 68
        %v1368 = vpop.permute.xlu0 %1367
        %v1370 = vsel %vm410, %v1368, 0.0
        %1371 = vadd.xlane.f32.xlu0 %v1370
        %v1372 = vpop.xlane.xlu0 %1371
        %v1373 = vmul.f32 %v1372, 0.0078125
        %1374 = vrot.lane.b32.xlu0 %v407, 68
        %v1375 = vpop.permute.xlu0 %1374
        %v1377 = vsel %vm410, %v1375, 0.0
        %1378 = vadd.xlane.f32.xlu0 %v1377
        %v1379 = vpop.xlane.xlu0 %1378
        %v1380 = vmul.f32 %v1379, 0.0078125
        %v1381 = vmul.f32 %v1373, %v1373
        %v1382 = vsub.f32 %v1380, %v1381
        %v1383 = vadd.f32 %v1382, 1e-05
        %v1384 = vrsqrt.pop %v1383
        %v1385 = vmul.f32 %v1384, %v1383
        %v1386 = vmul.f32 %v1385, %v1384
        %v1387 = vmul.f32 0.5, %v1386
        %v1388 = vsub.f32 1.5, %v1387
        %v1389 = vmul.f32 %v1384, %v1388
        %vm1390 = vweird.f32 %v1383
        %vm1391 = vweird.f32 %v1384
        %vm1392 = vmor %vm1390, %vm1391
        %v1393 = vsel %vm1392, %v1384, %v1389
        %vm1394 = vcmp.ge.s32.totalorder %v409, 60
        %vm1395 = vcmp.lt.s32.totalorder %v409, 62
        %vm1396 = vmand %vm1394, %vm1395
        %v1397 = vsel %vm1396, %v1373, %v1365
        %v1398 = vsel %vm1396, %v1393, %v1366
        %1399 = vrot.lane.b32.xlu0 %v378, 66
        %v1400 = vpop.permute.xlu0 %1399
        %v1402 = vsel %vm410, %v1400, 0.0
        %1403 = vadd.xlane.f32.xlu0 %v1402
        %v1404 = vpop.xlane.xlu0 %1403
        %v1405 = vmul.f32 %v1404, 0.0078125
        %1406 = vrot.lane.b32.xlu0 %v407, 66
        %v1407 = vpop.permute.xlu0 %1406
        %v1409 = vsel %vm410, %v1407, 0.0
        %1410 = vadd.xlane.f32.xlu0 %v1409
        %v1411 = vpop.xlane.xlu0 %1410
        %v1412 = vmul.f32 %v1411, 0.0078125
        %v1413 = vmul.f32 %v1405, %v1405
        %v1414 = vsub.f32 %v1412, %v1413
        %v1415 = vadd.f32 %v1414, 1e-05
        %v1416 = vrsqrt.pop %v1415
        %v1417 = vmul.f32 %v1416, %v1415
        %v1418 = vmul.f32 %v1417, %v1416
        %v1419 = vmul.f32 0.5, %v1418
        %v1420 = vsub.f32 1.5, %v1419
        %v1421 = vmul.f32 %v1416, %v1420
        %vm1422 = vweird.f32 %v1415
        %vm1423 = vweird.f32 %v1416
        %vm1424 = vmor %vm1422, %vm1423
        %v1425 = vsel %vm1424, %v1416, %v1421
        %vm1426 = vcmp.ge.s32.totalorder %v409, 62
        %vm1427 = vcmp.lt.s32.totalorder %v409, 64
        %vm1428 = vmand %vm1426, %vm1427
        %v1429 = vsel %vm1428, %v1405, %v1397
        %v1430 = vsel %vm1428, %v1425, %v1398
        %v1431 = vsub.f32 %v349, %v1429
        %v1432 = vsub.f32 %v350, %v1429
        %v1433 = vsub.f32 %v351, %v1429
        %v1434 = vsub.f32 %v352, %v1429
        %v1435 = vsub.f32 %v353, %v1429
        %v1436 = vsub.f32 %v354, %v1429
        %v1437 = vsub.f32 %v355, %v1429
        %v1438 = vsub.f32 %v356, %v1429
        %v1439 = vld [vmem:[#allocation5] sm:$0x1]
        %v1440 = vmul.f32 %v1430, %v1439
        %v1441 = vperm.slane %v1440, 0
        %v1442 = vmul.f32 %v1431, %v1441
        %v1443 = vmul.f32 %v1432, %v1441
        %v1444 = vmul.f32 %v1433, %v1441
        %v1445 = vmul.f32 %v1434, %v1441
        %v1446 = vmul.f32 %v1435, %v1441
        %v1447 = vmul.f32 %v1436, %v1441
        %v1448 = vmul.f32 %v1437, %v1441
        %v1449 = vmul.f32 %v1438, %v1441
        %v1450 = vld [vmem:[%s2] sm:$0x1]
        %v1452 = vperm.slane %v1450, 0
        %v1454 = vadd.f32 %v1442, %v1452
        %v1455 = vadd.f32 %v1443, %v1452
        %v1456 = vadd.f32 %v1444, %v1452
        %v1457 = vadd.f32 %v1445, %v1452
        %v1458 = vadd.f32 %v1446, %v1452
        %v1459 = vadd.f32 %v1447, %v1452
        %v1460 = vadd.f32 %v1448, %v1452
        %v1461 = vadd.f32 %v1449, %v1452
        %v1462 = vpack.c.bf16 %v1455, %v1454
        %v1463 = vpack.c.bf16 %v1457, %v1456
        %v1464 = vpack.c.bf16 %v1459, %v1458
        %v1465 = vpack.c.bf16 %v1461, %v1460
        %v1466 = vld [vmem:[#allocation7] sm:$0xff]
        %v1467 = vld [vmem:[#allocation7 + $0x8] sm:$0xff]
        %v1468 = vld [vmem:[#allocation7 + $0x10] sm:$0xff]
        %v1469 = vld [vmem:[#allocation7 + $0x18] sm:$0xff]
        %v1470 = vld [vmem:[#allocation7 + $0x20] sm:$0xff]
        %v1471 = vld [vmem:[#allocation7 + $0x28] sm:$0xff]
        %v1472 = vld [vmem:[#allocation7 + $0x30] sm:$0xff]
        %v1473 = vld [vmem:[#allocation7 + $0x38] sm:$0xff]
        %v1474 = vld [vmem:[%s4] sm:$0x3]
        %v1476 = vperm.slane %v1474, 0
        %v1477 = vperm.slane %v1474, 1
        %v1488 = vunpack.c.l.b16 %v1466
        %v1489 = vunpack.c.h.b16 %v1466
        %v1490 = vunpack.c.l.b16 %v1467
        %v1491 = vunpack.c.h.b16 %v1467
        %v1492 = vunpack.c.l.b16 %v1468
        %v1493 = vunpack.c.h.b16 %v1468
        %v1494 = vunpack.c.l.b16 %v1469
        %v1495 = vunpack.c.h.b16 %v1469
        %v1496 = vunpack.c.l.b16 %v1470
        %v1497 = vunpack.c.h.b16 %v1470
        %v1498 = vunpack.c.l.b16 %v1471
        %v1499 = vunpack.c.h.b16 %v1471
        %v1500 = vunpack.c.l.b16 %v1472
        %v1501 = vunpack.c.h.b16 %v1472
        %v1502 = vunpack.c.l.b16 %v1473
        %v1503 = vunpack.c.h.b16 %v1473
        %v1504 = vpack.c.b16 %v1490, %v1488
        %v1505 = vpack.c.b16 %v1491, %v1489
        %v1506 = vpack.c.b16 %v1494, %v1492
        %v1507 = vpack.c.b16 %v1495, %v1493
        %v1508 = vpack.c.b16 %v1498, %v1496
        %v1509 = vpack.c.b16 %v1499, %v1497
        %v1510 = vpack.c.b16 %v1502, %v1500
        %v1511 = vpack.c.b16 %v1503, %v1501
        %v1521 = vsel %vm357, %v1462, 0
        %v1524 = vsel %vm357, %v1463, 0
        %v1527 = vsel %vm357, %v1464, 0
        %v1530 = vsel %vm357, %v1465, 0
        %1532 = vmatpush.bf16.msra.mxu0 0
        %1533 = vmatpush.bf16.msra.mxu0 0
        %1534 = vmatpush.bf16.msra.mxu0 0
        %1535 = vmatpush.bf16.msra.mxu0 0
        %1536 = vmatpush.bf16.msra.mxu0 %v1510
        %1537 = vmatpush.bf16.msra.mxu0 %v1508
        %1538 = vmatpush.bf16.msra.mxu0 %v1506
        %1539 = vmatpush.bf16.msra.mxu0 %v1504
        %1540 = vmatmul.bf16.gmra.mxu0 %v1521
        %v1541 = vpop.f32.mrf.mxu0
        %v1542 = vadd.f32 %v1476, %v1541
        %v1543 = vpop.f32.mrf.mxu0
        %v1544 = vadd.f32 %v1476, %v1543
        %1545 = vmatmul.bf16.gmra.mxu0 %v1524
        %v1546 = vpop.f32.mrf.mxu0
        %v1547 = vadd.f32 %v1476, %v1546
        %v1548 = vpop.f32.mrf.mxu0
        %v1549 = vadd.f32 %v1476, %v1548
        %1550 = vmatmul.bf16.gmra.mxu0 %v1527
        %v1551 = vpop.f32.mrf.mxu0
        %v1552 = vadd.f32 %v1476, %v1551
        %v1553 = vpop.f32.mrf.mxu0
        %v1554 = vadd.f32 %v1476, %v1553
        %1555 = vmatmul.bf16.gmra.mxu0 %v1530
        %v1556 = vpop.f32.mrf.mxu0
        %v1557 = vadd.f32 %v1476, %v1556
        %v1558 = vpop.f32.mrf.mxu0
        %v1559 = vadd.f32 %v1476, %v1558
        %1560 = vdwg.mxu0
        %1561 = vmatpush.bf16.msra.mxu0 0
        %1562 = vmatpush.bf16.msra.mxu0 0
        %1563 = vmatpush.bf16.msra.mxu0 0
        %1564 = vmatpush.bf16.msra.mxu0 0
        %1565 = vmatpush.bf16.msra.mxu0 %v1511
        %1566 = vmatpush.bf16.msra.mxu0 %v1509
        %1567 = vmatpush.bf16.msra.mxu0 %v1507
        %1568 = vmatpush.bf16.msra.mxu0 %v1505
        %1569 = vmatmul.bf16.gmra.mxu0 %v1521
        %v1570 = vpop.f32.mrf.mxu0
        %v1571 = vadd.f32 %v1477, %v1570
        %v1572 = vpop.f32.mrf.mxu0
        %v1573 = vadd.f32 %v1477, %v1572
        %1574 = vmatmul.bf16.gmra.mxu0 %v1524
        %v1575 = vpop.f32.mrf.mxu0
        %v1576 = vadd.f32 %v1477, %v1575
        %v1577 = vpop.f32.mrf.mxu0
        %v1578 = vadd.f32 %v1477, %v1577
        %1579 = vmatmul.bf16.gmra.mxu0 %v1527
        %v1580 = vpop.f32.mrf.mxu0
        %v1581 = vadd.f32 %v1477, %v1580
        %v1582 = vpop.f32.mrf.mxu0
        %v1583 = vadd.f32 %v1477, %v1582
        %1584 = vmatmul.bf16.gmra.mxu0 %v1530
        %v1585 = vpop.f32.mrf.mxu0
        %v1586 = vadd.f32 %v1477, %v1585
        %v1587 = vpop.f32.mrf.mxu0
        %v1588 = vadd.f32 %v1477, %v1587
        %1589 = vdwg.mxu0
        %v1590 = vpack.c.bf16 %v1542, %v1542
        %v1591 = vpack.c.bf16 %v1544, %v1544
        %v1592 = vpack.c.bf16 %v1547, %v1547
        %v1593 = vpack.c.bf16 %v1549, %v1549
        %v1594 = vpack.c.bf16 %v1552, %v1552
        %v1595 = vpack.c.bf16 %v1554, %v1554
        %v1596 = vpack.c.bf16 %v1557, %v1557
        %v1597 = vpack.c.bf16 %v1559, %v1559
        %vm1598 = vcmask 519168
        %1599 = vst.msk [vmem:[%s333] sm:$0xf] %vm1598, %v1590
        %1600 = vst.msk [vmem:[%s333 + $0x4] sm:$0xf] %vm1598, %v1591
        %1601 = vst.msk [vmem:[%s333 + $0x8] sm:$0xf] %vm1598, %v1592
        %1602 = vst.msk [vmem:[%s333 + $0xc] sm:$0xf] %vm1598, %v1593
        %1603 = vst.msk [vmem:[%s333 + $0x10] sm:$0xf] %vm1598, %v1594
        %1604 = vst.msk [vmem:[%s333 + $0x14] sm:$0xf] %vm1598, %v1595
        %1605 = vst.msk [vmem:[%s333 + $0x18] sm:$0xf] %vm1598, %v1596
        %1606 = vst.msk [vmem:[%s333 + $0x1c] sm:$0xf] %vm1598, %v1597
        %1615 = vrot.lane.b32.xlu0 %v1590, 64
        %v1616 = vpop.permute.xlu0 %1615
        %1617 = vrot.lane.b32.xlu0 %v1591, 64
        %v1618 = vpop.permute.xlu0 %1617
        %1619 = vrot.lane.b32.xlu0 %v1592, 64
        %v1620 = vpop.permute.xlu0 %1619
        %1621 = vrot.lane.b32.xlu0 %v1593, 64
        %v1622 = vpop.permute.xlu0 %1621
        %1623 = vrot.lane.b32.xlu0 %v1594, 64
        %v1624 = vpop.permute.xlu0 %1623
        %1625 = vrot.lane.b32.xlu0 %v1595, 64
        %v1626 = vpop.permute.xlu0 %1625
        %1627 = vrot.lane.b32.xlu0 %v1596, 64
        %v1628 = vpop.permute.xlu0 %1627
        %1629 = vrot.lane.b32.xlu0 %v1597, 64
        %v1630 = vpop.permute.xlu0 %1629
        %1639 = vst.msk [vmem:[%s340] sm:$0xf] %vm1598, %v1616
        %1640 = vst.msk [vmem:[%s340 + $0x4] sm:$0xf] %vm1598, %v1618
        %1641 = vst.msk [vmem:[%s340 + $0x8] sm:$0xf] %vm1598, %v1620
        %1642 = vst.msk [vmem:[%s340 + $0xc] sm:$0xf] %vm1598, %v1622
        %1643 = vst.msk [vmem:[%s340 + $0x10] sm:$0xf] %vm1598, %v1624
        %1644 = vst.msk [vmem:[%s340 + $0x14] sm:$0xf] %vm1598, %v1626
        %1645 = vst.msk [vmem:[%s340 + $0x18] sm:$0xf] %vm1598, %v1628
        %1646 = vst.msk [vmem:[%s340 + $0x1c] sm:$0xf] %vm1598, %v1630
        %v1647 = vpack.c.bf16 %v1571, %v1571
        %v1648 = vpack.c.bf16 %v1573, %v1573
        %v1649 = vpack.c.bf16 %v1576, %v1576
        %v1650 = vpack.c.bf16 %v1578, %v1578
        %v1651 = vpack.c.bf16 %v1581, %v1581
        %v1652 = vpack.c.bf16 %v1583, %v1583
        %v1653 = vpack.c.bf16 %v1586, %v1586
        %v1654 = vpack.c.bf16 %v1588, %v1588
        %1655 = vst.msk [vmem:[%s347] sm:$0xf] %vm1598, %v1647
        %1656 = vst.msk [vmem:[%s347 + $0x4] sm:$0xf] %vm1598, %v1648
        %1657 = vst.msk [vmem:[%s347 + $0x8] sm:$0xf] %vm1598, %v1649
        %1658 = vst.msk [vmem:[%s347 + $0xc] sm:$0xf] %vm1598, %v1650
        %1659 = vst.msk [vmem:[%s347 + $0x10] sm:$0xf] %vm1598, %v1651
        %1660 = vst.msk [vmem:[%s347 + $0x14] sm:$0xf] %vm1598, %v1652
        %1661 = vst.msk [vmem:[%s347 + $0x18] sm:$0xf] %vm1598, %v1653
        %1662 = vst.msk [vmem:[%s347 + $0x1c] sm:$0xf] %vm1598, %v1654
        %s1663 = sand.u32 %s147, 1
        %s1664 = scalar_lea.sflag [#allocation4], %s1663
        %s1665 = sand.u32 %s147, 1
        %s1666 = smul.addr %s1665, 32
        %s1667 = scalar_lea.vmem [#allocation8], %s1666
        %s1668 = sand.u32 %s29, 1
        %s1669 = scalar_lea.sflag [#allocation10], %s1668
        %s1670 = sand.u32 %s173, 1
        %s1671 = smul.addr %s1670, 32
        %s1672 = scalar_lea.vmem [#allocation9], %s1671
        %s1673 = sand.u32 %s29, 1
        %s1674 = scalar_lea.sflag [#allocation10], %s1673
        %s1675 = sand.u32 %s199, 1
        %s1676 = smul.addr %s1675, 32
        %s1677 = scalar_lea.vmem [#allocation11], %s1676
        // Predicated region
        $region53: #{tpu_custom_call.1} parent=39 // pred_check
          %p1678 = pneg %p157
        $region54: #{tpu_custom_call.1} parent=39 // pred_check_branch
          %1680 = sbr.rel (%p1678) target = $region56
        $region55: #{tpu_custom_call.1} parent=39 // pred_region
          %1682 = vsyncadd %s1664, 0
          %s1683 = smul.addr %s29, 8
          %s1684 = smul.addr %s1683, 4
          %s1685 = scalar_lea.hbm %s5, %s1684
          %s1686 = sshll.u32 %s1667, 4
          %s1687 = int_to_ptr.vmem [resolvable:$true] %s1686
          %s1688 = sshll.u32 %s1685, 4
          %s1689 = int_to_ptr.hbm [resolvable:$true] %s1688
          %1694 = dma.vmem_to_hbm [thread:$0]  %s1687, 512, %s1689, %s1664, 64, 64, 4
        $region56: #{tpu_custom_call.1} parent=39 // pred_fallthru
          _
        // Predicated region
        $region57: #{tpu_custom_call.1} parent=39 // pred_check
          %p1695 = pneg %p183
        $region58: #{tpu_custom_call.1} parent=39 // pred_check_branch
          %1697 = sbr.rel (%p1695) target = $region60
        $region59: #{tpu_custom_call.1} parent=39 // pred_region
          %1699 = vsyncadd %s1669, 0
          %s1700 = smul.addr %s29, 8
          %s1701 = smul.addr %s1700, 4
          %s1702 = scalar_lea.hbm %s6, %s1701
          %s1703 = sshll.u32 %s1672, 4
          %s1704 = int_to_ptr.vmem [resolvable:$true] %s1703
          %s1705 = sshll.u32 %s1702, 4
          %s1706 = int_to_ptr.hbm [resolvable:$true] %s1705
          %1711 = dma.vmem_to_hbm [thread:$0]  %s1704, 512, %s1706, %s1669, 64, 64, 4
        $region60: #{tpu_custom_call.1} parent=39 // pred_fallthru
          _
        // Predicated region
        $region61: #{tpu_custom_call.1} parent=39 // pred_check
          %p1712 = pneg %p209
        $region62: #{tpu_custom_call.1} parent=39 // pred_check_branch
          %1714 = sbr.rel (%p1712) target = $region64
        $region63: #{tpu_custom_call.1} parent=39 // pred_region
          %1716 = vsyncadd %s1674, 0
          %s1717 = smul.addr %s29, 8
          %s1718 = smul.addr %s1717, 4
          %s1719 = scalar_lea.hbm %s7, %s1718
          %s1720 = sshll.u32 %s1677, 4
          %s1721 = int_to_ptr.vmem [resolvable:$true] %s1720
          %s1722 = sshll.u32 %s1719, 4
          %s1723 = int_to_ptr.hbm [resolvable:$true] %s1722
          %1728 = dma.vmem_to_hbm [thread:$0]  %s1721, 512, %s1723, %s1674, 64, 64, 4
        $region64: #{tpu_custom_call.1} parent=39 // pred_fallthru
          _
      $region40: #{tpu_custom_call.1} parent=5 // pred_fallthru
        _
      %p1729 = scmp.le.s32.totalorder 2, %s24
      // Predicated region
      $region65: #{tpu_custom_call.1} parent=5 // pred_check
        %p1730 = pneg %p1729
      $region66: #{tpu_custom_call.1} parent=5 // pred_check_branch
        %1732 = sbr.rel (%p1730) target = $region68
      $region67: #{tpu_custom_call.1} parent=5 // pred_region
        %s1733 = ssub.s32 %s24, 2
        // Predicated region
        $region69: #{tpu_custom_call.1} parent=67 // pred_check
          %p1734 = pneg %p163
        $region70: #{tpu_custom_call.1} parent=67 // pred_check_branch
          %1736 = sbr.rel (%p1734) target = $region72
        $region71: #{tpu_custom_call.1} parent=67 // pred_region
          %s1737 = sand.u32 %s148, 1
          %s1738 = scalar_lea.sflag [#allocation4], %s1737
          %s1739 = sand.u32 %s148, 1
          %s1740 = smul.addr %s1739, 32
          %s1741 = scalar_lea.vmem [#allocation8], %s1740
          %1743 = dma.done %s1738, 512
        $region72: #{tpu_custom_call.1} parent=67 // pred_fallthru
          _
        // Predicated region
        $region73: #{tpu_custom_call.1} parent=67 // pred_check
          %p1744 = pneg %p189
        $region74: #{tpu_custom_call.1} parent=67 // pred_check_branch
          %1746 = sbr.rel (%p1744) target = $region76
        $region75: #{tpu_custom_call.1} parent=67 // pred_region
          %s1747 = sand.u32 %s30, 1
          %s1748 = scalar_lea.sflag [#allocation10], %s1747
          %s1749 = sand.u32 %s174, 1
          %s1750 = smul.addr %s1749, 32
          %s1751 = scalar_lea.vmem [#allocation9], %s1750
          %1753 = dma.done %s1748, 512
        $region76: #{tpu_custom_call.1} parent=67 // pred_fallthru
          _
        // Predicated region
        $region77: #{tpu_custom_call.1} parent=67 // pred_check
          %p1754 = pneg %p215
        $region78: #{tpu_custom_call.1} parent=67 // pred_check_branch
          %1756 = sbr.rel (%p1754) target = $region80
        $region79: #{tpu_custom_call.1} parent=67 // pred_region
          %s1757 = sand.u32 %s30, 1
          %s1758 = scalar_lea.sflag [#allocation10], %s1757
          %s1759 = sand.u32 %s200, 1
          %s1760 = smul.addr %s1759, 32
          %s1761 = scalar_lea.vmem [#allocation11], %s1760
          %1763 = dma.done %s1758, 512
        $region80: #{tpu_custom_call.1} parent=67 // pred_fallthru
          _
      $region68: #{tpu_custom_call.1} parent=5 // pred_fallthru
        _
    $region6: #{tpu_custom_call.1} parent=1 // loop_footer
      %s28 = sadd.s32 1, %s24
    $region7: #{tpu_custom_call.1} parent=1 // loop_footer_branch
      %23 = sbr.rel target = $region3
    $region8: #{tpu_custom_call.1} parent=1 // loop_exit
      _
    %1764 = vsyncpa [#allocation3], 1
    %s1765 = scalar_lea.sflag [#allocation3], 1
    %1766 = vsyncpa %s1765, 1
    %1767 = vsyncpa [#allocation6], 1
    %1768 = vsyncpa [#allocation4], 1
    %s1769 = scalar_lea.sflag [#allocation4], 1
    %1770 = vsyncpa %s1769, 1
    %1771 = vsyncpa [#allocation10], 1
    %s1772 = scalar_lea.sflag [#allocation10], 1
    %1773 = vsyncpa %s1772, 1

</llo_original>
